<compile_context>
chip_gen: v5e
topology: v5e:2x2
jax: 0.10.0
libtpu: 0.0.40
codegen_flags: <defaults>
</compile_context>

<pallas_src>
import functools

import jax
import jax.numpy as jnp
from jax import lax
from jax.experimental import pallas as pl
from jax.experimental.pallas import tpu as pltpu


def _sigmoid(x):
    return 1.0 / (1.0 + jnp.exp(-x))


# ----------------------------- Pallas kernel --------------------------------


def _net_agent_kernel(*refs, n_lstm, hidden, out_dim, double_pass):
    """Fused NetAgent forward.

    Ref layout (inputs, outputs, scratch):
      x (B,T,D), h0 (L,B,H), c0 (L,B,H),
      [w_ih_l (Din,4H), w_hh_l (H,4H), b_l (1,4H)] * L,
      w_fc (H,O), b_fc (1,O),
      out (B,T,O), h_n (L,B,H), c_n (L,B,H),
      y_sc : VMEM scratch (T,B,H), time-major inter-layer activations.
    """
    H = hidden
    L = n_lstm
    x_ref, h0_ref, c0_ref = refs[0], refs[1], refs[2]
    w_refs = refs[3:3 + 3 * L]
    wfc_ref, bfc_ref = refs[3 + 3 * L], refs[4 + 3 * L]
    out_ref, hn_ref, cn_ref = refs[5 + 3 * L], refs[6 + 3 * L], refs[7 + 3 * L]
    y_sc = refs[8 + 3 * L]

    B, T, _ = x_ref.shape

    def gx_step_fn(x3, time_major, wih, b):
        # Hoisted input projection: one matmul covering every timestep, with
        # the combined bias added once (not re-broadcast per step).
        d0, d1, din = x3.shape
        gx = jnp.dot(x3.reshape(d0 * d1, din), wih,
                     preferred_element_type=jnp.float32) + b          # (N, 4H)
        gx3 = gx.reshape(d0, d1, 4 * H)
        if time_major:                          # (T, B, 4H)
            return lambda t: gx3[t]
        return lambda t: gx3[:, t, :]           # (B, T, 4H)

    def recurrence(gx_step, whh, h, c):
        # Serial part of the LSTM; fully unrolled (T is static) so the
        # elementwise tail of step t overlaps step t+1's h @ W_hh matmul.
        lane = lax.broadcasted_iota(jnp.int32, (h.shape[0], 4 * H), 1)
        is_g = (lane >= 2 * H) & (lane < 3 * H)        # tanh lanes (gate g)
        for t in range(T):
            gates = gx_step(t) + jnp.dot(h, whh,
                                         preferred_element_type=jnp.float32)
            # Full-vreg activations, then lane-select the tanh block.
            act = jnp.where(is_g, jnp.tanh(gates), _sigmoid(gates))
            i = act[:, 0 * H:1 * H]
            f = act[:, 1 * H:2 * H]
            g = act[:, 2 * H:3 * H]
            o = act[:, 3 * H:4 * H]
            c = f * c + i * g
            h = o * jnp.tanh(c)
            y_sc[t] = h                                 # time-major scratch
        return h, c

    def run_stack(first_from_x, h0s, c0s):
        h_fins, c_fins = [], []
        for l in range(L):
            wih = w_refs[3 * l][...]
            whh = w_refs[3 * l + 1][...]
            b = w_refs[3 * l + 2][...]
            if l == 0 and first_from_x:
                gx_step = gx_step_fn(x_ref[...], False, wih, b)  # batch-first x
            else:
                gx_step = gx_step_fn(y_sc[...], True, wih, b)    # prev layer out
            h_l, c_l = recurrence(gx_step, whh, h0s[l], c0s[l])
            h_fins.append(h_l)
            c_fins.append(c_l)
        return h_fins, c_fins

    h0s = [h0_ref[l] for l in range(L)]
    c0s = [c0_ref[l] for l in range(L)]

    if double_pass:
        # PyTorch quirk: with h=None the LSTM stack runs twice; the second pass
        # consumes the first pass's outputs and final states.
        h0s, c0s = run_stack(True, h0s, c0s)
        h_fins, c_fins = run_stack(False, h0s, c0s)
    else:
        h_fins, c_fins = run_stack(True, h0s, c0s)

    # Fused ReLU + FC epilogue: one matmul over the whole activation slab.
    y2d = jnp.maximum(y_sc[...].reshape(T * B, H), 0.0)
    out2d = jnp.dot(y2d, wfc_ref[...],
                    preferred_element_type=jnp.float32) + bfc_ref[...]
    out3 = out2d.reshape(T, B, out_dim)
    for bidx in range(B):                       # batch-first output layout
        out_ref[bidx] = out3[:, bidx, :]

    for l in range(L):
        hn_ref[l] = h_fins[l]
        cn_ref[l] = c_fins[l]


# ------------------------------- Wrapper -------------------------------------

_VMEM = pl.BlockSpec(memory_space=pltpu.MemorySpace.VMEM)


def net_agent_forward(params, x, h, *, n_lstm, hidden):
    """Reproduces NetAgent.forward(x, h); h is (h0, c0) of shape (L,B,H) or None."""
    B, T, D = x.shape
    w_fc, b_fc = params["fc"]
    out_dim = w_fc.shape[1]

    if h is None:
        # Torch's h=None path re-feeds the LSTM output into the LSTM, which
        # requires input_size == hidden_layer (torch raises otherwise).
        assert D == hidden, "h=None path needs input_size == hidden_layer"
        double_pass = True
        h0 = jnp.zeros((n_lstm, B, hidden), jnp.float32)
        c0 = jnp.zeros((n_lstm, B, hidden), jnp.float32)
    else:
        double_pass = False
        h0, c0 = h

    flat_w = []
    for wih, whh, b in params["lstm"]:
        flat_w += [wih, whh, b]

    kernel = functools.partial(_net_agent_kernel, n_lstm=n_lstm, hidden=hidden,
                               out_dim=out_dim, double_pass=double_pass)
    n_in = 3 + 3 * n_lstm + 2
    out, h_n, c_n = pl.pallas_call(
        kernel,
        out_shape=(jax.ShapeDtypeStruct((B, T, out_dim), jnp.float32),
                   jax.ShapeDtypeStruct((n_lstm, B, hidden), jnp.float32),
                   jax.ShapeDtypeStruct((n_lstm, B, hidden), jnp.float32)),
        in_specs=[_VMEM] * n_in,
        out_specs=(_VMEM, _VMEM, _VMEM),
        scratch_shapes=[pltpu.VMEM((T, B, hidden), jnp.float32)],
    )(x, h0, c0, *flat_w, w_fc, b_fc)
    return out, (h_n, c_n)


# --------------------------- Pure-JAX reference ------------------------------


def _reference_forward(params, x, h, *, n_lstm, hidden):
    """Plain-JAX replica of NetAgent.forward (including the h=None double pass)."""
    H = hidden
    hp = functools.partial(jnp.dot, precision=lax.Precision.HIGHEST)

    def lstm_stack(x, h0s, c0s):
        B, T, _ = x.shape
        y = x
        hs, cs = [], []
        for l, (wih, whh, b) in enumerate(params["lstm"]):
            hc, cc = h0s[l], c0s[l]
            outs = []
            for t in range(T):
                gates = hp(y[:, t, :], wih) + hp(hc, whh) + b
                i = _sigmoid(gates[:, :H])
                f = _sigmoid(gates[:, H:2 * H])
                g = jnp.tanh(gates[:, 2 * H:3 * H])
                o = _sigmoid(gates[:, 3 * H:])
                cc = f * cc + i * g
                hc = o * jnp.tanh(cc)
                outs.append(hc)
            y = jnp.stack(outs, axis=1)
            hs.append(hc)
            cs.append(cc)
        return y, (jnp.stack(hs), jnp.stack(cs))

    B = x.shape[0]
    if h is None:
        z = jnp.zeros((n_lstm, B, H), jnp.float32)
        x, h = lstm_stack(x, z, z)
    x, h = lstm_stack(x, h[0], h[1])
    w_fc, b_fc = params["fc"]
    out = hp(jnp.maximum(x, 0.0), w_fc) + b_fc
    return out, h


# --------------------------- Parameter init ----------------------------------


def init_params(key, input_size, hidden, n_lstm, out_shape):
    """Deterministic synthetic init; same shapes as torch.nn.LSTM / Linear."""
    bound = 1.0 / (hidden ** 0.5)
    params = {"lstm": []}
    for layer in range(n_lstm):
        in_dim = input_size if layer == 0 else hidden
        key, k1, k2, k3, k4 = jax.random.split(key, 5)
        # PyTorch stores (4H, in) / (4H, H); we store transposed for x @ W.
        wih = jax.random.uniform(k1, (in_dim, 4 * hidden), jnp.float32, -bound, bound)
        whh = jax.random.uniform(k2, (hidden, 4 * hidden), jnp.float32, -bound, bound)
        b_ih = jax.random.uniform(k3, (1, 4 * hidden), jnp.float32, -bound, bound)
        b_hh = jax.random.uniform(k4, (1, 4 * hidden), jnp.float32, -bound, bound)
        params["lstm"].append((wih, whh, b_ih + b_hh))
    key, k1, k2 = jax.random.split(key, 3)
    w_fc = jax.random.uniform(k1, (hidden, out_shape), jnp.float32, -bound, bound)
    b_fc = jax.random.uniform(k2, (1, out_shape), jnp.float32, -bound, bound)
    params["fc"] = (w_fc, b_fc)
    return params


# --------------------------------- Main --------------------------------------


if __name__ == "__main__":
    batch, seq = 2, 8
    hidden, n_lstm, out_dim = 32, 2, 4
    input_size = hidden  # h=None path feeds LSTM output back into the LSTM, so D == H.

    root = jax.random.PRNGKey(0)
    k_param, k_x = jax.random.split(root)
    params = init_params(k_param, input_size, hidden, n_lstm, out_dim)
    x = jax.random.normal(k_x, (batch, seq, input_size), jnp.float32)

    fwd = functools.partial(net_agent_forward, n_lstm=n_lstm, hidden=hidden)
    ref = functools.partial(_reference_forward, n_lstm=n_lstm, hidden=hidden)

    # h=None path (LSTM stack applied twice, replicating the PyTorch forward).
    out, (h_n, c_n) = fwd(params, x, None)
    jax.block_until_ready(out)
    jax.block_until_ready(h_n)
    jax.block_until_ready(c_n)
    assert out.shape == (batch, seq, out_dim)
    assert h_n.shape == (n_lstm, batch, hidden)
    assert c_n.shape == (n_lstm, batch, hidden)

    out_r, (h_r, c_r) = ref(params, x, None)
    assert float(jnp.max(jnp.abs(out - out_r))) < 5e-3
    assert float(jnp.max(jnp.abs(h_n - h_r))) < 5e-3
    assert float(jnp.max(jnp.abs(c_n - c_r))) < 5e-3

    # h-provided path (single pass through the LSTM stack).
    out2, (h2, c2) = fwd(params, x, (h_n, c_n))
    jax.block_until_ready(out2)
    out2_r, (h2_r, c2_r) = ref(params, x, (h_n, c_n))
    assert float(jnp.max(jnp.abs(out2 - out2_r))) < 5e-3
    assert float(jnp.max(jnp.abs(h2 - h2_r))) < 5e-3

    print("KERNEL_OK")
</pallas_src>

<mosaic_0001>
module attributes {stable_mosaic.version = 11 : i64} {
  func.func @_net_agent_kernel(%arg0: memref<2x8x32xf32, #tpu.memory_space<vmem>>, %arg1: memref<2x2x32xf32, #tpu.memory_space<vmem>>, %arg2: memref<2x2x32xf32, #tpu.memory_space<vmem>>, %arg3: memref<32x128xf32, #tpu.memory_space<vmem>>, %arg4: memref<32x128xf32, #tpu.memory_space<vmem>>, %arg5: memref<1x128xf32, #tpu.memory_space<vmem>>, %arg6: memref<32x128xf32, #tpu.memory_space<vmem>>, %arg7: memref<32x128xf32, #tpu.memory_space<vmem>>, %arg8: memref<1x128xf32, #tpu.memory_space<vmem>>, %arg9: memref<32x4xf32, #tpu.memory_space<vmem>>, %arg10: memref<1x4xf32, #tpu.memory_space<vmem>>, %arg11: memref<2x8x4xf32, #tpu.memory_space<vmem>>, %arg12: memref<2x2x32xf32, #tpu.memory_space<vmem>>, %arg13: memref<2x2x32xf32, #tpu.memory_space<vmem>>, %arg14: memref<8x2x32xf32, #tpu.memory_space<vmem>>) attributes {dimension_semantics = [], scalar_prefetch = 0 : i64, scratch_operands = 1 : i64, tpu.core_type = #tpu.core_type<tc>} {
    %c0 = arith.constant 0 : index
    %c0_0 = arith.constant 0 : index
    %c0_1 = arith.constant 0 : index
    %0 = vector.load %arg1[%c0, %c0_0, %c0_1] : memref<2x2x32xf32, #tpu.memory_space<vmem>>, vector<1x2x32xf32>
    %1 = vector.shape_cast %0 : vector<1x2x32xf32> to vector<2x32xf32>
    %c1 = arith.constant 1 : index
    %c0_2 = arith.constant 0 : index
    %c0_3 = arith.constant 0 : index
    %2 = vector.load %arg1[%c1, %c0_2, %c0_3] : memref<2x2x32xf32, #tpu.memory_space<vmem>>, vector<1x2x32xf32>
    %3 = vector.shape_cast %2 : vector<1x2x32xf32> to vector<2x32xf32>
    %c0_4 = arith.constant 0 : index
    %c0_5 = arith.constant 0 : index
    %c0_6 = arith.constant 0 : index
    %4 = vector.load %arg2[%c0_4, %c0_5, %c0_6] : memref<2x2x32xf32, #tpu.memory_space<vmem>>, vector<1x2x32xf32>
    %5 = vector.shape_cast %4 : vector<1x2x32xf32> to vector<2x32xf32>
    %c1_7 = arith.constant 1 : index
    %c0_8 = arith.constant 0 : index
    %c0_9 = arith.constant 0 : index
    %6 = vector.load %arg2[%c1_7, %c0_8, %c0_9] : memref<2x2x32xf32, #tpu.memory_space<vmem>>, vector<1x2x32xf32>
    %7 = vector.shape_cast %6 : vector<1x2x32xf32> to vector<2x32xf32>
    %c0_10 = arith.constant 0 : index
    %c0_11 = arith.constant 0 : index
    %8 = vector.load %arg3[%c0_10, %c0_11] : memref<32x128xf32, #tpu.memory_space<vmem>>, vector<32x128xf32>
    %c0_12 = arith.constant 0 : index
    %c0_13 = arith.constant 0 : index
    %9 = vector.load %arg4[%c0_12, %c0_13] : memref<32x128xf32, #tpu.memory_space<vmem>>, vector<32x128xf32>
    %c0_14 = arith.constant 0 : index
    %c0_15 = arith.constant 0 : index
    %10 = vector.load %arg5[%c0_14, %c0_15] : memref<1x128xf32, #tpu.memory_space<vmem>>, vector<1x128xf32>
    %c0_16 = arith.constant 0 : index
    %c0_17 = arith.constant 0 : index
    %c0_18 = arith.constant 0 : index
    %11 = vector.load %arg0[%c0_16, %c0_17, %c0_18] : memref<2x8x32xf32, #tpu.memory_space<vmem>>, vector<2x8x32xf32>
    %12 = vector.shape_cast %11 : vector<2x8x32xf32> to vector<16x32xf32>
    %cst = arith.constant dense<0.000000e+00> : vector<16x128xf32>
    %13 = tpu.matmul %12, %8, %cst {dimension_numbers = #tpu.dot_dimension_numbers<[1], [0], [0], [1], [0, 0, 1, 1], [], []>} : vector<16x32xf32>, vector<32x128xf32>, vector<16x128xf32> -> vector<16x128xf32>
    %14 = vector.broadcast %10 : vector<1x128xf32> to vector<16x128xf32>
    %15 = arith.addf %13, %14 : vector<16x128xf32>
    %16 = vector.shape_cast %15 : vector<16x128xf32> to vector<2x8x128xf32>
    %17 = tpu.iota {dimensions = array<i32: 1>} : vector<2x128xi32>
    %c64_i32 = arith.constant 64 : i32
    %18 = vector.broadcast %c64_i32 : i32 to vector<2x128xi32>
    %19 = arith.cmpi sge, %17, %18 : vector<2x128xi32>
    %c96_i32 = arith.constant 96 : i32
    %20 = vector.broadcast %c96_i32 : i32 to vector<2x128xi32>
    %21 = arith.cmpi slt, %17, %20 : vector<2x128xi32>
    %22 = arith.andi %19, %21 : vector<2x128xi1>
    %23 = vector.extract_strided_slice %16 {offsets = [0, 0, 0], sizes = [2, 1, 128], strides = [1, 1, 1]} : vector<2x8x128xf32> to vector<2x1x128xf32>
    %24 = vector.shape_cast %23 : vector<2x1x128xf32> to vector<2x128xf32>
    %cst_19 = arith.constant dense<0.000000e+00> : vector<2x128xf32>
    %25 = tpu.matmul %1, %9, %cst_19 {dimension_numbers = #tpu.dot_dimension_numbers<[1], [0], [0], [1], [0, 0, 1, 1], [], []>} : vector<2x32xf32>, vector<32x128xf32>, vector<2x128xf32> -> vector<2x128xf32>
    %26 = arith.addf %24, %25 : vector<2x128xf32>
    %27 = math.tanh %26 : vector<2x128xf32>
    %cst_20 = arith.constant 0.000000e+00 : f32
    %28 = vector.broadcast %cst_20 : f32 to vector<2x128xf32>
    %29 = arith.subf %28, %26 : vector<2x128xf32>
    %30 = math.exp %29 : vector<2x128xf32>
    %cst_21 = arith.constant 1.000000e+00 : f32
    %31 = vector.broadcast %cst_21 : f32 to vector<2x128xf32>
    %32 = arith.addf %31, %30 : vector<2x128xf32>
    %cst_22 = arith.constant 1.000000e+00 : f32
    %33 = vector.broadcast %cst_22 : f32 to vector<2x128xf32>
    %34 = arith.divf %33, %32 : vector<2x128xf32>
    %35 = arith.select %22, %27, %34 : vector<2x128xi1>, vector<2x128xf32>
    %36 = vector.extract_strided_slice %35 {offsets = [0, 0], sizes = [2, 32], strides = [1, 1]} : vector<2x128xf32> to vector<2x32xf32>
    %37 = vector.extract_strided_slice %35 {offsets = [0, 32], sizes = [2, 32], strides = [1, 1]} : vector<2x128xf32> to vector<2x32xf32>
    %38 = vector.extract_strided_slice %35 {offsets = [0, 64], sizes = [2, 32], strides = [1, 1]} : vector<2x128xf32> to vector<2x32xf32>
    %39 = vector.extract_strided_slice %35 {offsets = [0, 96], sizes = [2, 32], strides = [1, 1]} : vector<2x128xf32> to vector<2x32xf32>
    %40 = arith.mulf %37, %5 : vector<2x32xf32>
    %41 = arith.mulf %36, %38 : vector<2x32xf32>
    %42 = arith.addf %40, %41 : vector<2x32xf32>
    %43 = math.tanh %42 : vector<2x32xf32>
    %44 = arith.mulf %39, %43 : vector<2x32xf32>
    %c0_23 = arith.constant 0 : index
    %c0_24 = arith.constant 0 : index
    %c0_25 = arith.constant 0 : index
    %45 = vector.load %arg14[%c0_23, %c0_24, %c0_25] : memref<8x2x32xf32, #tpu.memory_space<vmem>>, vector<1x2x32xf32>
    %46 = vector.shape_cast %45 : vector<1x2x32xf32> to vector<2x32xf32>
    %47 = vector.shape_cast %44 : vector<2x32xf32> to vector<1x2x32xf32>
    tpu.vector_store %arg14[%c0_23, %c0_24, %c0_25], %47 {strides = array<i32>} : memref<8x2x32xf32, #tpu.memory_space<vmem>>, vector<1x2x32xf32>,
    %48 = vector.extract_strided_slice %16 {offsets = [0, 1, 0], sizes = [2, 1, 128], strides = [1, 1, 1]} : vector<2x8x128xf32> to vector<2x1x128xf32>
    %49 = vector.shape_cast %48 : vector<2x1x128xf32> to vector<2x128xf32>
    %cst_26 = arith.constant dense<0.000000e+00> : vector<2x128xf32>
    %50 = tpu.matmul %44, %9, %cst_26 {dimension_numbers = #tpu.dot_dimension_numbers<[1], [0], [0], [1], [0, 0, 1, 1], [], []>} : vector<2x32xf32>, vector<32x128xf32>, vector<2x128xf32> -> vector<2x128xf32>
    %51 = arith.addf %49, %50 : vector<2x128xf32>
    %52 = math.tanh %51 : vector<2x128xf32>
    %cst_27 = arith.constant 0.000000e+00 : f32
    %53 = vector.broadcast %cst_27 : f32 to vector<2x128xf32>
    %54 = arith.subf %53, %51 : vector<2x128xf32>
    %55 = math.exp %54 : vector<2x128xf32>
    %cst_28 = arith.constant 1.000000e+00 : f32
    %56 = vector.broadcast %cst_28 : f32 to vector<2x128xf32>
    %57 = arith.addf %56, %55 : vector<2x128xf32>
    %cst_29 = arith.constant 1.000000e+00 : f32
    %58 = vector.broadcast %cst_29 : f32 to vector<2x128xf32>
    %59 = arith.divf %58, %57 : vector<2x128xf32>
    %60 = arith.select %22, %52, %59 : vector<2x128xi1>, vector<2x128xf32>
    %61 = vector.extract_strided_slice %60 {offsets = [0, 0], sizes = [2, 32], strides = [1, 1]} : vector<2x128xf32> to vector<2x32xf32>
    %62 = vector.extract_strided_slice %60 {offsets = [0, 32], sizes = [2, 32], strides = [1, 1]} : vector<2x128xf32> to vector<2x32xf32>
    %63 = vector.extract_strided_slice %60 {offsets = [0, 64], sizes = [2, 32], strides = [1, 1]} : vector<2x128xf32> to vector<2x32xf32>
    %64 = vector.extract_strided_slice %60 {offsets = [0, 96], sizes = [2, 32], strides = [1, 1]} : vector<2x128xf32> to vector<2x32xf32>
    %65 = arith.mulf %62, %42 : vector<2x32xf32>
    %66 = arith.mulf %61, %63 : vector<2x32xf32>
    %67 = arith.addf %65, %66 : vector<2x32xf32>
    %68 = math.tanh %67 : vector<2x32xf32>
    %69 = arith.mulf %64, %68 : vector<2x32xf32>
    %c1_30 = arith.constant 1 : index
    %c0_31 = arith.constant 0 : index
    %c0_32 = arith.constant 0 : index
    %70 = vector.load %arg14[%c1_30, %c0_31, %c0_32] : memref<8x2x32xf32, #tpu.memory_space<vmem>>, vector<1x2x32xf32>
    %71 = vector.shape_cast %70 : vector<1x2x32xf32> to vector<2x32xf32>
    %72 = vector.shape_cast %69 : vector<2x32xf32> to vector<1x2x32xf32>
    tpu.vector_store %arg14[%c1_30, %c0_31, %c0_32], %72 {strides = array<i32>} : memref<8x2x32xf32, #tpu.memory_space<vmem>>, vector<1x2x32xf32>,
    %73 = vector.extract_strided_slice %16 {offsets = [0, 2, 0], sizes = [2, 1, 128], strides = [1, 1, 1]} : vector<2x8x128xf32> to vector<2x1x128xf32>
    %74 = vector.shape_cast %73 : vector<2x1x128xf32> to vector<2x128xf32>
    %cst_33 = arith.constant dense<0.000000e+00> : vector<2x128xf32>
    %75 = tpu.matmul %69, %9, %cst_33 {dimension_numbers = #tpu.dot_dimension_numbers<[1], [0], [0], [1], [0, 0, 1, 1], [], []>} : vector<2x32xf32>, vector<32x128xf32>, vector<2x128xf32> -> vector<2x128xf32>
    %76 = arith.addf %74, %75 : vector<2x128xf32>
    %77 = math.tanh %76 : vector<2x128xf32>
    %cst_34 = arith.constant 0.000000e+00 : f32
    %78 = vector.broadcast %cst_34 : f32 to vector<2x128xf32>
    %79 = arith.subf %78, %76 : vector<2x128xf32>
    %80 = math.exp %79 : vector<2x128xf32>
    %cst_35 = arith.constant 1.000000e+00 : f32
    %81 = vector.broadcast %cst_35 : f32 to vector<2x128xf32>
    %82 = arith.addf %81, %80 : vector<2x128xf32>
    %cst_36 = arith.constant 1.000000e+00 : f32
    %83 = vector.broadcast %cst_36 : f32 to vector<2x128xf32>
    %84 = arith.divf %83, %82 : vector<2x128xf32>
    %85 = arith.select %22, %77, %84 : vector<2x128xi1>, vector<2x128xf32>
    %86 = vector.extract_strided_slice %85 {offsets = [0, 0], sizes = [2, 32], strides = [1, 1]} : vector<2x128xf32> to vector<2x32xf32>
    %87 = vector.extract_strided_slice %85 {offsets = [0, 32], sizes = [2, 32], strides = [1, 1]} : vector<2x128xf32> to vector<2x32xf32>
    %88 = vector.extract_strided_slice %85 {offsets = [0, 64], sizes = [2, 32], strides = [1, 1]} : vector<2x128xf32> to vector<2x32xf32>
    %89 = vector.extract_strided_slice %85 {offsets = [0, 96], sizes = [2, 32], strides = [1, 1]} : vector<2x128xf32> to vector<2x32xf32>
    %90 = arith.mulf %87, %67 : vector<2x32xf32>
    %91 = arith.mulf %86, %88 : vector<2x32xf32>
    %92 = arith.addf %90, %91 : vector<2x32xf32>
    %93 = math.tanh %92 : vector<2x32xf32>
    %94 = arith.mulf %89, %93 : vector<2x32xf32>
    %c2 = arith.constant 2 : index
    %c0_37 = arith.constant 0 : index
    %c0_38 = arith.constant 0 : index
    %95 = vector.load %arg14[%c2, %c0_37, %c0_38] : memref<8x2x32xf32, #tpu.memory_space<vmem>>, vector<1x2x32xf32>
    %96 = vector.shape_cast %95 : vector<1x2x32xf32> to vector<2x32xf32>
    %97 = vector.shape_cast %94 : vector<2x32xf32> to vector<1x2x32xf32>
    tpu.vector_store %arg14[%c2, %c0_37, %c0_38], %97 {strides = array<i32>} : memref<8x2x32xf32, #tpu.memory_space<vmem>>, vector<1x2x32xf32>,
    %98 = vector.extract_strided_slice %16 {offsets = [0, 3, 0], sizes = [2, 1, 128], strides = [1, 1, 1]} : vector<2x8x128xf32> to vector<2x1x128xf32>
    %99 = vector.shape_cast %98 : vector<2x1x128xf32> to vector<2x128xf32>
    %cst_39 = arith.constant dense<0.000000e+00> : vector<2x128xf32>
    %100 = tpu.matmul %94, %9, %cst_39 {dimension_numbers = #tpu.dot_dimension_numbers<[1], [0], [0], [1], [0, 0, 1, 1], [], []>} : vector<2x32xf32>, vector<32x128xf32>, vector<2x128xf32> -> vector<2x128xf32>
    %101 = arith.addf %99, %100 : vector<2x128xf32>
    %102 = math.tanh %101 : vector<2x128xf32>
    %cst_40 = arith.constant 0.000000e+00 : f32
    %103 = vector.broadcast %cst_40 : f32 to vector<2x128xf32>
    %104 = arith.subf %103, %101 : vector<2x128xf32>
    %105 = math.exp %104 : vector<2x128xf32>
    %cst_41 = arith.constant 1.000000e+00 : f32
    %106 = vector.broadcast %cst_41 : f32 to vector<2x128xf32>
    %107 = arith.addf %106, %105 : vector<2x128xf32>
    %cst_42 = arith.constant 1.000000e+00 : f32
    %108 = vector.broadcast %cst_42 : f32 to vector<2x128xf32>
    %109 = arith.divf %108, %107 : vector<2x128xf32>
    %110 = arith.select %22, %102, %109 : vector<2x128xi1>, vector<2x128xf32>
    %111 = vector.extract_strided_slice %110 {offsets = [0, 0], sizes = [2, 32], strides = [1, 1]} : vector<2x128xf32> to vector<2x32xf32>
    %112 = vector.extract_strided_slice %110 {offsets = [0, 32], sizes = [2, 32], strides = [1, 1]} : vector<2x128xf32> to vector<2x32xf32>
    %113 = vector.extract_strided_slice %110 {offsets = [0, 64], sizes = [2, 32], strides = [1, 1]} : vector<2x128xf32> to vector<2x32xf32>
    %114 = vector.extract_strided_slice %110 {offsets = [0, 96], sizes = [2, 32], strides = [1, 1]} : vector<2x128xf32> to vector<2x32xf32>
    %115 = arith.mulf %112, %92 : vector<2x32xf32>
    %116 = arith.mulf %111, %113 : vector<2x32xf32>
    %117 = arith.addf %115, %116 : vector<2x32xf32>
    %118 = math.tanh %117 : vector<2x32xf32>
    %119 = arith.mulf %114, %118 : vector<2x32xf32>
    %c3 = arith.constant 3 : index
    %c0_43 = arith.constant 0 : index
    %c0_44 = arith.constant 0 : index
    %120 = vector.load %arg14[%c3, %c0_43, %c0_44] : memref<8x2x32xf32, #tpu.memory_space<vmem>>, vector<1x2x32xf32>
    %121 = vector.shape_cast %120 : vector<1x2x32xf32> to vector<2x32xf32>
    %122 = vector.shape_cast %119 : vector<2x32xf32> to vector<1x2x32xf32>
    tpu.vector_store %arg14[%c3, %c0_43, %c0_44], %122 {strides = array<i32>} : memref<8x2x32xf32, #tpu.memory_space<vmem>>, vector<1x2x32xf32>,
    %123 = vector.extract_strided_slice %16 {offsets = [0, 4, 0], sizes = [2, 1, 128], strides = [1, 1, 1]} : vector<2x8x128xf32> to vector<2x1x128xf32>
    %124 = vector.shape_cast %123 : vector<2x1x128xf32> to vector<2x128xf32>
    %cst_45 = arith.constant dense<0.000000e+00> : vector<2x128xf32>
    %125 = tpu.matmul %119, %9, %cst_45 {dimension_numbers = #tpu.dot_dimension_numbers<[1], [0], [0], [1], [0, 0, 1, 1], [], []>} : vector<2x32xf32>, vector<32x128xf32>, vector<2x128xf32> -> vector<2x128xf32>
    %126 = arith.addf %124, %125 : vector<2x128xf32>
    %127 = math.tanh %126 : vector<2x128xf32>
    %cst_46 = arith.constant 0.000000e+00 : f32
    %128 = vector.broadcast %cst_46 : f32 to vector<2x128xf32>
    %129 = arith.subf %128, %126 : vector<2x128xf32>
    %130 = math.exp %129 : vector<2x128xf32>
    %cst_47 = arith.constant 1.000000e+00 : f32
    %131 = vector.broadcast %cst_47 : f32 to vector<2x128xf32>
    %132 = arith.addf %131, %130 : vector<2x128xf32>
    %cst_48 = arith.constant 1.000000e+00 : f32
    %133 = vector.broadcast %cst_48 : f32 to vector<2x128xf32>
    %134 = arith.divf %133, %132 : vector<2x128xf32>
    %135 = arith.select %22, %127, %134 : vector<2x128xi1>, vector<2x128xf32>
    %136 = vector.extract_strided_slice %135 {offsets = [0, 0], sizes = [2, 32], strides = [1, 1]} : vector<2x128xf32> to vector<2x32xf32>
    %137 = vector.extract_strided_slice %135 {offsets = [0, 32], sizes = [2, 32], strides = [1, 1]} : vector<2x128xf32> to vector<2x32xf32>
    %138 = vector.extract_strided_slice %135 {offsets = [0, 64], sizes = [2, 32], strides = [1, 1]} : vector<2x128xf32> to vector<2x32xf32>
    %139 = vector.extract_strided_slice %135 {offsets = [0, 96], sizes = [2, 32], strides = [1, 1]} : vector<2x128xf32> to vector<2x32xf32>
    %140 = arith.mulf %137, %117 : vector<2x32xf32>
    %141 = arith.mulf %136, %138 : vector<2x32xf32>
    %142 = arith.addf %140, %141 : vector<2x32xf32>
    %143 = math.tanh %142 : vector<2x32xf32>
    %144 = arith.mulf %139, %143 : vector<2x32xf32>
    %c4 = arith.constant 4 : index
    %c0_49 = arith.constant 0 : index
    %c0_50 = arith.constant 0 : index
    %145 = vector.load %arg14[%c4, %c0_49, %c0_50] : memref<8x2x32xf32, #tpu.memory_space<vmem>>, vector<1x2x32xf32>
    %146 = vector.shape_cast %145 : vector<1x2x32xf32> to vector<2x32xf32>
    %147 = vector.shape_cast %144 : vector<2x32xf32> to vector<1x2x32xf32>
    tpu.vector_store %arg14[%c4, %c0_49, %c0_50], %147 {strides = array<i32>} : memref<8x2x32xf32, #tpu.memory_space<vmem>>, vector<1x2x32xf32>,
    %148 = vector.extract_strided_slice %16 {offsets = [0, 5, 0], sizes = [2, 1, 128], strides = [1, 1, 1]} : vector<2x8x128xf32> to vector<2x1x128xf32>
    %149 = vector.shape_cast %148 : vector<2x1x128xf32> to vector<2x128xf32>
    %cst_51 = arith.constant dense<0.000000e+00> : vector<2x128xf32>
    %150 = tpu.matmul %144, %9, %cst_51 {dimension_numbers = #tpu.dot_dimension_numbers<[1], [0], [0], [1], [0, 0, 1, 1], [], []>} : vector<2x32xf32>, vector<32x128xf32>, vector<2x128xf32> -> vector<2x128xf32>
    %151 = arith.addf %149, %150 : vector<2x128xf32>
    %152 = math.tanh %151 : vector<2x128xf32>
    %cst_52 = arith.constant 0.000000e+00 : f32
    %153 = vector.broadcast %cst_52 : f32 to vector<2x128xf32>
    %154 = arith.subf %153, %151 : vector<2x128xf32>
    %155 = math.exp %154 : vector<2x128xf32>
    %cst_53 = arith.constant 1.000000e+00 : f32
    %156 = vector.broadcast %cst_53 : f32 to vector<2x128xf32>
    %157 = arith.addf %156, %155 : vector<2x128xf32>
    %cst_54 = arith.constant 1.000000e+00 : f32
    %158 = vector.broadcast %cst_54 : f32 to vector<2x128xf32>
    %159 = arith.divf %158, %157 : vector<2x128xf32>
    %160 = arith.select %22, %152, %159 : vector<2x128xi1>, vector<2x128xf32>
    %161 = vector.extract_strided_slice %160 {offsets = [0, 0], sizes = [2, 32], strides = [1, 1]} : vector<2x128xf32> to vector<2x32xf32>
    %162 = vector.extract_strided_slice %160 {offsets = [0, 32], sizes = [2, 32], strides = [1, 1]} : vector<2x128xf32> to vector<2x32xf32>
    %163 = vector.extract_strided_slice %160 {offsets = [0, 64], sizes = [2, 32], strides = [1, 1]} : vector<2x128xf32> to vector<2x32xf32>
    %164 = vector.extract_strided_slice %160 {offsets = [0, 96], sizes = [2, 32], strides = [1, 1]} : vector<2x128xf32> to vector<2x32xf32>
    %165 = arith.mulf %162, %142 : vector<2x32xf32>
    %166 = arith.mulf %161, %163 : vector<2x32xf32>
    %167 = arith.addf %165, %166 : vector<2x32xf32>
    %168 = math.tanh %167 : vector<2x32xf32>
    %169 = arith.mulf %164, %168 : vector<2x32xf32>
    %c5 = arith.constant 5 : index
    %c0_55 = arith.constant 0 : index
    %c0_56 = arith.constant 0 : index
    %170 = vector.load %arg14[%c5, %c0_55, %c0_56] : memref<8x2x32xf32, #tpu.memory_space<vmem>>, vector<1x2x32xf32>
    %171 = vector.shape_cast %170 : vector<1x2x32xf32> to vector<2x32xf32>
    %172 = vector.shape_cast %169 : vector<2x32xf32> to vector<1x2x32xf32>
    tpu.vector_store %arg14[%c5, %c0_55, %c0_56], %172 {strides = array<i32>} : memref<8x2x32xf32, #tpu.memory_space<vmem>>, vector<1x2x32xf32>,
    %173 = vector.extract_strided_slice %16 {offsets = [0, 6, 0], sizes = [2, 1, 128], strides = [1, 1, 1]} : vector<2x8x128xf32> to vector<2x1x128xf32>
    %174 = vector.shape_cast %173 : vector<2x1x128xf32> to vector<2x128xf32>
    %cst_57 = arith.constant dense<0.000000e+00> : vector<2x128xf32>
    %175 = tpu.matmul %169, %9, %cst_57 {dimension_numbers = #tpu.dot_dimension_numbers<[1], [0], [0], [1], [0, 0, 1, 1], [], []>} : vector<2x32xf32>, vector<32x128xf32>, vector<2x128xf32> -> vector<2x128xf32>
    %176 = arith.addf %174, %175 : vector<2x128xf32>
    %177 = math.tanh %176 : vector<2x128xf32>
    %cst_58 = arith.constant 0.000000e+00 : f32
    %178 = vector.broadcast %cst_58 : f32 to vector<2x128xf32>
    %179 = arith.subf %178, %176 : vector<2x128xf32>
    %180 = math.exp %179 : vector<2x128xf32>
    %cst_59 = arith.constant 1.000000e+00 : f32
    %181 = vector.broadcast %cst_59 : f32 to vector<2x128xf32>
    %182 = arith.addf %181, %180 : vector<2x128xf32>
    %cst_60 = arith.constant 1.000000e+00 : f32
    %183 = vector.broadcast %cst_60 : f32 to vector<2x128xf32>
    %184 = arith.divf %183, %182 : vector<2x128xf32>
    %185 = arith.select %22, %177, %184 : vector<2x128xi1>, vector<2x128xf32>
    %186 = vector.extract_strided_slice %185 {offsets = [0, 0], sizes = [2, 32], strides = [1, 1]} : vector<2x128xf32> to vector<2x32xf32>
    %187 = vector.extract_strided_slice %185 {offsets = [0, 32], sizes = [2, 32], strides = [1, 1]} : vector<2x128xf32> to vector<2x32xf32>
    %188 = vector.extract_strided_slice %185 {offsets = [0, 64], sizes = [2, 32], strides = [1, 1]} : vector<2x128xf32> to vector<2x32xf32>
    %189 = vector.extract_strided_slice %185 {offsets = [0, 96], sizes = [2, 32], strides = [1, 1]} : vector<2x128xf32> to vector<2x32xf32>
    %190 = arith.mulf %187, %167 : vector<2x32xf32>
    %191 = arith.mulf %186, %188 : vector<2x32xf32>
    %192 = arith.addf %190, %191 : vector<2x32xf32>
    %193 = math.tanh %192 : vector<2x32xf32>
    %194 = arith.mulf %189, %193 : vector<2x32xf32>
    %c6 = arith.constant 6 : index
    %c0_61 = arith.constant 0 : index
    %c0_62 = arith.constant 0 : index
    %195 = vector.load %arg14[%c6, %c0_61, %c0_62] : memref<8x2x32xf32, #tpu.memory_space<vmem>>, vector<1x2x32xf32>
    %196 = vector.shape_cast %195 : vector<1x2x32xf32> to vector<2x32xf32>
    %197 = vector.shape_cast %194 : vector<2x32xf32> to vector<1x2x32xf32>
    tpu.vector_store %arg14[%c6, %c0_61, %c0_62], %197 {strides = array<i32>} : memref<8x2x32xf32, #tpu.memory_space<vmem>>, vector<1x2x32xf32>,
    %198 = vector.extract_strided_slice %16 {offsets = [0, 7, 0], sizes = [2, 1, 128], strides = [1, 1, 1]} : vector<2x8x128xf32> to vector<2x1x128xf32>
    %199 = vector.shape_cast %198 : vector<2x1x128xf32> to vector<2x128xf32>
    %cst_63 = arith.constant dense<0.000000e+00> : vector<2x128xf32>
    %200 = tpu.matmul %194, %9, %cst_63 {dimension_numbers = #tpu.dot_dimension_numbers<[1], [0], [0], [1], [0, 0, 1, 1], [], []>} : vector<2x32xf32>, vector<32x128xf32>, vector<2x128xf32> -> vector<2x128xf32>
    %201 = arith.addf %199, %200 : vector<2x128xf32>
    %202 = math.tanh %201 : vector<2x128xf32>
    %cst_64 = arith.constant 0.000000e+00 : f32
    %203 = vector.broadcast %cst_64 : f32 to vector<2x128xf32>
    %204 = arith.subf %203, %201 : vector<2x128xf32>
    %205 = math.exp %204 : vector<2x128xf32>
    %cst_65 = arith.constant 1.000000e+00 : f32
    %206 = vector.broadcast %cst_65 : f32 to vector<2x128xf32>
    %207 = arith.addf %206, %205 : vector<2x128xf32>
    %cst_66 = arith.constant 1.000000e+00 : f32
    %208 = vector.broadcast %cst_66 : f32 to vector<2x128xf32>
    %209 = arith.divf %208, %207 : vector<2x128xf32>
    %210 = arith.select %22, %202, %209 : vector<2x128xi1>, vector<2x128xf32>
    %211 = vector.extract_strided_slice %210 {offsets = [0, 0], sizes = [2, 32], strides = [1, 1]} : vector<2x128xf32> to vector<2x32xf32>
    %212 = vector.extract_strided_slice %210 {offsets = [0, 32], sizes = [2, 32], strides = [1, 1]} : vector<2x128xf32> to vector<2x32xf32>
    %213 = vector.extract_strided_slice %210 {offsets = [0, 64], sizes = [2, 32], strides = [1, 1]} : vector<2x128xf32> to vector<2x32xf32>
    %214 = vector.extract_strided_slice %210 {offsets = [0, 96], sizes = [2, 32], strides = [1, 1]} : vector<2x128xf32> to vector<2x32xf32>
    %215 = arith.mulf %212, %192 : vector<2x32xf32>
    %216 = arith.mulf %211, %213 : vector<2x32xf32>
    %217 = arith.addf %215, %216 : vector<2x32xf32>
    %218 = math.tanh %217 : vector<2x32xf32>
    %219 = arith.mulf %214, %218 : vector<2x32xf32>
    %c7 = arith.constant 7 : index
    %c0_67 = arith.constant 0 : index
    %c0_68 = arith.constant 0 : index
    %220 = vector.load %arg14[%c7, %c0_67, %c0_68] : memref<8x2x32xf32, #tpu.memory_space<vmem>>, vector<1x2x32xf32>
    %221 = vector.shape_cast %220 : vector<1x2x32xf32> to vector<2x32xf32>
    %222 = vector.shape_cast %219 : vector<2x32xf32> to vector<1x2x32xf32>
    tpu.vector_store %arg14[%c7, %c0_67, %c0_68], %222 {strides = array<i32>} : memref<8x2x32xf32, #tpu.memory_space<vmem>>, vector<1x2x32xf32>,
    %c0_69 = arith.constant 0 : index
    %c0_70 = arith.constant 0 : index
    %223 = vector.load %arg6[%c0_69, %c0_70] : memref<32x128xf32, #tpu.memory_space<vmem>>, vector<32x128xf32>
    %c0_71 = arith.constant 0 : index
    %c0_72 = arith.constant 0 : index
    %224 = vector.load %arg7[%c0_71, %c0_72] : memref<32x128xf32, #tpu.memory_space<vmem>>, vector<32x128xf32>
    %c0_73 = arith.constant 0 : index
    %c0_74 = arith.constant 0 : index
    %225 = vector.load %arg8[%c0_73, %c0_74] : memref<1x128xf32, #tpu.memory_space<vmem>>, vector<1x128xf32>
    %c0_75 = arith.constant 0 : index
    %c0_76 = arith.constant 0 : index
    %c0_77 = arith.constant 0 : index
    %226 = vector.load %arg14[%c0_75, %c0_76, %c0_77] : memref<8x2x32xf32, #tpu.memory_space<vmem>>, vector<8x2x32xf32>
    %227 = vector.shape_cast %226 : vector<8x2x32xf32> to vector<16x32xf32>
    %cst_78 = arith.constant dense<0.000000e+00> : vector<16x128xf32>
    %228 = tpu.matmul %227, %223, %cst_78 {dimension_numbers = #tpu.dot_dimension_numbers<[1], [0], [0], [1], [0, 0, 1, 1], [], []>} : vector<16x32xf32>, vector<32x128xf32>, vector<16x128xf32> -> vector<16x128xf32>
    %229 = vector.broadcast %225 : vector<1x128xf32> to vector<16x128xf32>
    %230 = arith.addf %228, %229 : vector<16x128xf32>
    %231 = vector.shape_cast %230 : vector<16x128xf32> to vector<8x2x128xf32>
    %232 = tpu.iota {dimensions = array<i32: 1>} : vector<2x128xi32>
    %c64_i32_79 = arith.constant 64 : i32
    %233 = vector.broadcast %c64_i32_79 : i32 to vector<2x128xi32>
    %234 = arith.cmpi sge, %232, %233 : vector<2x128xi32>
    %c96_i32_80 = arith.constant 96 : i32
    %235 = vector.broadcast %c96_i32_80 : i32 to vector<2x128xi32>
    %236 = arith.cmpi slt, %232, %235 : vector<2x128xi32>
    %237 = arith.andi %234, %236 : vector<2x128xi1>
    %238 = vector.extract_strided_slice %231 {offsets = [0, 0, 0], sizes = [1, 2, 128], strides = [1, 1, 1]} : vector<8x2x128xf32> to vector<1x2x128xf32>
    %239 = vector.shape_cast %238 : vector<1x2x128xf32> to vector<2x128xf32>
    %cst_81 = arith.constant dense<0.000000e+00> : vector<2x128xf32>
    %240 = tpu.matmul %3, %224, %cst_81 {dimension_numbers = #tpu.dot_dimension_numbers<[1], [0], [0], [1], [0, 0, 1, 1], [], []>} : vector<2x32xf32>, vector<32x128xf32>, vector<2x128xf32> -> vector<2x128xf32>
    %241 = arith.addf %239, %240 : vector<2x128xf32>
    %242 = math.tanh %241 : vector<2x128xf32>
    %cst_82 = arith.constant 0.000000e+00 : f32
    %243 = vector.broadcast %cst_82 : f32 to vector<2x128xf32>
    %244 = arith.subf %243, %241 : vector<2x128xf32>
    %245 = math.exp %244 : vector<2x128xf32>
    %cst_83 = arith.constant 1.000000e+00 : f32
    %246 = vector.broadcast %cst_83 : f32 to vector<2x128xf32>
    %247 = arith.addf %246, %245 : vector<2x128xf32>
    %cst_84 = arith.constant 1.000000e+00 : f32
    %248 = vector.broadcast %cst_84 : f32 to vector<2x128xf32>
    %249 = arith.divf %248, %247 : vector<2x128xf32>
    %250 = arith.select %237, %242, %249 : vector<2x128xi1>, vector<2x128xf32>
    %251 = vector.extract_strided_slice %250 {offsets = [0, 0], sizes = [2, 32], strides = [1, 1]} : vector<2x128xf32> to vector<2x32xf32>
    %252 = vector.extract_strided_slice %250 {offsets = [0, 32], sizes = [2, 32], strides = [1, 1]} : vector<2x128xf32> to vector<2x32xf32>
    %253 = vector.extract_strided_slice %250 {offsets = [0, 64], sizes = [2, 32], strides = [1, 1]} : vector<2x128xf32> to vector<2x32xf32>
    %254 = vector.extract_strided_slice %250 {offsets = [0, 96], sizes = [2, 32], strides = [1, 1]} : vector<2x128xf32> to vector<2x32xf32>
    %255 = arith.mulf %252, %7 : vector<2x32xf32>
    %256 = arith.mulf %251, %253 : vector<2x32xf32>
    %257 = arith.addf %255, %256 : vector<2x32xf32>
    %258 = math.tanh %257 : vector<2x32xf32>
    %259 = arith.mulf %254, %258 : vector<2x32xf32>
    %c0_85 = arith.constant 0 : index
    %c0_86 = arith.constant 0 : index
    %c0_87 = arith.constant 0 : index
    %260 = vector.load %arg14[%c0_85, %c0_86, %c0_87] : memref<8x2x32xf32, #tpu.memory_space<vmem>>, vector<1x2x32xf32>
    %261 = vector.shape_cast %260 : vector<1x2x32xf32> to vector<2x32xf32>
    %262 = vector.shape_cast %259 : vector<2x32xf32> to vector<1x2x32xf32>
    tpu.vector_store %arg14[%c0_85, %c0_86, %c0_87], %262 {strides = array<i32>} : memref<8x2x32xf32, #tpu.memory_space<vmem>>, vector<1x2x32xf32>,
    %263 = vector.extract_strided_slice %231 {offsets = [1, 0, 0], sizes = [1, 2, 128], strides = [1, 1, 1]} : vector<8x2x128xf32> to vector<1x2x128xf32>
    %264 = vector.shape_cast %263 : vector<1x2x128xf32> to vector<2x128xf32>
    %cst_88 = arith.constant dense<0.000000e+00> : vector<2x128xf32>
    %265 = tpu.matmul %259, %224, %cst_88 {dimension_numbers = #tpu.dot_dimension_numbers<[1], [0], [0], [1], [0, 0, 1, 1], [], []>} : vector<2x32xf32>, vector<32x128xf32>, vector<2x128xf32> -> vector<2x128xf32>
    %266 = arith.addf %264, %265 : vector<2x128xf32>
    %267 = math.tanh %266 : vector<2x128xf32>
    %cst_89 = arith.constant 0.000000e+00 : f32
    %268 = vector.broadcast %cst_89 : f32 to vector<2x128xf32>
    %269 = arith.subf %268, %266 : vector<2x128xf32>
    %270 = math.exp %269 : vector<2x128xf32>
    %cst_90 = arith.constant 1.000000e+00 : f32
    %271 = vector.broadcast %cst_90 : f32 to vector<2x128xf32>
    %272 = arith.addf %271, %270 : vector<2x128xf32>
    %cst_91 = arith.constant 1.000000e+00 : f32
    %273 = vector.broadcast %cst_91 : f32 to vector<2x128xf32>
    %274 = arith.divf %273, %272 : vector<2x128xf32>
    %275 = arith.select %237, %267, %274 : vector<2x128xi1>, vector<2x128xf32>
    %276 = vector.extract_strided_slice %275 {offsets = [0, 0], sizes = [2, 32], strides = [1, 1]} : vector<2x128xf32> to vector<2x32xf32>
    %277 = vector.extract_strided_slice %275 {offsets = [0, 32], sizes = [2, 32], strides = [1, 1]} : vector<2x128xf32> to vector<2x32xf32>
    %278 = vector.extract_strided_slice %275 {offsets = [0, 64], sizes = [2, 32], strides = [1, 1]} : vector<2x128xf32> to vector<2x32xf32>
    %279 = vector.extract_strided_slice %275 {offsets = [0, 96], sizes = [2, 32], strides = [1, 1]} : vector<2x128xf32> to vector<2x32xf32>
    %280 = arith.mulf %277, %257 : vector<2x32xf32>
    %281 = arith.mulf %276, %278 : vector<2x32xf32>
    %282 = arith.addf %280, %281 : vector<2x32xf32>
    %283 = math.tanh %282 : vector<2x32xf32>
    %284 = arith.mulf %279, %283 : vector<2x32xf32>
    %c1_92 = arith.constant 1 : index
    %c0_93 = arith.constant 0 : index
    %c0_94 = arith.constant 0 : index
    %285 = vector.load %arg14[%c1_92, %c0_93, %c0_94] : memref<8x2x32xf32, #tpu.memory_space<vmem>>, vector<1x2x32xf32>
    %286 = vector.shape_cast %285 : vector<1x2x32xf32> to vector<2x32xf32>
    %287 = vector.shape_cast %284 : vector<2x32xf32> to vector<1x2x32xf32>
    tpu.vector_store %arg14[%c1_92, %c0_93, %c0_94], %287 {strides = array<i32>} : memref<8x2x32xf32, #tpu.memory_space<vmem>>, vector<1x2x32xf32>,
    %288 = vector.extract_strided_slice %231 {offsets = [2, 0, 0], sizes = [1, 2, 128], strides = [1, 1, 1]} : vector<8x2x128xf32> to vector<1x2x128xf32>
    %289 = vector.shape_cast %288 : vector<1x2x128xf32> to vector<2x128xf32>
    %cst_95 = arith.constant dense<0.000000e+00> : vector<2x128xf32>
    %290 = tpu.matmul %284, %224, %cst_95 {dimension_numbers = #tpu.dot_dimension_numbers<[1], [0], [0], [1], [0, 0, 1, 1], [], []>} : vector<2x32xf32>, vector<32x128xf32>, vector<2x128xf32> -> vector<2x128xf32>
    %291 = arith.addf %289, %290 : vector<2x128xf32>
    %292 = math.tanh %291 : vector<2x128xf32>
    %cst_96 = arith.constant 0.000000e+00 : f32
    %293 = vector.broadcast %cst_96 : f32 to vector<2x128xf32>
    %294 = arith.subf %293, %291 : vector<2x128xf32>
    %295 = math.exp %294 : vector<2x128xf32>
    %cst_97 = arith.constant 1.000000e+00 : f32
    %296 = vector.broadcast %cst_97 : f32 to vector<2x128xf32>
    %297 = arith.addf %296, %295 : vector<2x128xf32>
    %cst_98 = arith.constant 1.000000e+00 : f32
    %298 = vector.broadcast %cst_98 : f32 to vector<2x128xf32>
    %299 = arith.divf %298, %297 : vector<2x128xf32>
    %300 = arith.select %237, %292, %299 : vector<2x128xi1>, vector<2x128xf32>
    %301 = vector.extract_strided_slice %300 {offsets = [0, 0], sizes = [2, 32], strides = [1, 1]} : vector<2x128xf32> to vector<2x32xf32>
    %302 = vector.extract_strided_slice %300 {offsets = [0, 32], sizes = [2, 32], strides = [1, 1]} : vector<2x128xf32> to vector<2x32xf32>
    %303 = vector.extract_strided_slice %300 {offsets = [0, 64], sizes = [2, 32], strides = [1, 1]} : vector<2x128xf32> to vector<2x32xf32>
    %304 = vector.extract_strided_slice %300 {offsets = [0, 96], sizes = [2, 32], strides = [1, 1]} : vector<2x128xf32> to vector<2x32xf32>
    %305 = arith.mulf %302, %282 : vector<2x32xf32>
    %306 = arith.mulf %301, %303 : vector<2x32xf32>
    %307 = arith.addf %305, %306 : vector<2x32xf32>
    %308 = math.tanh %307 : vector<2x32xf32>
    %309 = arith.mulf %304, %308 : vector<2x32xf32>
    %c2_99 = arith.constant 2 : index
    %c0_100 = arith.constant 0 : index
    %c0_101 = arith.constant 0 : index
    %310 = vector.load %arg14[%c2_99, %c0_100, %c0_101] : memref<8x2x32xf32, #tpu.memory_space<vmem>>, vector<1x2x32xf32>
    %311 = vector.shape_cast %310 : vector<1x2x32xf32> to vector<2x32xf32>
    %312 = vector.shape_cast %309 : vector<2x32xf32> to vector<1x2x32xf32>
    tpu.vector_store %arg14[%c2_99, %c0_100, %c0_101], %312 {strides = array<i32>} : memref<8x2x32xf32, #tpu.memory_space<vmem>>, vector<1x2x32xf32>,
    %313 = vector.extract_strided_slice %231 {offsets = [3, 0, 0], sizes = [1, 2, 128], strides = [1, 1, 1]} : vector<8x2x128xf32> to vector<1x2x128xf32>
    %314 = vector.shape_cast %313 : vector<1x2x128xf32> to vector<2x128xf32>
    %cst_102 = arith.constant dense<0.000000e+00> : vector<2x128xf32>
    %315 = tpu.matmul %309, %224, %cst_102 {dimension_numbers = #tpu.dot_dimension_numbers<[1], [0], [0], [1], [0, 0, 1, 1], [], []>} : vector<2x32xf32>, vector<32x128xf32>, vector<2x128xf32> -> vector<2x128xf32>
    %316 = arith.addf %314, %315 : vector<2x128xf32>
    %317 = math.tanh %316 : vector<2x128xf32>
    %cst_103 = arith.constant 0.000000e+00 : f32
    %318 = vector.broadcast %cst_103 : f32 to vector<2x128xf32>
    %319 = arith.subf %318, %316 : vector<2x128xf32>
    %320 = math.exp %319 : vector<2x128xf32>
    %cst_104 = arith.constant 1.000000e+00 : f32
    %321 = vector.broadcast %cst_104 : f32 to vector<2x128xf32>
    %322 = arith.addf %321, %320 : vector<2x128xf32>
    %cst_105 = arith.constant 1.000000e+00 : f32
    %323 = vector.broadcast %cst_105 : f32 to vector<2x128xf32>
    %324 = arith.divf %323, %322 : vector<2x128xf32>
    %325 = arith.select %237, %317, %324 : vector<2x128xi1>, vector<2x128xf32>
    %326 = vector.extract_strided_slice %325 {offsets = [0, 0], sizes = [2, 32], strides = [1, 1]} : vector<2x128xf32> to vector<2x32xf32>
    %327 = vector.extract_strided_slice %325 {offsets = [0, 32], sizes = [2, 32], strides = [1, 1]} : vector<2x128xf32> to vector<2x32xf32>
    %328 = vector.extract_strided_slice %325 {offsets = [0, 64], sizes = [2, 32], strides = [1, 1]} : vector<2x128xf32> to vector<2x32xf32>
    %329 = vector.extract_strided_slice %325 {offsets = [0, 96], sizes = [2, 32], strides = [1, 1]} : vector<2x128xf32> to vector<2x32xf32>
    %330 = arith.mulf %327, %307 : vector<2x32xf32>
    %331 = arith.mulf %326, %328 : vector<2x32xf32>
    %332 = arith.addf %330, %331 : vector<2x32xf32>
    %333 = math.tanh %332 : vector<2x32xf32>
    %334 = arith.mulf %329, %333 : vector<2x32xf32>
    %c3_106 = arith.constant 3 : index
    %c0_107 = arith.constant 0 : index
    %c0_108 = arith.constant 0 : index
    %335 = vector.load %arg14[%c3_106, %c0_107, %c0_108] : memref<8x2x32xf32, #tpu.memory_space<vmem>>, vector<1x2x32xf32>
    %336 = vector.shape_cast %335 : vector<1x2x32xf32> to vector<2x32xf32>
    %337 = vector.shape_cast %334 : vector<2x32xf32> to vector<1x2x32xf32>
    tpu.vector_store %arg14[%c3_106, %c0_107, %c0_108], %337 {strides = array<i32>} : memref<8x2x32xf32, #tpu.memory_space<vmem>>, vector<1x2x32xf32>,
    %338 = vector.extract_strided_slice %231 {offsets = [4, 0, 0], sizes = [1, 2, 128], strides = [1, 1, 1]} : vector<8x2x128xf32> to vector<1x2x128xf32>
    %339 = vector.shape_cast %338 : vector<1x2x128xf32> to vector<2x128xf32>
    %cst_109 = arith.constant dense<0.000000e+00> : vector<2x128xf32>
    %340 = tpu.matmul %334, %224, %cst_109 {dimension_numbers = #tpu.dot_dimension_numbers<[1], [0], [0], [1], [0, 0, 1, 1], [], []>} : vector<2x32xf32>, vector<32x128xf32>, vector<2x128xf32> -> vector<2x128xf32>
    %341 = arith.addf %339, %340 : vector<2x128xf32>
    %342 = math.tanh %341 : vector<2x128xf32>
    %cst_110 = arith.constant 0.000000e+00 : f32
    %343 = vector.broadcast %cst_110 : f32 to vector<2x128xf32>
    %344 = arith.subf %343, %341 : vector<2x128xf32>
    %345 = math.exp %344 : vector<2x128xf32>
    %cst_111 = arith.constant 1.000000e+00 : f32
    %346 = vector.broadcast %cst_111 : f32 to vector<2x128xf32>
    %347 = arith.addf %346, %345 : vector<2x128xf32>
    %cst_112 = arith.constant 1.000000e+00 : f32
    %348 = vector.broadcast %cst_112 : f32 to vector<2x128xf32>
    %349 = arith.divf %348, %347 : vector<2x128xf32>
    %350 = arith.select %237, %342, %349 : vector<2x128xi1>, vector<2x128xf32>
    %351 = vector.extract_strided_slice %350 {offsets = [0, 0], sizes = [2, 32], strides = [1, 1]} : vector<2x128xf32> to vector<2x32xf32>
    %352 = vector.extract_strided_slice %350 {offsets = [0, 32], sizes = [2, 32], strides = [1, 1]} : vector<2x128xf32> to vector<2x32xf32>
    %353 = vector.extract_strided_slice %350 {offsets = [0, 64], sizes = [2, 32], strides = [1, 1]} : vector<2x128xf32> to vector<2x32xf32>
    %354 = vector.extract_strided_slice %350 {offsets = [0, 96], sizes = [2, 32], strides = [1, 1]} : vector<2x128xf32> to vector<2x32xf32>
    %355 = arith.mulf %352, %332 : vector<2x32xf32>
    %356 = arith.mulf %351, %353 : vector<2x32xf32>
    %357 = arith.addf %355, %356 : vector<2x32xf32>
    %358 = math.tanh %357 : vector<2x32xf32>
    %359 = arith.mulf %354, %358 : vector<2x32xf32>
    %c4_113 = arith.constant 4 : index
    %c0_114 = arith.constant 0 : index
    %c0_115 = arith.constant 0 : index
    %360 = vector.load %arg14[%c4_113, %c0_114, %c0_115] : memref<8x2x32xf32, #tpu.memory_space<vmem>>, vector<1x2x32xf32>
    %361 = vector.shape_cast %360 : vector<1x2x32xf32> to vector<2x32xf32>
    %362 = vector.shape_cast %359 : vector<2x32xf32> to vector<1x2x32xf32>
    tpu.vector_store %arg14[%c4_113, %c0_114, %c0_115], %362 {strides = array<i32>} : memref<8x2x32xf32, #tpu.memory_space<vmem>>, vector<1x2x32xf32>,
    %363 = vector.extract_strided_slice %231 {offsets = [5, 0, 0], sizes = [1, 2, 128], strides = [1, 1, 1]} : vector<8x2x128xf32> to vector<1x2x128xf32>
    %364 = vector.shape_cast %363 : vector<1x2x128xf32> to vector<2x128xf32>
    %cst_116 = arith.constant dense<0.000000e+00> : vector<2x128xf32>
    %365 = tpu.matmul %359, %224, %cst_116 {dimension_numbers = #tpu.dot_dimension_numbers<[1], [0], [0], [1], [0, 0, 1, 1], [], []>} : vector<2x32xf32>, vector<32x128xf32>, vector<2x128xf32> -> vector<2x128xf32>
    %366 = arith.addf %364, %365 : vector<2x128xf32>
    %367 = math.tanh %366 : vector<2x128xf32>
    %cst_117 = arith.constant 0.000000e+00 : f32
    %368 = vector.broadcast %cst_117 : f32 to vector<2x128xf32>
    %369 = arith.subf %368, %366 : vector<2x128xf32>
    %370 = math.exp %369 : vector<2x128xf32>
    %cst_118 = arith.constant 1.000000e+00 : f32
    %371 = vector.broadcast %cst_118 : f32 to vector<2x128xf32>
    %372 = arith.addf %371, %370 : vector<2x128xf32>
    %cst_119 = arith.constant 1.000000e+00 : f32
    %373 = vector.broadcast %cst_119 : f32 to vector<2x128xf32>
    %374 = arith.divf %373, %372 : vector<2x128xf32>
    %375 = arith.select %237, %367, %374 : vector<2x128xi1>, vector<2x128xf32>
    %376 = vector.extract_strided_slice %375 {offsets = [0, 0], sizes = [2, 32], strides = [1, 1]} : vector<2x128xf32> to vector<2x32xf32>
    %377 = vector.extract_strided_slice %375 {offsets = [0, 32], sizes = [2, 32], strides = [1, 1]} : vector<2x128xf32> to vector<2x32xf32>
    %378 = vector.extract_strided_slice %375 {offsets = [0, 64], sizes = [2, 32], strides = [1, 1]} : vector<2x128xf32> to vector<2x32xf32>
    %379 = vector.extract_strided_slice %375 {offsets = [0, 96], sizes = [2, 32], strides = [1, 1]} : vector<2x128xf32> to vector<2x32xf32>
    %380 = arith.mulf %377, %357 : vector<2x32xf32>
    %381 = arith.mulf %376, %378 : vector<2x32xf32>
    %382 = arith.addf %380, %381 : vector<2x32xf32>
    %383 = math.tanh %382 : vector<2x32xf32>
    %384 = arith.mulf %379, %383 : vector<2x32xf32>
    %c5_120 = arith.constant 5 : index
    %c0_121 = arith.constant 0 : index
    %c0_122 = arith.constant 0 : index
    %385 = vector.load %arg14[%c5_120, %c0_121, %c0_122] : memref<8x2x32xf32, #tpu.memory_space<vmem>>, vector<1x2x32xf32>
    %386 = vector.shape_cast %385 : vector<1x2x32xf32> to vector<2x32xf32>
    %387 = vector.shape_cast %384 : vector<2x32xf32> to vector<1x2x32xf32>
    tpu.vector_store %arg14[%c5_120, %c0_121, %c0_122], %387 {strides = array<i32>} : memref<8x2x32xf32, #tpu.memory_space<vmem>>, vector<1x2x32xf32>,
    %388 = vector.extract_strided_slice %231 {offsets = [6, 0, 0], sizes = [1, 2, 128], strides = [1, 1, 1]} : vector<8x2x128xf32> to vector<1x2x128xf32>
    %389 = vector.shape_cast %388 : vector<1x2x128xf32> to vector<2x128xf32>
    %cst_123 = arith.constant dense<0.000000e+00> : vector<2x128xf32>
    %390 = tpu.matmul %384, %224, %cst_123 {dimension_numbers = #tpu.dot_dimension_numbers<[1], [0], [0], [1], [0, 0, 1, 1], [], []>} : vector<2x32xf32>, vector<32x128xf32>, vector<2x128xf32> -> vector<2x128xf32>
    %391 = arith.addf %389, %390 : vector<2x128xf32>
    %392 = math.tanh %391 : vector<2x128xf32>
    %cst_124 = arith.constant 0.000000e+00 : f32
    %393 = vector.broadcast %cst_124 : f32 to vector<2x128xf32>
    %394 = arith.subf %393, %391 : vector<2x128xf32>
    %395 = math.exp %394 : vector<2x128xf32>
    %cst_125 = arith.constant 1.000000e+00 : f32
    %396 = vector.broadcast %cst_125 : f32 to vector<2x128xf32>
    %397 = arith.addf %396, %395 : vector<2x128xf32>
    %cst_126 = arith.constant 1.000000e+00 : f32
    %398 = vector.broadcast %cst_126 : f32 to vector<2x128xf32>
    %399 = arith.divf %398, %397 : vector<2x128xf32>
    %400 = arith.select %237, %392, %399 : vector<2x128xi1>, vector<2x128xf32>
    %401 = vector.extract_strided_slice %400 {offsets = [0, 0], sizes = [2, 32], strides = [1, 1]} : vector<2x128xf32> to vector<2x32xf32>
    %402 = vector.extract_strided_slice %400 {offsets = [0, 32], sizes = [2, 32], strides = [1, 1]} : vector<2x128xf32> to vector<2x32xf32>
    %403 = vector.extract_strided_slice %400 {offsets = [0, 64], sizes = [2, 32], strides = [1, 1]} : vector<2x128xf32> to vector<2x32xf32>
    %404 = vector.extract_strided_slice %400 {offsets = [0, 96], sizes = [2, 32], strides = [1, 1]} : vector<2x128xf32> to vector<2x32xf32>
    %405 = arith.mulf %402, %382 : vector<2x32xf32>
    %406 = arith.mulf %401, %403 : vector<2x32xf32>
    %407 = arith.addf %405, %406 : vector<2x32xf32>
    %408 = math.tanh %407 : vector<2x32xf32>
    %409 = arith.mulf %404, %408 : vector<2x32xf32>
    %c6_127 = arith.constant 6 : index
    %c0_128 = arith.constant 0 : index
    %c0_129 = arith.constant 0 : index
    %410 = vector.load %arg14[%c6_127, %c0_128, %c0_129] : memref<8x2x32xf32, #tpu.memory_space<vmem>>, vector<1x2x32xf32>
    %411 = vector.shape_cast %410 : vector<1x2x32xf32> to vector<2x32xf32>
    %412 = vector.shape_cast %409 : vector<2x32xf32> to vector<1x2x32xf32>
    tpu.vector_store %arg14[%c6_127, %c0_128, %c0_129], %412 {strides = array<i32>} : memref<8x2x32xf32, #tpu.memory_space<vmem>>, vector<1x2x32xf32>,
    %413 = vector.extract_strided_slice %231 {offsets = [7, 0, 0], sizes = [1, 2, 128], strides = [1, 1, 1]} : vector<8x2x128xf32> to vector<1x2x128xf32>
    %414 = vector.shape_cast %413 : vector<1x2x128xf32> to vector<2x128xf32>
    %cst_130 = arith.constant dense<0.000000e+00> : vector<2x128xf32>
    %415 = tpu.matmul %409, %224, %cst_130 {dimension_numbers = #tpu.dot_dimension_numbers<[1], [0], [0], [1], [0, 0, 1, 1], [], []>} : vector<2x32xf32>, vector<32x128xf32>, vector<2x128xf32> -> vector<2x128xf32>
    %416 = arith.addf %414, %415 : vector<2x128xf32>
    %417 = math.tanh %416 : vector<2x128xf32>
    %cst_131 = arith.constant 0.000000e+00 : f32
    %418 = vector.broadcast %cst_131 : f32 to vector<2x128xf32>
    %419 = arith.subf %418, %416 : vector<2x128xf32>
    %420 = math.exp %419 : vector<2x128xf32>
    %cst_132 = arith.constant 1.000000e+00 : f32
    %421 = vector.broadcast %cst_132 : f32 to vector<2x128xf32>
    %422 = arith.addf %421, %420 : vector<2x128xf32>
    %cst_133 = arith.constant 1.000000e+00 : f32
    %423 = vector.broadcast %cst_133 : f32 to vector<2x128xf32>
    %424 = arith.divf %423, %422 : vector<2x128xf32>
    %425 = arith.select %237, %417, %424 : vector<2x128xi1>, vector<2x128xf32>
    %426 = vector.extract_strided_slice %425 {offsets = [0, 0], sizes = [2, 32], strides = [1, 1]} : vector<2x128xf32> to vector<2x32xf32>
    %427 = vector.extract_strided_slice %425 {offsets = [0, 32], sizes = [2, 32], strides = [1, 1]} : vector<2x128xf32> to vector<2x32xf32>
    %428 = vector.extract_strided_slice %425 {offsets = [0, 64], sizes = [2, 32], strides = [1, 1]} : vector<2x128xf32> to vector<2x32xf32>
    %429 = vector.extract_strided_slice %425 {offsets = [0, 96], sizes = [2, 32], strides = [1, 1]} : vector<2x128xf32> to vector<2x32xf32>
    %430 = arith.mulf %427, %407 : vector<2x32xf32>
    %431 = arith.mulf %426, %428 : vector<2x32xf32>
    %432 = arith.addf %430, %431 : vector<2x32xf32>
    %433 = math.tanh %432 : vector<2x32xf32>
    %434 = arith.mulf %429, %433 : vector<2x32xf32>
    %c7_134 = arith.constant 7 : index
    %c0_135 = arith.constant 0 : index
    %c0_136 = arith.constant 0 : index
    %435 = vector.load %arg14[%c7_134, %c0_135, %c0_136] : memref<8x2x32xf32, #tpu.memory_space<vmem>>, vector<1x2x32xf32>
    %436 = vector.shape_cast %435 : vector<1x2x32xf32> to vector<2x32xf32>
    %437 = vector.shape_cast %434 : vector<2x32xf32> to vector<1x2x32xf32>
    tpu.vector_store %arg14[%c7_134, %c0_135, %c0_136], %437 {strides = array<i32>} : memref<8x2x32xf32, #tpu.memory_space<vmem>>, vector<1x2x32xf32>,
    %c0_137 = arith.constant 0 : index
    %c0_138 = arith.constant 0 : index
    %438 = vector.load %arg3[%c0_137, %c0_138] : memref<32x128xf32, #tpu.memory_space<vmem>>, vector<32x128xf32>
    %c0_139 = arith.constant 0 : index
    %c0_140 = arith.constant 0 : index
    %439 = vector.load %arg4[%c0_139, %c0_140] : memref<32x128xf32, #tpu.memory_space<vmem>>, vector<32x128xf32>
    %c0_141 = arith.constant 0 : index
    %c0_142 = arith.constant 0 : index
    %440 = vector.load %arg5[%c0_141, %c0_142] : memref<1x128xf32, #tpu.memory_space<vmem>>, vector<1x128xf32>
    %c0_143 = arith.constant 0 : index
    %c0_144 = arith.constant 0 : index
    %c0_145 = arith.constant 0 : index
    %441 = vector.load %arg14[%c0_143, %c0_144, %c0_145] : memref<8x2x32xf32, #tpu.memory_space<vmem>>, vector<8x2x32xf32>
    %442 = vector.shape_cast %441 : vector<8x2x32xf32> to vector<16x32xf32>
    %cst_146 = arith.constant dense<0.000000e+00> : vector<16x128xf32>
    %443 = tpu.matmul %442, %438, %cst_146 {dimension_numbers = #tpu.dot_dimension_numbers<[1], [0], [0], [1], [0, 0, 1, 1], [], []>} : vector<16x32xf32>, vector<32x128xf32>, vector<16x128xf32> -> vector<16x128xf32>
    %444 = vector.broadcast %440 : vector<1x128xf32> to vector<16x128xf32>
    %445 = arith.addf %443, %444 : vector<16x128xf32>
    %446 = vector.shape_cast %445 : vector<16x128xf32> to vector<8x2x128xf32>
    %447 = tpu.iota {dimensions = array<i32: 1>} : vector<2x128xi32>
    %c64_i32_147 = arith.constant 64 : i32
    %448 = vector.broadcast %c64_i32_147 : i32 to vector<2x128xi32>
    %449 = arith.cmpi sge, %447, %448 : vector<2x128xi32>
    %c96_i32_148 = arith.constant 96 : i32
    %450 = vector.broadcast %c96_i32_148 : i32 to vector<2x128xi32>
    %451 = arith.cmpi slt, %447, %450 : vector<2x128xi32>
    %452 = arith.andi %449, %451 : vector<2x128xi1>
    %453 = vector.extract_strided_slice %446 {offsets = [0, 0, 0], sizes = [1, 2, 128], strides = [1, 1, 1]} : vector<8x2x128xf32> to vector<1x2x128xf32>
    %454 = vector.shape_cast %453 : vector<1x2x128xf32> to vector<2x128xf32>
    %cst_149 = arith.constant dense<0.000000e+00> : vector<2x128xf32>
    %455 = tpu.matmul %219, %439, %cst_149 {dimension_numbers = #tpu.dot_dimension_numbers<[1], [0], [0], [1], [0, 0, 1, 1], [], []>} : vector<2x32xf32>, vector<32x128xf32>, vector<2x128xf32> -> vector<2x128xf32>
    %456 = arith.addf %454, %455 : vector<2x128xf32>
    %457 = math.tanh %456 : vector<2x128xf32>
    %cst_150 = arith.constant 0.000000e+00 : f32
    %458 = vector.broadcast %cst_150 : f32 to vector<2x128xf32>
    %459 = arith.subf %458, %456 : vector<2x128xf32>
    %460 = math.exp %459 : vector<2x128xf32>
    %cst_151 = arith.constant 1.000000e+00 : f32
    %461 = vector.broadcast %cst_151 : f32 to vector<2x128xf32>
    %462 = arith.addf %461, %460 : vector<2x128xf32>
    %cst_152 = arith.constant 1.000000e+00 : f32
    %463 = vector.broadcast %cst_152 : f32 to vector<2x128xf32>
    %464 = arith.divf %463, %462 : vector<2x128xf32>
    %465 = arith.select %452, %457, %464 : vector<2x128xi1>, vector<2x128xf32>
    %466 = vector.extract_strided_slice %465 {offsets = [0, 0], sizes = [2, 32], strides = [1, 1]} : vector<2x128xf32> to vector<2x32xf32>
    %467 = vector.extract_strided_slice %465 {offsets = [0, 32], sizes = [2, 32], strides = [1, 1]} : vector<2x128xf32> to vector<2x32xf32>
    %468 = vector.extract_strided_slice %465 {offsets = [0, 64], sizes = [2, 32], strides = [1, 1]} : vector<2x128xf32> to vector<2x32xf32>
    %469 = vector.extract_strided_slice %465 {offsets = [0, 96], sizes = [2, 32], strides = [1, 1]} : vector<2x128xf32> to vector<2x32xf32>
    %470 = arith.mulf %467, %217 : vector<2x32xf32>
    %471 = arith.mulf %466, %468 : vector<2x32xf32>
    %472 = arith.addf %470, %471 : vector<2x32xf32>
    %473 = math.tanh %472 : vector<2x32xf32>
    %474 = arith.mulf %469, %473 : vector<2x32xf32>
    %c0_153 = arith.constant 0 : index
    %c0_154 = arith.constant 0 : index
    %c0_155 = arith.constant 0 : index
    %475 = vector.load %arg14[%c0_153, %c0_154, %c0_155] : memref<8x2x32xf32, #tpu.memory_space<vmem>>, vector<1x2x32xf32>
    %476 = vector.shape_cast %475 : vector<1x2x32xf32> to vector<2x32xf32>
    %477 = vector.shape_cast %474 : vector<2x32xf32> to vector<1x2x32xf32>
    tpu.vector_store %arg14[%c0_153, %c0_154, %c0_155], %477 {strides = array<i32>} : memref<8x2x32xf32, #tpu.memory_space<vmem>>, vector<1x2x32xf32>,
    %478 = vector.extract_strided_slice %446 {offsets = [1, 0, 0], sizes = [1, 2, 128], strides = [1, 1, 1]} : vector<8x2x128xf32> to vector<1x2x128xf32>
    %479 = vector.shape_cast %478 : vector<1x2x128xf32> to vector<2x128xf32>
    %cst_156 = arith.constant dense<0.000000e+00> : vector<2x128xf32>
    %480 = tpu.matmul %474, %439, %cst_156 {dimension_numbers = #tpu.dot_dimension_numbers<[1], [0], [0], [1], [0, 0, 1, 1], [], []>} : vector<2x32xf32>, vector<32x128xf32>, vector<2x128xf32> -> vector<2x128xf32>
    %481 = arith.addf %479, %480 : vector<2x128xf32>
    %482 = math.tanh %481 : vector<2x128xf32>
    %cst_157 = arith.constant 0.000000e+00 : f32
    %483 = vector.broadcast %cst_157 : f32 to vector<2x128xf32>
    %484 = arith.subf %483, %481 : vector<2x128xf32>
    %485 = math.exp %484 : vector<2x128xf32>
    %cst_158 = arith.constant 1.000000e+00 : f32
    %486 = vector.broadcast %cst_158 : f32 to vector<2x128xf32>
    %487 = arith.addf %486, %485 : vector<2x128xf32>
    %cst_159 = arith.constant 1.000000e+00 : f32
    %488 = vector.broadcast %cst_159 : f32 to vector<2x128xf32>
    %489 = arith.divf %488, %487 : vector<2x128xf32>
    %490 = arith.select %452, %482, %489 : vector<2x128xi1>, vector<2x128xf32>
    %491 = vector.extract_strided_slice %490 {offsets = [0, 0], sizes = [2, 32], strides = [1, 1]} : vector<2x128xf32> to vector<2x32xf32>
    %492 = vector.extract_strided_slice %490 {offsets = [0, 32], sizes = [2, 32], strides = [1, 1]} : vector<2x128xf32> to vector<2x32xf32>
    %493 = vector.extract_strided_slice %490 {offsets = [0, 64], sizes = [2, 32], strides = [1, 1]} : vector<2x128xf32> to vector<2x32xf32>
    %494 = vector.extract_strided_slice %490 {offsets = [0, 96], sizes = [2, 32], strides = [1, 1]} : vector<2x128xf32> to vector<2x32xf32>
    %495 = arith.mulf %492, %472 : vector<2x32xf32>
    %496 = arith.mulf %491, %493 : vector<2x32xf32>
    %497 = arith.addf %495, %496 : vector<2x32xf32>
    %498 = math.tanh %497 : vector<2x32xf32>
    %499 = arith.mulf %494, %498 : vector<2x32xf32>
    %c1_160 = arith.constant 1 : index
    %c0_161 = arith.constant 0 : index
    %c0_162 = arith.constant 0 : index
    %500 = vector.load %arg14[%c1_160, %c0_161, %c0_162] : memref<8x2x32xf32, #tpu.memory_space<vmem>>, vector<1x2x32xf32>
    %501 = vector.shape_cast %500 : vector<1x2x32xf32> to vector<2x32xf32>
    %502 = vector.shape_cast %499 : vector<2x32xf32> to vector<1x2x32xf32>
    tpu.vector_store %arg14[%c1_160, %c0_161, %c0_162], %502 {strides = array<i32>} : memref<8x2x32xf32, #tpu.memory_space<vmem>>, vector<1x2x32xf32>,
    %503 = vector.extract_strided_slice %446 {offsets = [2, 0, 0], sizes = [1, 2, 128], strides = [1, 1, 1]} : vector<8x2x128xf32> to vector<1x2x128xf32>
    %504 = vector.shape_cast %503 : vector<1x2x128xf32> to vector<2x128xf32>
    %cst_163 = arith.constant dense<0.000000e+00> : vector<2x128xf32>
    %505 = tpu.matmul %499, %439, %cst_163 {dimension_numbers = #tpu.dot_dimension_numbers<[1], [0], [0], [1], [0, 0, 1, 1], [], []>} : vector<2x32xf32>, vector<32x128xf32>, vector<2x128xf32> -> vector<2x128xf32>
    %506 = arith.addf %504, %505 : vector<2x128xf32>
    %507 = math.tanh %506 : vector<2x128xf32>
    %cst_164 = arith.constant 0.000000e+00 : f32
    %508 = vector.broadcast %cst_164 : f32 to vector<2x128xf32>
    %509 = arith.subf %508, %506 : vector<2x128xf32>
    %510 = math.exp %509 : vector<2x128xf32>
    %cst_165 = arith.constant 1.000000e+00 : f32
    %511 = vector.broadcast %cst_165 : f32 to vector<2x128xf32>
    %512 = arith.addf %511, %510 : vector<2x128xf32>
    %cst_166 = arith.constant 1.000000e+00 : f32
    %513 = vector.broadcast %cst_166 : f32 to vector<2x128xf32>
    %514 = arith.divf %513, %512 : vector<2x128xf32>
    %515 = arith.select %452, %507, %514 : vector<2x128xi1>, vector<2x128xf32>
    %516 = vector.extract_strided_slice %515 {offsets = [0, 0], sizes = [2, 32], strides = [1, 1]} : vector<2x128xf32> to vector<2x32xf32>
    %517 = vector.extract_strided_slice %515 {offsets = [0, 32], sizes = [2, 32], strides = [1, 1]} : vector<2x128xf32> to vector<2x32xf32>
    %518 = vector.extract_strided_slice %515 {offsets = [0, 64], sizes = [2, 32], strides = [1, 1]} : vector<2x128xf32> to vector<2x32xf32>
    %519 = vector.extract_strided_slice %515 {offsets = [0, 96], sizes = [2, 32], strides = [1, 1]} : vector<2x128xf32> to vector<2x32xf32>
    %520 = arith.mulf %517, %497 : vector<2x32xf32>
    %521 = arith.mulf %516, %518 : vector<2x32xf32>
    %522 = arith.addf %520, %521 : vector<2x32xf32>
    %523 = math.tanh %522 : vector<2x32xf32>
    %524 = arith.mulf %519, %523 : vector<2x32xf32>
    %c2_167 = arith.constant 2 : index
    %c0_168 = arith.constant 0 : index
    %c0_169 = arith.constant 0 : index
    %525 = vector.load %arg14[%c2_167, %c0_168, %c0_169] : memref<8x2x32xf32, #tpu.memory_space<vmem>>, vector<1x2x32xf32>
    %526 = vector.shape_cast %525 : vector<1x2x32xf32> to vector<2x32xf32>
    %527 = vector.shape_cast %524 : vector<2x32xf32> to vector<1x2x32xf32>
    tpu.vector_store %arg14[%c2_167, %c0_168, %c0_169], %527 {strides = array<i32>} : memref<8x2x32xf32, #tpu.memory_space<vmem>>, vector<1x2x32xf32>,
    %528 = vector.extract_strided_slice %446 {offsets = [3, 0, 0], sizes = [1, 2, 128], strides = [1, 1, 1]} : vector<8x2x128xf32> to vector<1x2x128xf32>
    %529 = vector.shape_cast %528 : vector<1x2x128xf32> to vector<2x128xf32>
    %cst_170 = arith.constant dense<0.000000e+00> : vector<2x128xf32>
    %530 = tpu.matmul %524, %439, %cst_170 {dimension_numbers = #tpu.dot_dimension_numbers<[1], [0], [0], [1], [0, 0, 1, 1], [], []>} : vector<2x32xf32>, vector<32x128xf32>, vector<2x128xf32> -> vector<2x128xf32>
    %531 = arith.addf %529, %530 : vector<2x128xf32>
    %532 = math.tanh %531 : vector<2x128xf32>
    %cst_171 = arith.constant 0.000000e+00 : f32
    %533 = vector.broadcast %cst_171 : f32 to vector<2x128xf32>
    %534 = arith.subf %533, %531 : vector<2x128xf32>
    %535 = math.exp %534 : vector<2x128xf32>
    %cst_172 = arith.constant 1.000000e+00 : f32
    %536 = vector.broadcast %cst_172 : f32 to vector<2x128xf32>
    %537 = arith.addf %536, %535 : vector<2x128xf32>
    %cst_173 = arith.constant 1.000000e+00 : f32
    %538 = vector.broadcast %cst_173 : f32 to vector<2x128xf32>
    %539 = arith.divf %538, %537 : vector<2x128xf32>
    %540 = arith.select %452, %532, %539 : vector<2x128xi1>, vector<2x128xf32>
    %541 = vector.extract_strided_slice %540 {offsets = [0, 0], sizes = [2, 32], strides = [1, 1]} : vector<2x128xf32> to vector<2x32xf32>
    %542 = vector.extract_strided_slice %540 {offsets = [0, 32], sizes = [2, 32], strides = [1, 1]} : vector<2x128xf32> to vector<2x32xf32>
    %543 = vector.extract_strided_slice %540 {offsets = [0, 64], sizes = [2, 32], strides = [1, 1]} : vector<2x128xf32> to vector<2x32xf32>
    %544 = vector.extract_strided_slice %540 {offsets = [0, 96], sizes = [2, 32], strides = [1, 1]} : vector<2x128xf32> to vector<2x32xf32>
    %545 = arith.mulf %542, %522 : vector<2x32xf32>
    %546 = arith.mulf %541, %543 : vector<2x32xf32>
    %547 = arith.addf %545, %546 : vector<2x32xf32>
    %548 = math.tanh %547 : vector<2x32xf32>
    %549 = arith.mulf %544, %548 : vector<2x32xf32>
    %c3_174 = arith.constant 3 : index
    %c0_175 = arith.constant 0 : index
    %c0_176 = arith.constant 0 : index
    %550 = vector.load %arg14[%c3_174, %c0_175, %c0_176] : memref<8x2x32xf32, #tpu.memory_space<vmem>>, vector<1x2x32xf32>
    %551 = vector.shape_cast %550 : vector<1x2x32xf32> to vector<2x32xf32>
    %552 = vector.shape_cast %549 : vector<2x32xf32> to vector<1x2x32xf32>
    tpu.vector_store %arg14[%c3_174, %c0_175, %c0_176], %552 {strides = array<i32>} : memref<8x2x32xf32, #tpu.memory_space<vmem>>, vector<1x2x32xf32>,
    %553 = vector.extract_strided_slice %446 {offsets = [4, 0, 0], sizes = [1, 2, 128], strides = [1, 1, 1]} : vector<8x2x128xf32> to vector<1x2x128xf32>
    %554 = vector.shape_cast %553 : vector<1x2x128xf32> to vector<2x128xf32>
    %cst_177 = arith.constant dense<0.000000e+00> : vector<2x128xf32>
    %555 = tpu.matmul %549, %439, %cst_177 {dimension_numbers = #tpu.dot_dimension_numbers<[1], [0], [0], [1], [0, 0, 1, 1], [], []>} : vector<2x32xf32>, vector<32x128xf32>, vector<2x128xf32> -> vector<2x128xf32>
    %556 = arith.addf %554, %555 : vector<2x128xf32>
    %557 = math.tanh %556 : vector<2x128xf32>
    %cst_178 = arith.constant 0.000000e+00 : f32
    %558 = vector.broadcast %cst_178 : f32 to vector<2x128xf32>
    %559 = arith.subf %558, %556 : vector<2x128xf32>
    %560 = math.exp %559 : vector<2x128xf32>
    %cst_179 = arith.constant 1.000000e+00 : f32
    %561 = vector.broadcast %cst_179 : f32 to vector<2x128xf32>
    %562 = arith.addf %561, %560 : vector<2x128xf32>
    %cst_180 = arith.constant 1.000000e+00 : f32
    %563 = vector.broadcast %cst_180 : f32 to vector<2x128xf32>
    %564 = arith.divf %563, %562 : vector<2x128xf32>
    %565 = arith.select %452, %557, %564 : vector<2x128xi1>, vector<2x128xf32>
    %566 = vector.extract_strided_slice %565 {offsets = [0, 0], sizes = [2, 32], strides = [1, 1]} : vector<2x128xf32> to vector<2x32xf32>
    %567 = vector.extract_strided_slice %565 {offsets = [0, 32], sizes = [2, 32], strides = [1, 1]} : vector<2x128xf32> to vector<2x32xf32>
    %568 = vector.extract_strided_slice %565 {offsets = [0, 64], sizes = [2, 32], strides = [1, 1]} : vector<2x128xf32> to vector<2x32xf32>
    %569 = vector.extract_strided_slice %565 {offsets = [0, 96], sizes = [2, 32], strides = [1, 1]} : vector<2x128xf32> to vector<2x32xf32>
    %570 = arith.mulf %567, %547 : vector<2x32xf32>
    %571 = arith.mulf %566, %568 : vector<2x32xf32>
    %572 = arith.addf %570, %571 : vector<2x32xf32>
    %573 = math.tanh %572 : vector<2x32xf32>
    %574 = arith.mulf %569, %573 : vector<2x32xf32>
    %c4_181 = arith.constant 4 : index
    %c0_182 = arith.constant 0 : index
    %c0_183 = arith.constant 0 : index
    %575 = vector.load %arg14[%c4_181, %c0_182, %c0_183] : memref<8x2x32xf32, #tpu.memory_space<vmem>>, vector<1x2x32xf32>
    %576 = vector.shape_cast %575 : vector<1x2x32xf32> to vector<2x32xf32>
    %577 = vector.shape_cast %574 : vector<2x32xf32> to vector<1x2x32xf32>
    tpu.vector_store %arg14[%c4_181, %c0_182, %c0_183], %577 {strides = array<i32>} : memref<8x2x32xf32, #tpu.memory_space<vmem>>, vector<1x2x32xf32>,
    %578 = vector.extract_strided_slice %446 {offsets = [5, 0, 0], sizes = [1, 2, 128], strides = [1, 1, 1]} : vector<8x2x128xf32> to vector<1x2x128xf32>
    %579 = vector.shape_cast %578 : vector<1x2x128xf32> to vector<2x128xf32>
    %cst_184 = arith.constant dense<0.000000e+00> : vector<2x128xf32>
    %580 = tpu.matmul %574, %439, %cst_184 {dimension_numbers = #tpu.dot_dimension_numbers<[1], [0], [0], [1], [0, 0, 1, 1], [], []>} : vector<2x32xf32>, vector<32x128xf32>, vector<2x128xf32> -> vector<2x128xf32>
    %581 = arith.addf %579, %580 : vector<2x128xf32>
    %582 = math.tanh %581 : vector<2x128xf32>
    %cst_185 = arith.constant 0.000000e+00 : f32
    %583 = vector.broadcast %cst_185 : f32 to vector<2x128xf32>
    %584 = arith.subf %583, %581 : vector<2x128xf32>
    %585 = math.exp %584 : vector<2x128xf32>
    %cst_186 = arith.constant 1.000000e+00 : f32
    %586 = vector.broadcast %cst_186 : f32 to vector<2x128xf32>
    %587 = arith.addf %586, %585 : vector<2x128xf32>
    %cst_187 = arith.constant 1.000000e+00 : f32
    %588 = vector.broadcast %cst_187 : f32 to vector<2x128xf32>
    %589 = arith.divf %588, %587 : vector<2x128xf32>
    %590 = arith.select %452, %582, %589 : vector<2x128xi1>, vector<2x128xf32>
    %591 = vector.extract_strided_slice %590 {offsets = [0, 0], sizes = [2, 32], strides = [1, 1]} : vector<2x128xf32> to vector<2x32xf32>
    %592 = vector.extract_strided_slice %590 {offsets = [0, 32], sizes = [2, 32], strides = [1, 1]} : vector<2x128xf32> to vector<2x32xf32>
    %593 = vector.extract_strided_slice %590 {offsets = [0, 64], sizes = [2, 32], strides = [1, 1]} : vector<2x128xf32> to vector<2x32xf32>
    %594 = vector.extract_strided_slice %590 {offsets = [0, 96], sizes = [2, 32], strides = [1, 1]} : vector<2x128xf32> to vector<2x32xf32>
    %595 = arith.mulf %592, %572 : vector<2x32xf32>
    %596 = arith.mulf %591, %593 : vector<2x32xf32>
    %597 = arith.addf %595, %596 : vector<2x32xf32>
    %598 = math.tanh %597 : vector<2x32xf32>
    %599 = arith.mulf %594, %598 : vector<2x32xf32>
    %c5_188 = arith.constant 5 : index
    %c0_189 = arith.constant 0 : index
    %c0_190 = arith.constant 0 : index
    %600 = vector.load %arg14[%c5_188, %c0_189, %c0_190] : memref<8x2x32xf32, #tpu.memory_space<vmem>>, vector<1x2x32xf32>
    %601 = vector.shape_cast %600 : vector<1x2x32xf32> to vector<2x32xf32>
    %602 = vector.shape_cast %599 : vector<2x32xf32> to vector<1x2x32xf32>
    tpu.vector_store %arg14[%c5_188, %c0_189, %c0_190], %602 {strides = array<i32>} : memref<8x2x32xf32, #tpu.memory_space<vmem>>, vector<1x2x32xf32>,
    %603 = vector.extract_strided_slice %446 {offsets = [6, 0, 0], sizes = [1, 2, 128], strides = [1, 1, 1]} : vector<8x2x128xf32> to vector<1x2x128xf32>
    %604 = vector.shape_cast %603 : vector<1x2x128xf32> to vector<2x128xf32>
    %cst_191 = arith.constant dense<0.000000e+00> : vector<2x128xf32>
    %605 = tpu.matmul %599, %439, %cst_191 {dimension_numbers = #tpu.dot_dimension_numbers<[1], [0], [0], [1], [0, 0, 1, 1], [], []>} : vector<2x32xf32>, vector<32x128xf32>, vector<2x128xf32> -> vector<2x128xf32>
    %606 = arith.addf %604, %605 : vector<2x128xf32>
    %607 = math.tanh %606 : vector<2x128xf32>
    %cst_192 = arith.constant 0.000000e+00 : f32
    %608 = vector.broadcast %cst_192 : f32 to vector<2x128xf32>
    %609 = arith.subf %608, %606 : vector<2x128xf32>
    %610 = math.exp %609 : vector<2x128xf32>
    %cst_193 = arith.constant 1.000000e+00 : f32
    %611 = vector.broadcast %cst_193 : f32 to vector<2x128xf32>
    %612 = arith.addf %611, %610 : vector<2x128xf32>
    %cst_194 = arith.constant 1.000000e+00 : f32
    %613 = vector.broadcast %cst_194 : f32 to vector<2x128xf32>
    %614 = arith.divf %613, %612 : vector<2x128xf32>
    %615 = arith.select %452, %607, %614 : vector<2x128xi1>, vector<2x128xf32>
    %616 = vector.extract_strided_slice %615 {offsets = [0, 0], sizes = [2, 32], strides = [1, 1]} : vector<2x128xf32> to vector<2x32xf32>
    %617 = vector.extract_strided_slice %615 {offsets = [0, 32], sizes = [2, 32], strides = [1, 1]} : vector<2x128xf32> to vector<2x32xf32>
    %618 = vector.extract_strided_slice %615 {offsets = [0, 64], sizes = [2, 32], strides = [1, 1]} : vector<2x128xf32> to vector<2x32xf32>
    %619 = vector.extract_strided_slice %615 {offsets = [0, 96], sizes = [2, 32], strides = [1, 1]} : vector<2x128xf32> to vector<2x32xf32>
    %620 = arith.mulf %617, %597 : vector<2x32xf32>
    %621 = arith.mulf %616, %618 : vector<2x32xf32>
    %622 = arith.addf %620, %621 : vector<2x32xf32>
    %623 = math.tanh %622 : vector<2x32xf32>
    %624 = arith.mulf %619, %623 : vector<2x32xf32>
    %c6_195 = arith.constant 6 : index
    %c0_196 = arith.constant 0 : index
    %c0_197 = arith.constant 0 : index
    %625 = vector.load %arg14[%c6_195, %c0_196, %c0_197] : memref<8x2x32xf32, #tpu.memory_space<vmem>>, vector<1x2x32xf32>
    %626 = vector.shape_cast %625 : vector<1x2x32xf32> to vector<2x32xf32>
    %627 = vector.shape_cast %624 : vector<2x32xf32> to vector<1x2x32xf32>
    tpu.vector_store %arg14[%c6_195, %c0_196, %c0_197], %627 {strides = array<i32>} : memref<8x2x32xf32, #tpu.memory_space<vmem>>, vector<1x2x32xf32>,
    %628 = vector.extract_strided_slice %446 {offsets = [7, 0, 0], sizes = [1, 2, 128], strides = [1, 1, 1]} : vector<8x2x128xf32> to vector<1x2x128xf32>
    %629 = vector.shape_cast %628 : vector<1x2x128xf32> to vector<2x128xf32>
    %cst_198 = arith.constant dense<0.000000e+00> : vector<2x128xf32>
    %630 = tpu.matmul %624, %439, %cst_198 {dimension_numbers = #tpu.dot_dimension_numbers<[1], [0], [0], [1], [0, 0, 1, 1], [], []>} : vector<2x32xf32>, vector<32x128xf32>, vector<2x128xf32> -> vector<2x128xf32>
    %631 = arith.addf %629, %630 : vector<2x128xf32>
    %632 = math.tanh %631 : vector<2x128xf32>
    %cst_199 = arith.constant 0.000000e+00 : f32
    %633 = vector.broadcast %cst_199 : f32 to vector<2x128xf32>
    %634 = arith.subf %633, %631 : vector<2x128xf32>
    %635 = math.exp %634 : vector<2x128xf32>
    %cst_200 = arith.constant 1.000000e+00 : f32
    %636 = vector.broadcast %cst_200 : f32 to vector<2x128xf32>
    %637 = arith.addf %636, %635 : vector<2x128xf32>
    %cst_201 = arith.constant 1.000000e+00 : f32
    %638 = vector.broadcast %cst_201 : f32 to vector<2x128xf32>
    %639 = arith.divf %638, %637 : vector<2x128xf32>
    %640 = arith.select %452, %632, %639 : vector<2x128xi1>, vector<2x128xf32>
    %641 = vector.extract_strided_slice %640 {offsets = [0, 0], sizes = [2, 32], strides = [1, 1]} : vector<2x128xf32> to vector<2x32xf32>
    %642 = vector.extract_strided_slice %640 {offsets = [0, 32], sizes = [2, 32], strides = [1, 1]} : vector<2x128xf32> to vector<2x32xf32>
    %643 = vector.extract_strided_slice %640 {offsets = [0, 64], sizes = [2, 32], strides = [1, 1]} : vector<2x128xf32> to vector<2x32xf32>
    %644 = vector.extract_strided_slice %640 {offsets = [0, 96], sizes = [2, 32], strides = [1, 1]} : vector<2x128xf32> to vector<2x32xf32>
    %645 = arith.mulf %642, %622 : vector<2x32xf32>
    %646 = arith.mulf %641, %643 : vector<2x32xf32>
    %647 = arith.addf %645, %646 : vector<2x32xf32>
    %648 = math.tanh %647 : vector<2x32xf32>
    %649 = arith.mulf %644, %648 : vector<2x32xf32>
    %c7_202 = arith.constant 7 : index
    %c0_203 = arith.constant 0 : index
    %c0_204 = arith.constant 0 : index
    %650 = vector.load %arg14[%c7_202, %c0_203, %c0_204] : memref<8x2x32xf32, #tpu.memory_space<vmem>>, vector<1x2x32xf32>
    %651 = vector.shape_cast %650 : vector<1x2x32xf32> to vector<2x32xf32>
    %652 = vector.shape_cast %649 : vector<2x32xf32> to vector<1x2x32xf32>
    tpu.vector_store %arg14[%c7_202, %c0_203, %c0_204], %652 {strides = array<i32>} : memref<8x2x32xf32, #tpu.memory_space<vmem>>, vector<1x2x32xf32>,
    %c0_205 = arith.constant 0 : index
    %c0_206 = arith.constant 0 : index
    %653 = vector.load %arg6[%c0_205, %c0_206] : memref<32x128xf32, #tpu.memory_space<vmem>>, vector<32x128xf32>
    %c0_207 = arith.constant 0 : index
    %c0_208 = arith.constant 0 : index
    %654 = vector.load %arg7[%c0_207, %c0_208] : memref<32x128xf32, #tpu.memory_space<vmem>>, vector<32x128xf32>
    %c0_209 = arith.constant 0 : index
    %c0_210 = arith.constant 0 : index
    %655 = vector.load %arg8[%c0_209, %c0_210] : memref<1x128xf32, #tpu.memory_space<vmem>>, vector<1x128xf32>
    %c0_211 = arith.constant 0 : index
    %c0_212 = arith.constant 0 : index
    %c0_213 = arith.constant 0 : index
    %656 = vector.load %arg14[%c0_211, %c0_212, %c0_213] : memref<8x2x32xf32, #tpu.memory_space<vmem>>, vector<8x2x32xf32>
    %657 = vector.shape_cast %656 : vector<8x2x32xf32> to vector<16x32xf32>
    %cst_214 = arith.constant dense<0.000000e+00> : vector<16x128xf32>
    %658 = tpu.matmul %657, %653, %cst_214 {dimension_numbers = #tpu.dot_dimension_numbers<[1], [0], [0], [1], [0, 0, 1, 1], [], []>} : vector<16x32xf32>, vector<32x128xf32>, vector<16x128xf32> -> vector<16x128xf32>
    %659 = vector.broadcast %655 : vector<1x128xf32> to vector<16x128xf32>
    %660 = arith.addf %658, %659 : vector<16x128xf32>
    %661 = vector.shape_cast %660 : vector<16x128xf32> to vector<8x2x128xf32>
    %662 = tpu.iota {dimensions = array<i32: 1>} : vector<2x128xi32>
    %c64_i32_215 = arith.constant 64 : i32
    %663 = vector.broadcast %c64_i32_215 : i32 to vector<2x128xi32>
    %664 = arith.cmpi sge, %662, %663 : vector<2x128xi32>
    %c96_i32_216 = arith.constant 96 : i32
    %665 = vector.broadcast %c96_i32_216 : i32 to vector<2x128xi32>
    %666 = arith.cmpi slt, %662, %665 : vector<2x128xi32>
    %667 = arith.andi %664, %666 : vector<2x128xi1>
    %668 = vector.extract_strided_slice %661 {offsets = [0, 0, 0], sizes = [1, 2, 128], strides = [1, 1, 1]} : vector<8x2x128xf32> to vector<1x2x128xf32>
    %669 = vector.shape_cast %668 : vector<1x2x128xf32> to vector<2x128xf32>
    %cst_217 = arith.constant dense<0.000000e+00> : vector<2x128xf32>
    %670 = tpu.matmul %434, %654, %cst_217 {dimension_numbers = #tpu.dot_dimension_numbers<[1], [0], [0], [1], [0, 0, 1, 1], [], []>} : vector<2x32xf32>, vector<32x128xf32>, vector<2x128xf32> -> vector<2x128xf32>
    %671 = arith.addf %669, %670 : vector<2x128xf32>
    %672 = math.tanh %671 : vector<2x128xf32>
    %cst_218 = arith.constant 0.000000e+00 : f32
    %673 = vector.broadcast %cst_218 : f32 to vector<2x128xf32>
    %674 = arith.subf %673, %671 : vector<2x128xf32>
    %675 = math.exp %674 : vector<2x128xf32>
    %cst_219 = arith.constant 1.000000e+00 : f32
    %676 = vector.broadcast %cst_219 : f32 to vector<2x128xf32>
    %677 = arith.addf %676, %675 : vector<2x128xf32>
    %cst_220 = arith.constant 1.000000e+00 : f32
    %678 = vector.broadcast %cst_220 : f32 to vector<2x128xf32>
    %679 = arith.divf %678, %677 : vector<2x128xf32>
    %680 = arith.select %667, %672, %679 : vector<2x128xi1>, vector<2x128xf32>
    %681 = vector.extract_strided_slice %680 {offsets = [0, 0], sizes = [2, 32], strides = [1, 1]} : vector<2x128xf32> to vector<2x32xf32>
    %682 = vector.extract_strided_slice %680 {offsets = [0, 32], sizes = [2, 32], strides = [1, 1]} : vector<2x128xf32> to vector<2x32xf32>
    %683 = vector.extract_strided_slice %680 {offsets = [0, 64], sizes = [2, 32], strides = [1, 1]} : vector<2x128xf32> to vector<2x32xf32>
    %684 = vector.extract_strided_slice %680 {offsets = [0, 96], sizes = [2, 32], strides = [1, 1]} : vector<2x128xf32> to vector<2x32xf32>
    %685 = arith.mulf %682, %432 : vector<2x32xf32>
    %686 = arith.mulf %681, %683 : vector<2x32xf32>
    %687 = arith.addf %685, %686 : vector<2x32xf32>
    %688 = math.tanh %687 : vector<2x32xf32>
    %689 = arith.mulf %684, %688 : vector<2x32xf32>
    %c0_221 = arith.constant 0 : index
    %c0_222 = arith.constant 0 : index
    %c0_223 = arith.constant 0 : index
    %690 = vector.load %arg14[%c0_221, %c0_222, %c0_223] : memref<8x2x32xf32, #tpu.memory_space<vmem>>, vector<1x2x32xf32>
    %691 = vector.shape_cast %690 : vector<1x2x32xf32> to vector<2x32xf32>
    %692 = vector.shape_cast %689 : vector<2x32xf32> to vector<1x2x32xf32>
    tpu.vector_store %arg14[%c0_221, %c0_222, %c0_223], %692 {strides = array<i32>} : memref<8x2x32xf32, #tpu.memory_space<vmem>>, vector<1x2x32xf32>,
    %693 = vector.extract_strided_slice %661 {offsets = [1, 0, 0], sizes = [1, 2, 128], strides = [1, 1, 1]} : vector<8x2x128xf32> to vector<1x2x128xf32>
    %694 = vector.shape_cast %693 : vector<1x2x128xf32> to vector<2x128xf32>
    %cst_224 = arith.constant dense<0.000000e+00> : vector<2x128xf32>
    %695 = tpu.matmul %689, %654, %cst_224 {dimension_numbers = #tpu.dot_dimension_numbers<[1], [0], [0], [1], [0, 0, 1, 1], [], []>} : vector<2x32xf32>, vector<32x128xf32>, vector<2x128xf32> -> vector<2x128xf32>
    %696 = arith.addf %694, %695 : vector<2x128xf32>
    %697 = math.tanh %696 : vector<2x128xf32>
    %cst_225 = arith.constant 0.000000e+00 : f32
    %698 = vector.broadcast %cst_225 : f32 to vector<2x128xf32>
    %699 = arith.subf %698, %696 : vector<2x128xf32>
    %700 = math.exp %699 : vector<2x128xf32>
    %cst_226 = arith.constant 1.000000e+00 : f32
    %701 = vector.broadcast %cst_226 : f32 to vector<2x128xf32>
    %702 = arith.addf %701, %700 : vector<2x128xf32>
    %cst_227 = arith.constant 1.000000e+00 : f32
    %703 = vector.broadcast %cst_227 : f32 to vector<2x128xf32>
    %704 = arith.divf %703, %702 : vector<2x128xf32>
    %705 = arith.select %667, %697, %704 : vector<2x128xi1>, vector<2x128xf32>
    %706 = vector.extract_strided_slice %705 {offsets = [0, 0], sizes = [2, 32], strides = [1, 1]} : vector<2x128xf32> to vector<2x32xf32>
    %707 = vector.extract_strided_slice %705 {offsets = [0, 32], sizes = [2, 32], strides = [1, 1]} : vector<2x128xf32> to vector<2x32xf32>
    %708 = vector.extract_strided_slice %705 {offsets = [0, 64], sizes = [2, 32], strides = [1, 1]} : vector<2x128xf32> to vector<2x32xf32>
    %709 = vector.extract_strided_slice %705 {offsets = [0, 96], sizes = [2, 32], strides = [1, 1]} : vector<2x128xf32> to vector<2x32xf32>
    %710 = arith.mulf %707, %687 : vector<2x32xf32>
    %711 = arith.mulf %706, %708 : vector<2x32xf32>
    %712 = arith.addf %710, %711 : vector<2x32xf32>
    %713 = math.tanh %712 : vector<2x32xf32>
    %714 = arith.mulf %709, %713 : vector<2x32xf32>
    %c1_228 = arith.constant 1 : index
    %c0_229 = arith.constant 0 : index
    %c0_230 = arith.constant 0 : index
    %715 = vector.load %arg14[%c1_228, %c0_229, %c0_230] : memref<8x2x32xf32, #tpu.memory_space<vmem>>, vector<1x2x32xf32>
    %716 = vector.shape_cast %715 : vector<1x2x32xf32> to vector<2x32xf32>
    %717 = vector.shape_cast %714 : vector<2x32xf32> to vector<1x2x32xf32>
    tpu.vector_store %arg14[%c1_228, %c0_229, %c0_230], %717 {strides = array<i32>} : memref<8x2x32xf32, #tpu.memory_space<vmem>>, vector<1x2x32xf32>,
    %718 = vector.extract_strided_slice %661 {offsets = [2, 0, 0], sizes = [1, 2, 128], strides = [1, 1, 1]} : vector<8x2x128xf32> to vector<1x2x128xf32>
    %719 = vector.shape_cast %718 : vector<1x2x128xf32> to vector<2x128xf32>
    %cst_231 = arith.constant dense<0.000000e+00> : vector<2x128xf32>
    %720 = tpu.matmul %714, %654, %cst_231 {dimension_numbers = #tpu.dot_dimension_numbers<[1], [0], [0], [1], [0, 0, 1, 1], [], []>} : vector<2x32xf32>, vector<32x128xf32>, vector<2x128xf32> -> vector<2x128xf32>
    %721 = arith.addf %719, %720 : vector<2x128xf32>
    %722 = math.tanh %721 : vector<2x128xf32>
    %cst_232 = arith.constant 0.000000e+00 : f32
    %723 = vector.broadcast %cst_232 : f32 to vector<2x128xf32>
    %724 = arith.subf %723, %721 : vector<2x128xf32>
    %725 = math.exp %724 : vector<2x128xf32>
    %cst_233 = arith.constant 1.000000e+00 : f32
    %726 = vector.broadcast %cst_233 : f32 to vector<2x128xf32>
    %727 = arith.addf %726, %725 : vector<2x128xf32>
    %cst_234 = arith.constant 1.000000e+00 : f32
    %728 = vector.broadcast %cst_234 : f32 to vector<2x128xf32>
    %729 = arith.divf %728, %727 : vector<2x128xf32>
    %730 = arith.select %667, %722, %729 : vector<2x128xi1>, vector<2x128xf32>
    %731 = vector.extract_strided_slice %730 {offsets = [0, 0], sizes = [2, 32], strides = [1, 1]} : vector<2x128xf32> to vector<2x32xf32>
    %732 = vector.extract_strided_slice %730 {offsets = [0, 32], sizes = [2, 32], strides = [1, 1]} : vector<2x128xf32> to vector<2x32xf32>
    %733 = vector.extract_strided_slice %730 {offsets = [0, 64], sizes = [2, 32], strides = [1, 1]} : vector<2x128xf32> to vector<2x32xf32>
    %734 = vector.extract_strided_slice %730 {offsets = [0, 96], sizes = [2, 32], strides = [1, 1]} : vector<2x128xf32> to vector<2x32xf32>
    %735 = arith.mulf %732, %712 : vector<2x32xf32>
    %736 = arith.mulf %731, %733 : vector<2x32xf32>
    %737 = arith.addf %735, %736 : vector<2x32xf32>
    %738 = math.tanh %737 : vector<2x32xf32>
    %739 = arith.mulf %734, %738 : vector<2x32xf32>
    %c2_235 = arith.constant 2 : index
    %c0_236 = arith.constant 0 : index
    %c0_237 = arith.constant 0 : index
    %740 = vector.load %arg14[%c2_235, %c0_236, %c0_237] : memref<8x2x32xf32, #tpu.memory_space<vmem>>, vector<1x2x32xf32>
    %741 = vector.shape_cast %740 : vector<1x2x32xf32> to vector<2x32xf32>
    %742 = vector.shape_cast %739 : vector<2x32xf32> to vector<1x2x32xf32>
    tpu.vector_store %arg14[%c2_235, %c0_236, %c0_237], %742 {strides = array<i32>} : memref<8x2x32xf32, #tpu.memory_space<vmem>>, vector<1x2x32xf32>,
    %743 = vector.extract_strided_slice %661 {offsets = [3, 0, 0], sizes = [1, 2, 128], strides = [1, 1, 1]} : vector<8x2x128xf32> to vector<1x2x128xf32>
    %744 = vector.shape_cast %743 : vector<1x2x128xf32> to vector<2x128xf32>
    %cst_238 = arith.constant dense<0.000000e+00> : vector<2x128xf32>
    %745 = tpu.matmul %739, %654, %cst_238 {dimension_numbers = #tpu.dot_dimension_numbers<[1], [0], [0], [1], [0, 0, 1, 1], [], []>} : vector<2x32xf32>, vector<32x128xf32>, vector<2x128xf32> -> vector<2x128xf32>
    %746 = arith.addf %744, %745 : vector<2x128xf32>
    %747 = math.tanh %746 : vector<2x128xf32>
    %cst_239 = arith.constant 0.000000e+00 : f32
    %748 = vector.broadcast %cst_239 : f32 to vector<2x128xf32>
    %749 = arith.subf %748, %746 : vector<2x128xf32>
    %750 = math.exp %749 : vector<2x128xf32>
    %cst_240 = arith.constant 1.000000e+00 : f32
    %751 = vector.broadcast %cst_240 : f32 to vector<2x128xf32>
    %752 = arith.addf %751, %750 : vector<2x128xf32>
    %cst_241 = arith.constant 1.000000e+00 : f32
    %753 = vector.broadcast %cst_241 : f32 to vector<2x128xf32>
    %754 = arith.divf %753, %752 : vector<2x128xf32>
    %755 = arith.select %667, %747, %754 : vector<2x128xi1>, vector<2x128xf32>
    %756 = vector.extract_strided_slice %755 {offsets = [0, 0], sizes = [2, 32], strides = [1, 1]} : vector<2x128xf32> to vector<2x32xf32>
    %757 = vector.extract_strided_slice %755 {offsets = [0, 32], sizes = [2, 32], strides = [1, 1]} : vector<2x128xf32> to vector<2x32xf32>
    %758 = vector.extract_strided_slice %755 {offsets = [0, 64], sizes = [2, 32], strides = [1, 1]} : vector<2x128xf32> to vector<2x32xf32>
    %759 = vector.extract_strided_slice %755 {offsets = [0, 96], sizes = [2, 32], strides = [1, 1]} : vector<2x128xf32> to vector<2x32xf32>
    %760 = arith.mulf %757, %737 : vector<2x32xf32>
    %761 = arith.mulf %756, %758 : vector<2x32xf32>
    %762 = arith.addf %760, %761 : vector<2x32xf32>
    %763 = math.tanh %762 : vector<2x32xf32>
    %764 = arith.mulf %759, %763 : vector<2x32xf32>
    %c3_242 = arith.constant 3 : index
    %c0_243 = arith.constant 0 : index
    %c0_244 = arith.constant 0 : index
    %765 = vector.load %arg14[%c3_242, %c0_243, %c0_244] : memref<8x2x32xf32, #tpu.memory_space<vmem>>, vector<1x2x32xf32>
    %766 = vector.shape_cast %765 : vector<1x2x32xf32> to vector<2x32xf32>
    %767 = vector.shape_cast %764 : vector<2x32xf32> to vector<1x2x32xf32>
    tpu.vector_store %arg14[%c3_242, %c0_243, %c0_244], %767 {strides = array<i32>} : memref<8x2x32xf32, #tpu.memory_space<vmem>>, vector<1x2x32xf32>,
    %768 = vector.extract_strided_slice %661 {offsets = [4, 0, 0], sizes = [1, 2, 128], strides = [1, 1, 1]} : vector<8x2x128xf32> to vector<1x2x128xf32>
    %769 = vector.shape_cast %768 : vector<1x2x128xf32> to vector<2x128xf32>
    %cst_245 = arith.constant dense<0.000000e+00> : vector<2x128xf32>
    %770 = tpu.matmul %764, %654, %cst_245 {dimension_numbers = #tpu.dot_dimension_numbers<[1], [0], [0], [1], [0, 0, 1, 1], [], []>} : vector<2x32xf32>, vector<32x128xf32>, vector<2x128xf32> -> vector<2x128xf32>
    %771 = arith.addf %769, %770 : vector<2x128xf32>
    %772 = math.tanh %771 : vector<2x128xf32>
    %cst_246 = arith.constant 0.000000e+00 : f32
    %773 = vector.broadcast %cst_246 : f32 to vector<2x128xf32>
    %774 = arith.subf %773, %771 : vector<2x128xf32>
    %775 = math.exp %774 : vector<2x128xf32>
    %cst_247 = arith.constant 1.000000e+00 : f32
    %776 = vector.broadcast %cst_247 : f32 to vector<2x128xf32>
    %777 = arith.addf %776, %775 : vector<2x128xf32>
    %cst_248 = arith.constant 1.000000e+00 : f32
    %778 = vector.broadcast %cst_248 : f32 to vector<2x128xf32>
    %779 = arith.divf %778, %777 : vector<2x128xf32>
    %780 = arith.select %667, %772, %779 : vector<2x128xi1>, vector<2x128xf32>
    %781 = vector.extract_strided_slice %780 {offsets = [0, 0], sizes = [2, 32], strides = [1, 1]} : vector<2x128xf32> to vector<2x32xf32>
    %782 = vector.extract_strided_slice %780 {offsets = [0, 32], sizes = [2, 32], strides = [1, 1]} : vector<2x128xf32> to vector<2x32xf32>
    %783 = vector.extract_strided_slice %780 {offsets = [0, 64], sizes = [2, 32], strides = [1, 1]} : vector<2x128xf32> to vector<2x32xf32>
    %784 = vector.extract_strided_slice %780 {offsets = [0, 96], sizes = [2, 32], strides = [1, 1]} : vector<2x128xf32> to vector<2x32xf32>
    %785 = arith.mulf %782, %762 : vector<2x32xf32>
    %786 = arith.mulf %781, %783 : vector<2x32xf32>
    %787 = arith.addf %785, %786 : vector<2x32xf32>
    %788 = math.tanh %787 : vector<2x32xf32>
    %789 = arith.mulf %784, %788 : vector<2x32xf32>
    %c4_249 = arith.constant 4 : index
    %c0_250 = arith.constant 0 : index
    %c0_251 = arith.constant 0 : index
    %790 = vector.load %arg14[%c4_249, %c0_250, %c0_251] : memref<8x2x32xf32, #tpu.memory_space<vmem>>, vector<1x2x32xf32>
    %791 = vector.shape_cast %790 : vector<1x2x32xf32> to vector<2x32xf32>
    %792 = vector.shape_cast %789 : vector<2x32xf32> to vector<1x2x32xf32>
    tpu.vector_store %arg14[%c4_249, %c0_250, %c0_251], %792 {strides = array<i32>} : memref<8x2x32xf32, #tpu.memory_space<vmem>>, vector<1x2x32xf32>,
    %793 = vector.extract_strided_slice %661 {offsets = [5, 0, 0], sizes = [1, 2, 128], strides = [1, 1, 1]} : vector<8x2x128xf32> to vector<1x2x128xf32>
    %794 = vector.shape_cast %793 : vector<1x2x128xf32> to vector<2x128xf32>
    %cst_252 = arith.constant dense<0.000000e+00> : vector<2x128xf32>
    %795 = tpu.matmul %789, %654, %cst_252 {dimension_numbers = #tpu.dot_dimension_numbers<[1], [0], [0], [1], [0, 0, 1, 1], [], []>} : vector<2x32xf32>, vector<32x128xf32>, vector<2x128xf32> -> vector<2x128xf32>
    %796 = arith.addf %794, %795 : vector<2x128xf32>
    %797 = math.tanh %796 : vector<2x128xf32>
    %cst_253 = arith.constant 0.000000e+00 : f32
    %798 = vector.broadcast %cst_253 : f32 to vector<2x128xf32>
    %799 = arith.subf %798, %796 : vector<2x128xf32>
    %800 = math.exp %799 : vector<2x128xf32>
    %cst_254 = arith.constant 1.000000e+00 : f32
    %801 = vector.broadcast %cst_254 : f32 to vector<2x128xf32>
    %802 = arith.addf %801, %800 : vector<2x128xf32>
    %cst_255 = arith.constant 1.000000e+00 : f32
    %803 = vector.broadcast %cst_255 : f32 to vector<2x128xf32>
    %804 = arith.divf %803, %802 : vector<2x128xf32>
    %805 = arith.select %667, %797, %804 : vector<2x128xi1>, vector<2x128xf32>
    %806 = vector.extract_strided_slice %805 {offsets = [0, 0], sizes = [2, 32], strides = [1, 1]} : vector<2x128xf32> to vector<2x32xf32>
    %807 = vector.extract_strided_slice %805 {offsets = [0, 32], sizes = [2, 32], strides = [1, 1]} : vector<2x128xf32> to vector<2x32xf32>
    %808 = vector.extract_strided_slice %805 {offsets = [0, 64], sizes = [2, 32], strides = [1, 1]} : vector<2x128xf32> to vector<2x32xf32>
    %809 = vector.extract_strided_slice %805 {offsets = [0, 96], sizes = [2, 32], strides = [1, 1]} : vector<2x128xf32> to vector<2x32xf32>
    %810 = arith.mulf %807, %787 : vector<2x32xf32>
    %811 = arith.mulf %806, %808 : vector<2x32xf32>
    %812 = arith.addf %810, %811 : vector<2x32xf32>
    %813 = math.tanh %812 : vector<2x32xf32>
    %814 = arith.mulf %809, %813 : vector<2x32xf32>
    %c5_256 = arith.constant 5 : index
    %c0_257 = arith.constant 0 : index
    %c0_258 = arith.constant 0 : index
    %815 = vector.load %arg14[%c5_256, %c0_257, %c0_258] : memref<8x2x32xf32, #tpu.memory_space<vmem>>, vector<1x2x32xf32>
    %816 = vector.shape_cast %815 : vector<1x2x32xf32> to vector<2x32xf32>
    %817 = vector.shape_cast %814 : vector<2x32xf32> to vector<1x2x32xf32>
    tpu.vector_store %arg14[%c5_256, %c0_257, %c0_258], %817 {strides = array<i32>} : memref<8x2x32xf32, #tpu.memory_space<vmem>>, vector<1x2x32xf32>,
    %818 = vector.extract_strided_slice %661 {offsets = [6, 0, 0], sizes = [1, 2, 128], strides = [1, 1, 1]} : vector<8x2x128xf32> to vector<1x2x128xf32>
    %819 = vector.shape_cast %818 : vector<1x2x128xf32> to vector<2x128xf32>
    %cst_259 = arith.constant dense<0.000000e+00> : vector<2x128xf32>
    %820 = tpu.matmul %814, %654, %cst_259 {dimension_numbers = #tpu.dot_dimension_numbers<[1], [0], [0], [1], [0, 0, 1, 1], [], []>} : vector<2x32xf32>, vector<32x128xf32>, vector<2x128xf32> -> vector<2x128xf32>
    %821 = arith.addf %819, %820 : vector<2x128xf32>
    %822 = math.tanh %821 : vector<2x128xf32>
    %cst_260 = arith.constant 0.000000e+00 : f32
    %823 = vector.broadcast %cst_260 : f32 to vector<2x128xf32>
    %824 = arith.subf %823, %821 : vector<2x128xf32>
    %825 = math.exp %824 : vector<2x128xf32>
    %cst_261 = arith.constant 1.000000e+00 : f32
    %826 = vector.broadcast %cst_261 : f32 to vector<2x128xf32>
    %827 = arith.addf %826, %825 : vector<2x128xf32>
    %cst_262 = arith.constant 1.000000e+00 : f32
    %828 = vector.broadcast %cst_262 : f32 to vector<2x128xf32>
    %829 = arith.divf %828, %827 : vector<2x128xf32>
    %830 = arith.select %667, %822, %829 : vector<2x128xi1>, vector<2x128xf32>
    %831 = vector.extract_strided_slice %830 {offsets = [0, 0], sizes = [2, 32], strides = [1, 1]} : vector<2x128xf32> to vector<2x32xf32>
    %832 = vector.extract_strided_slice %830 {offsets = [0, 32], sizes = [2, 32], strides = [1, 1]} : vector<2x128xf32> to vector<2x32xf32>
    %833 = vector.extract_strided_slice %830 {offsets = [0, 64], sizes = [2, 32], strides = [1, 1]} : vector<2x128xf32> to vector<2x32xf32>
    %834 = vector.extract_strided_slice %830 {offsets = [0, 96], sizes = [2, 32], strides = [1, 1]} : vector<2x128xf32> to vector<2x32xf32>
    %835 = arith.mulf %832, %812 : vector<2x32xf32>
    %836 = arith.mulf %831, %833 : vector<2x32xf32>
    %837 = arith.addf %835, %836 : vector<2x32xf32>
    %838 = math.tanh %837 : vector<2x32xf32>
    %839 = arith.mulf %834, %838 : vector<2x32xf32>
    %c6_263 = arith.constant 6 : index
    %c0_264 = arith.constant 0 : index
    %c0_265 = arith.constant 0 : index
    %840 = vector.load %arg14[%c6_263, %c0_264, %c0_265] : memref<8x2x32xf32, #tpu.memory_space<vmem>>, vector<1x2x32xf32>
    %841 = vector.shape_cast %840 : vector<1x2x32xf32> to vector<2x32xf32>
    %842 = vector.shape_cast %839 : vector<2x32xf32> to vector<1x2x32xf32>
    tpu.vector_store %arg14[%c6_263, %c0_264, %c0_265], %842 {strides = array<i32>} : memref<8x2x32xf32, #tpu.memory_space<vmem>>, vector<1x2x32xf32>,
    %843 = vector.extract_strided_slice %661 {offsets = [7, 0, 0], sizes = [1, 2, 128], strides = [1, 1, 1]} : vector<8x2x128xf32> to vector<1x2x128xf32>
    %844 = vector.shape_cast %843 : vector<1x2x128xf32> to vector<2x128xf32>
    %cst_266 = arith.constant dense<0.000000e+00> : vector<2x128xf32>
    %845 = tpu.matmul %839, %654, %cst_266 {dimension_numbers = #tpu.dot_dimension_numbers<[1], [0], [0], [1], [0, 0, 1, 1], [], []>} : vector<2x32xf32>, vector<32x128xf32>, vector<2x128xf32> -> vector<2x128xf32>
    %846 = arith.addf %844, %845 : vector<2x128xf32>
    %847 = math.tanh %846 : vector<2x128xf32>
    %cst_267 = arith.constant 0.000000e+00 : f32
    %848 = vector.broadcast %cst_267 : f32 to vector<2x128xf32>
    %849 = arith.subf %848, %846 : vector<2x128xf32>
    %850 = math.exp %849 : vector<2x128xf32>
    %cst_268 = arith.constant 1.000000e+00 : f32
    %851 = vector.broadcast %cst_268 : f32 to vector<2x128xf32>
    %852 = arith.addf %851, %850 : vector<2x128xf32>
    %cst_269 = arith.constant 1.000000e+00 : f32
    %853 = vector.broadcast %cst_269 : f32 to vector<2x128xf32>
    %854 = arith.divf %853, %852 : vector<2x128xf32>
    %855 = arith.select %667, %847, %854 : vector<2x128xi1>, vector<2x128xf32>
    %856 = vector.extract_strided_slice %855 {offsets = [0, 0], sizes = [2, 32], strides = [1, 1]} : vector<2x128xf32> to vector<2x32xf32>
    %857 = vector.extract_strided_slice %855 {offsets = [0, 32], sizes = [2, 32], strides = [1, 1]} : vector<2x128xf32> to vector<2x32xf32>
    %858 = vector.extract_strided_slice %855 {offsets = [0, 64], sizes = [2, 32], strides = [1, 1]} : vector<2x128xf32> to vector<2x32xf32>
    %859 = vector.extract_strided_slice %855 {offsets = [0, 96], sizes = [2, 32], strides = [1, 1]} : vector<2x128xf32> to vector<2x32xf32>
    %860 = arith.mulf %857, %837 : vector<2x32xf32>
    %861 = arith.mulf %856, %858 : vector<2x32xf32>
    %862 = arith.addf %860, %861 : vector<2x32xf32>
    %863 = math.tanh %862 : vector<2x32xf32>
    %864 = arith.mulf %859, %863 : vector<2x32xf32>
    %c7_270 = arith.constant 7 : index
    %c0_271 = arith.constant 0 : index
    %c0_272 = arith.constant 0 : index
    %865 = vector.load %arg14[%c7_270, %c0_271, %c0_272] : memref<8x2x32xf32, #tpu.memory_space<vmem>>, vector<1x2x32xf32>
    %866 = vector.shape_cast %865 : vector<1x2x32xf32> to vector<2x32xf32>
    %867 = vector.shape_cast %864 : vector<2x32xf32> to vector<1x2x32xf32>
    tpu.vector_store %arg14[%c7_270, %c0_271, %c0_272], %867 {strides = array<i32>} : memref<8x2x32xf32, #tpu.memory_space<vmem>>, vector<1x2x32xf32>,
    %c0_273 = arith.constant 0 : index
    %c0_274 = arith.constant 0 : index
    %c0_275 = arith.constant 0 : index
    %868 = vector.load %arg14[%c0_273, %c0_274, %c0_275] : memref<8x2x32xf32, #tpu.memory_space<vmem>>, vector<8x2x32xf32>
    %869 = vector.shape_cast %868 : vector<8x2x32xf32> to vector<16x32xf32>
    %cst_276 = arith.constant 0.000000e+00 : f32
    %870 = vector.broadcast %cst_276 : f32 to vector<16x32xf32>
    %871 = arith.maximumf %869, %870 : vector<16x32xf32>
    %c0_277 = arith.constant 0 : index
    %c0_278 = arith.constant 0 : index
    %872 = vector.load %arg9[%c0_277, %c0_278] : memref<32x4xf32, #tpu.memory_space<vmem>>, vector<32x4xf32>
    %cst_279 = arith.constant dense<0.000000e+00> : vector<16x4xf32>
    %873 = tpu.matmul %871, %872, %cst_279 {dimension_numbers = #tpu.dot_dimension_numbers<[1], [0], [0], [1], [0, 0, 1, 1], [], []>} : vector<16x32xf32>, vector<32x4xf32>, vector<16x4xf32> -> vector<16x4xf32>
    %c0_280 = arith.constant 0 : index
    %c0_281 = arith.constant 0 : index
    %874 = vector.load %arg10[%c0_280, %c0_281] : memref<1x4xf32, #tpu.memory_space<vmem>>, vector<1x4xf32>
    %875 = vector.broadcast %874 : vector<1x4xf32> to vector<16x4xf32>
    %876 = arith.addf %873, %875 : vector<16x4xf32>
    %877 = vector.shape_cast %876 : vector<16x4xf32> to vector<8x2x4xf32>
    %878 = vector.extract_strided_slice %877 {offsets = [0, 0, 0], sizes = [8, 1, 4], strides = [1, 1, 1]} : vector<8x2x4xf32> to vector<8x1x4xf32>
    %879 = vector.shape_cast %878 : vector<8x1x4xf32> to vector<8x4xf32>
    %c0_282 = arith.constant 0 : index
    %c0_283 = arith.constant 0 : index
    %c0_284 = arith.constant 0 : index
    %880 = vector.load %arg11[%c0_282, %c0_283, %c0_284] : memref<2x8x4xf32, #tpu.memory_space<vmem>>, vector<1x8x4xf32>
    %881 = vector.shape_cast %880 : vector<1x8x4xf32> to vector<8x4xf32>
    %882 = vector.shape_cast %879 : vector<8x4xf32> to vector<1x8x4xf32>
    tpu.vector_store %arg11[%c0_282, %c0_283, %c0_284], %882 {strides = array<i32>} : memref<2x8x4xf32, #tpu.memory_space<vmem>>, vector<1x8x4xf32>,
    %883 = vector.extract_strided_slice %877 {offsets = [0, 1, 0], sizes = [8, 1, 4], strides = [1, 1, 1]} : vector<8x2x4xf32> to vector<8x1x4xf32>
    %884 = vector.shape_cast %883 : vector<8x1x4xf32> to vector<8x4xf32>
    %c1_285 = arith.constant 1 : index
    %c0_286 = arith.constant 0 : index
    %c0_287 = arith.constant 0 : index
    %885 = vector.load %arg11[%c1_285, %c0_286, %c0_287] : memref<2x8x4xf32, #tpu.memory_space<vmem>>, vector<1x8x4xf32>
    %886 = vector.shape_cast %885 : vector<1x8x4xf32> to vector<8x4xf32>
    %887 = vector.shape_cast %884 : vector<8x4xf32> to vector<1x8x4xf32>
    tpu.vector_store %arg11[%c1_285, %c0_286, %c0_287], %887 {strides = array<i32>} : memref<2x8x4xf32, #tpu.memory_space<vmem>>, vector<1x8x4xf32>,
    %c0_288 = arith.constant 0 : index
    %c0_289 = arith.constant 0 : index
    %c0_290 = arith.constant 0 : index
    %888 = vector.load %arg12[%c0_288, %c0_289, %c0_290] : memref<2x2x32xf32, #tpu.memory_space<vmem>>, vector<1x2x32xf32>
    %889 = vector.shape_cast %888 : vector<1x2x32xf32> to vector<2x32xf32>
    %890 = vector.shape_cast %649 : vector<2x32xf32> to vector<1x2x32xf32>
    tpu.vector_store %arg12[%c0_288, %c0_289, %c0_290], %890 {strides = array<i32>} : memref<2x2x32xf32, #tpu.memory_space<vmem>>, vector<1x2x32xf32>,
    %c0_291 = arith.constant 0 : index
    %c0_292 = arith.constant 0 : index
    %c0_293 = arith.constant 0 : index
    %891 = vector.load %arg13[%c0_291, %c0_292, %c0_293] : memref<2x2x32xf32, #tpu.memory_space<vmem>>, vector<1x2x32xf32>
    %892 = vector.shape_cast %891 : vector<1x2x32xf32> to vector<2x32xf32>
    %893 = vector.shape_cast %647 : vector<2x32xf32> to vector<1x2x32xf32>
    tpu.vector_store %arg13[%c0_291, %c0_292, %c0_293], %893 {strides = array<i32>} : memref<2x2x32xf32, #tpu.memory_space<vmem>>, vector<1x2x32xf32>,
    %c1_294 = arith.constant 1 : index
    %c0_295 = arith.constant 0 : index
    %c0_296 = arith.constant 0 : index
    %894 = vector.load %arg12[%c1_294, %c0_295, %c0_296] : memref<2x2x32xf32, #tpu.memory_space<vmem>>, vector<1x2x32xf32>
    %895 = vector.shape_cast %894 : vector<1x2x32xf32> to vector<2x32xf32>
    %896 = vector.shape_cast %864 : vector<2x32xf32> to vector<1x2x32xf32>
    tpu.vector_store %arg12[%c1_294, %c0_295, %c0_296], %896 {strides = array<i32>} : memref<2x2x32xf32, #tpu.memory_space<vmem>>, vector<1x2x32xf32>,
    %c1_297 = arith.constant 1 : index
    %c0_298 = arith.constant 0 : index
    %c0_299 = arith.constant 0 : index
    %897 = vector.load %arg13[%c1_297, %c0_298, %c0_299] : memref<2x2x32xf32, #tpu.memory_space<vmem>>, vector<1x2x32xf32>
    %898 = vector.shape_cast %897 : vector<1x2x32xf32> to vector<2x32xf32>
    %899 = vector.shape_cast %862 : vector<2x32xf32> to vector<1x2x32xf32>
    tpu.vector_store %arg13[%c1_297, %c0_298, %c0_299], %899 {strides = array<i32>} : memref<2x2x32xf32, #tpu.memory_space<vmem>>, vector<1x2x32xf32>,
    return
  }
}

</mosaic_0001>

<llo_original>
// kernel: tpu_custom_call.1
$region0: #{tpu_custom_call.1}
  #allocation0 [shape = 'u32[]', space=smem, size = 0x4, offset = 0x4, fixed_abs, tag = 'smem constant byte address 0x4 - core index']
  #allocation1 [shape = 'u32[72,128]{1,0:T(1,128)}', space=vmem, size = 0x9000, scoped, tag = 'internal scratch']
  #allocation2 [shape = 'f32[8,2,32]{2,1,0:T(2,128)}', space=vmem, size = 0x2000, scoped, tag = 'scratch operand']
  %s0 = inlined_call_operand.hbm [shape: f32[2,8,32], index: 0, kind: input, shape index: {}]
  %s1 = inlined_call_operand.vmem [shape: f32[2,2,32], index: 1, kind: input, shape index: {}]
  %s2 = inlined_call_operand.hbm [shape: f32[2,2,32], index: 2, kind: input, shape index: {}]
  %s3 = inlined_call_operand.vmem [shape: f32[32,128], index: 3, kind: input, shape index: {}]
  %s4 = inlined_call_operand.hbm [shape: f32[32,128], index: 4, kind: input, shape index: {}]
  %s5 = inlined_call_operand.vmem [shape: f32[1,128], index: 5, kind: input, shape index: {}]
  %s6 = inlined_call_operand.hbm [shape: f32[32,128], index: 6, kind: input, shape index: {}]
  %s7 = inlined_call_operand.hbm [shape: f32[32,128], index: 7, kind: input, shape index: {}]
  %s8 = inlined_call_operand.vmem [shape: f32[1,128], index: 8, kind: input, shape index: {}]
  %s9 = inlined_call_operand.vmem [shape: f32[32,4], index: 9, kind: input, shape index: {}]
  %s10 = inlined_call_operand.vmem [shape: f32[1,4], index: 10, kind: input, shape index: {}]
  %s11 = inlined_call_operand.vmem [shape: f32[2,8,4], index: 11, kind: output, shape index: {0}]
  %s12 = inlined_call_operand.hbm [shape: f32[2,2,32], index: 12, kind: output, shape index: {1}]
  %s13 = inlined_call_operand.hbm [shape: f32[2,2,32], index: 13, kind: output, shape index: {2}]
  %14 = xla_tuple %s11, %s12, %s13
  %s15 = sld [smem:[#allocation0]]
  $region90: #{tpu_custom_call.1} parent=0
    _
  %s17 = ssub.s32 1, %s15
  %s18 = scalar_select 0, %s17, %s15
  $region1: #{tpu_custom_call.1} parent=0
    #allocation3 [shape = 'u8[8192]{0}', space=vmem, size = 0x2000, scoped, tag = 'input window, operand 0, single buffered']
    #allocation4 [shape = 's32[1]{0}', space=sflag, size = 0x4, scoped, tag = 'scoped memory for tpu_custom_call.1']
    #allocation5 [shape = 's32[1]{0}', space=sflag, size = 0x4, scoped, tag = 'scoped memory for tpu_custom_call.1']
    #allocation6 [shape = 'u8[2048]{0}', space=vmem, size = 0x800, scoped, tag = 'input window, operand 2, single buffered']
    #allocation7 [shape = 's32[1]{0}', space=sflag, size = 0x4, scoped, tag = 'scoped memory for tpu_custom_call.1']
    #allocation8 [shape = 'u8[16384]{0}', space=vmem, size = 0x4000, scoped, tag = 'input window, operand 4, single buffered']
    #allocation9 [shape = 'u8[16384]{0}', space=vmem, size = 0x4000, scoped, tag = 'input window, operand 6, single buffered']
    #allocation10 [shape = 's32[1]{0}', space=sflag, size = 0x4, scoped, tag = 'scoped memory for tpu_custom_call.1']
    #allocation11 [shape = 'u8[16384]{0}', space=vmem, size = 0x4000, scoped, tag = 'input window, operand 7, single buffered']
    #allocation12 [shape = 'u8[2048]{0}', space=vmem, size = 0x800, scoped, tag = 'output window, operand 1, single buffered']
    #allocation13 [shape = 'u8[2048]{0}', space=vmem, size = 0x800, scoped, tag = 'output window, operand 2, single buffered']
    #allocation14 [shape = 's32[1]{0}', space=sflag, size = 0x4, scoped, tag = 'scoped memory for tpu_custom_call.1']
    %19 = vsyncpa [#allocation4], 0
    %20 = vsyncpa [#allocation7], 0
    %21 = vsyncpa [#allocation10], 0
    %22 = vsyncpa [#allocation5], 0
    %23 = vsyncpa [#allocation14], 0
    // Predicated region
    $region2: #{tpu_custom_call.1} parent=1 // pred_check
      _
    $region3: #{tpu_custom_call.1} parent=1 // pred_check_branch
      %25 = sbr.rel (0) target = $region5
    $region4: #{tpu_custom_call.1} parent=1 // pred_region
      %27 = vsyncadd [#allocation4], 0
      %s28 = sshll.u32 %s0, 4
      %s29 = int_to_ptr.hbm [resolvable:$true] %s28
      %s30 = sshll.u32 [#allocation3], 4
      %s31 = int_to_ptr.vmem [resolvable:$true] %s30
      %36 = dma.hbm_to_vmem [thread:$0]  %s29, 256, %s31, [#allocation4], 128, 128, 8
    $region5: #{tpu_custom_call.1} parent=1 // pred_fallthru
      _
    // Predicated region
    $region6: #{tpu_custom_call.1} parent=1 // pred_check
      _
    $region7: #{tpu_custom_call.1} parent=1 // pred_check_branch
      %38 = sbr.rel (0) target = $region9
    $region8: #{tpu_custom_call.1} parent=1 // pred_region
      _
    $region9: #{tpu_custom_call.1} parent=1 // pred_fallthru
      _
    // Predicated region
    $region10: #{tpu_custom_call.1} parent=1 // pred_check
      _
    $region11: #{tpu_custom_call.1} parent=1 // pred_check_branch
      %40 = sbr.rel (0) target = $region13
    $region12: #{tpu_custom_call.1} parent=1 // pred_region
      %42 = vsyncadd [#allocation7], 0
      %s43 = sshll.u32 %s2, 4
      %s44 = int_to_ptr.hbm [resolvable:$true] %s43
      %s45 = sshll.u32 [#allocation6], 4
      %s46 = int_to_ptr.vmem [resolvable:$true] %s45
      %51 = dma.hbm_to_vmem [thread:$0]  %s44, 64, %s46, [#allocation7], 32, 32, 2
    $region13: #{tpu_custom_call.1} parent=1 // pred_fallthru
      _
    // Predicated region
    $region14: #{tpu_custom_call.1} parent=1 // pred_check
      _
    $region15: #{tpu_custom_call.1} parent=1 // pred_check_branch
      %53 = sbr.rel (0) target = $region17
    $region16: #{tpu_custom_call.1} parent=1 // pred_region
      _
    $region17: #{tpu_custom_call.1} parent=1 // pred_fallthru
      _
    // Predicated region
    $region18: #{tpu_custom_call.1} parent=1 // pred_check
      _
    $region19: #{tpu_custom_call.1} parent=1 // pred_check_branch
      %55 = sbr.rel (0) target = $region21
    $region20: #{tpu_custom_call.1} parent=1 // pred_region
      %57 = vsyncadd [#allocation7], 0
      %s58 = sshll.u32 %s4, 4
      %s59 = int_to_ptr.hbm [resolvable:$true] %s58
      %s60 = sshll.u32 [#allocation8], 4
      %s61 = int_to_ptr.vmem [resolvable:$true] %s60
      %66 = dma.hbm_to_vmem [thread:$0]  %s59, 512, %s61, [#allocation7], 128, 128, 8
    $region21: #{tpu_custom_call.1} parent=1 // pred_fallthru
      _
    // Predicated region
    $region22: #{tpu_custom_call.1} parent=1 // pred_check
      _
    $region23: #{tpu_custom_call.1} parent=1 // pred_check_branch
      %68 = sbr.rel (0) target = $region25
    $region24: #{tpu_custom_call.1} parent=1 // pred_region
      _
    $region25: #{tpu_custom_call.1} parent=1 // pred_fallthru
      _
    // Predicated region
    $region26: #{tpu_custom_call.1} parent=1 // pred_check
      _
    $region27: #{tpu_custom_call.1} parent=1 // pred_check_branch
      %70 = sbr.rel (0) target = $region29
    $region28: #{tpu_custom_call.1} parent=1 // pred_region
      %72 = vsyncadd [#allocation10], 0
      %s73 = sshll.u32 %s6, 4
      %s74 = int_to_ptr.hbm [resolvable:$true] %s73
      %s75 = sshll.u32 [#allocation9], 4
      %s76 = int_to_ptr.vmem [resolvable:$true] %s75
      %81 = dma.hbm_to_vmem [thread:$0]  %s74, 512, %s76, [#allocation10], 128, 128, 8
    $region29: #{tpu_custom_call.1} parent=1 // pred_fallthru
      _
    // Predicated region
    $region30: #{tpu_custom_call.1} parent=1 // pred_check
      _
    $region31: #{tpu_custom_call.1} parent=1 // pred_check_branch
      %83 = sbr.rel (0) target = $region33
    $region32: #{tpu_custom_call.1} parent=1 // pred_region
      %85 = vsyncadd [#allocation10], 0
      %s86 = sshll.u32 %s7, 4
      %s87 = int_to_ptr.hbm [resolvable:$true] %s86
      %s88 = sshll.u32 [#allocation11], 4
      %s89 = int_to_ptr.vmem [resolvable:$true] %s88
      %94 = dma.hbm_to_vmem [thread:$0]  %s87, 512, %s89, [#allocation10], 128, 128, 8
    $region33: #{tpu_custom_call.1} parent=1 // pred_fallthru
      _
    // Predicated region
    $region34: #{tpu_custom_call.1} parent=1 // pred_check
      _
    $region35: #{tpu_custom_call.1} parent=1 // pred_check_branch
      %96 = sbr.rel (0) target = $region37
    $region36: #{tpu_custom_call.1} parent=1 // pred_region
      _
    $region37: #{tpu_custom_call.1} parent=1 // pred_fallthru
      _
    // Predicated region
    $region38: #{tpu_custom_call.1} parent=1 // pred_check
      _
    $region39: #{tpu_custom_call.1} parent=1 // pred_check_branch
      %98 = sbr.rel (0) target = $region41
    $region40: #{tpu_custom_call.1} parent=1 // pred_region
      _
    $region41: #{tpu_custom_call.1} parent=1 // pred_fallthru
      _
    // Predicated region
    $region42: #{tpu_custom_call.1} parent=1 // pred_check
      _
    $region43: #{tpu_custom_call.1} parent=1 // pred_check_branch
      %100 = sbr.rel (0) target = $region45
    $region44: #{tpu_custom_call.1} parent=1 // pred_region
      _
    $region45: #{tpu_custom_call.1} parent=1 // pred_fallthru
      _
    // Predicated region
    $region46: #{tpu_custom_call.1} parent=1 // pred_check
      _
    $region47: #{tpu_custom_call.1} parent=1 // pred_check_branch
      %102 = sbr.rel (0) target = $region49
    $region48: #{tpu_custom_call.1} parent=1 // pred_region
      %104 = dma.done [#allocation4], 256
    $region49: #{tpu_custom_call.1} parent=1 // pred_fallthru
      _
    // Predicated region
    $region50: #{tpu_custom_call.1} parent=1 // pred_check
      _
    $region51: #{tpu_custom_call.1} parent=1 // pred_check_branch
      %106 = sbr.rel (0) target = $region53
    $region52: #{tpu_custom_call.1} parent=1 // pred_region
      %108 = dma.done [#allocation7], 64
    $region53: #{tpu_custom_call.1} parent=1 // pred_fallthru
      _
    // Predicated region
    $region54: #{tpu_custom_call.1} parent=1 // pred_check
      _
    $region55: #{tpu_custom_call.1} parent=1 // pred_check_branch
      %110 = sbr.rel (0) target = $region57
    $region56: #{tpu_custom_call.1} parent=1 // pred_region
      %112 = dma.done [#allocation7], 512
    $region57: #{tpu_custom_call.1} parent=1 // pred_fallthru
      _
    // Predicated region
    $region58: #{tpu_custom_call.1} parent=1 // pred_check
      _
    $region59: #{tpu_custom_call.1} parent=1 // pred_check_branch
      %114 = sbr.rel (0) target = $region61
    $region60: #{tpu_custom_call.1} parent=1 // pred_region
      %116 = dma.done [#allocation10], 512
    $region61: #{tpu_custom_call.1} parent=1 // pred_fallthru
      _
    // Predicated region
    $region62: #{tpu_custom_call.1} parent=1 // pred_check
      _
    $region63: #{tpu_custom_call.1} parent=1 // pred_check_branch
      %118 = sbr.rel (0) target = $region65
    $region64: #{tpu_custom_call.1} parent=1 // pred_region
      %120 = dma.done [#allocation10], 512
    $region65: #{tpu_custom_call.1} parent=1 // pred_fallthru
      _
    %v121 = vld [vmem:[%s1] sm:$0x3]
    %s122 = scalar_lea.vmem %s1, 2
    %v123 = vld [vmem:[%s122] sm:$0x3]
    %v124 = vld [vmem:[#allocation6] sm:$0x3]
    %s125 = scalar_lea.vmem [#allocation6], 2
    %v126 = vld [vmem:[%s125] sm:$0x3]
    %v127 = vld [vmem:[%s3] sm:$0xff]
    %v128 = vld [vmem:[%s3 + $0x8] sm:$0xff]
    %v129 = vld [vmem:[%s3 + $0x10] sm:$0xff]
    %v130 = vld [vmem:[%s3 + $0x18] sm:$0xff]
    %v131 = vld [vmem:[#allocation8] sm:$0xff]
    %v132 = vld [vmem:[#allocation8 + $0x8] sm:$0xff]
    %v133 = vld [vmem:[#allocation8 + $0x10] sm:$0xff]
    %v134 = vld [vmem:[#allocation8 + $0x18] sm:$0xff]
    %v135 = vld [vmem:[%s5] sm:$0x1]
    %v136 = vld [vmem:[#allocation3] sm:$0xff]
    %v137 = vld [vmem:[#allocation3 + $0x8] sm:$0xff]
    %v139 = vperm.slane %v135, 0
    %vm141 = vcmask 261120
    %v143 = vsel %vm141, %v136, 0
    %v146 = vsel %vm141, %v137, 0
    %148 = vmatpush.msra.mxu0 0.0
    %149 = vmatpush.msra.mxu0 0.0
    %150 = vmatpush.msra.mxu0 0.0
    %151 = vmatpush.msra.mxu0 0.0
    %152 = vmatpush.msra.mxu0 0.0
    %153 = vmatpush.msra.mxu0 0.0
    %154 = vmatpush.msra.mxu0 0.0
    %155 = vmatpush.msra.mxu0 0.0
    %156 = vmatpush.msra.mxu0 0.0
    %157 = vmatpush.msra.mxu0 0.0
    %158 = vmatpush.msra.mxu0 0.0
    %159 = vmatpush.msra.mxu0 0.0
    %160 = vmatpush.msra.mxu0 %v130
    %161 = vmatpush.msra.mxu0 %v129
    %162 = vmatpush.msra.mxu0 %v128
    %163 = vmatpush.msra.mxu0 %v127
    %164 = vmatmul.f32.gmra.mxu0 %v143
    %v165 = vpop.f32.mrf.mxu0
    %v166 = vadd.f32 %v139, %v165
    %167 = vmatmul.f32.gmra.mxu0 %v146
    %v168 = vpop.f32.mrf.mxu0
    %v169 = vadd.f32 %v139, %v168
    %170 = vdwg.mxu0
    %v171 = vlaneseq
    %v172 = vand.u32 %v171, 127
    %vm173 = vcmp.ge.s32.totalorder %v172, 64
    %vm174 = vcmp.lt.s32.totalorder %v172, 96
    %vm175 = vmand %vm173, %vm174
    %v177 = vsel %vm141, %v121, 0
    %179 = vmatpush.msra.mxu0 0.0
    %180 = vmatpush.msra.mxu0 0.0
    %181 = vmatpush.msra.mxu0 0.0
    %182 = vmatpush.msra.mxu0 0.0
    %183 = vmatpush.msra.mxu0 0.0
    %184 = vmatpush.msra.mxu0 0.0
    %185 = vmatpush.msra.mxu0 0.0
    %186 = vmatpush.msra.mxu0 0.0
    %187 = vmatpush.msra.mxu0 0.0
    %188 = vmatpush.msra.mxu0 0.0
    %189 = vmatpush.msra.mxu0 0.0
    %190 = vmatpush.msra.mxu0 0.0
    %191 = vmatpush.msra.mxu0 %v134
    %192 = vmatpush.msra.mxu0 %v133
    %193 = vmatpush.msra.mxu0 %v132
    %194 = vmatpush.msra.mxu0 %v131
    %195 = vmatmul.f32.gmra.mxu0 %v177
    %v196 = vpop.f32.mrf.mxu0
    %v197 = vadd.f32 0.0, %v196
    %198 = vdwg.mxu0
    %v200 = vrot.slane %v197, 1
    %v203 = vadd.f32 %v166, %v197
    %v204 = vadd.f32 %v169, %v200
    %v205 = vtanh.pop %v203
    %v206 = vtanh.pop %v204
    %v207 = vsub.f32 0.0, %v203
    %v208 = vsub.f32 0.0, %v204
    %v209 = vmul.f32 %v207, 1.442695
    %v210 = vpow.pop %v209
    %v211 = vmul.f32 %v208, 1.442695
    %v212 = vpow.pop %v211
    %v213 = vadd.f32 %v210, 1.0
    %v214 = vadd.f32 %v212, 1.0
    %v215 = vrcp.pop %v213
    %v216 = vmul.f32 %v213, %v215
    %v217 = vsub.f32 1.0, %v216
    %v218 = vmul.f32 %v215, %v217
    %v219 = vadd.f32 %v215, %v218
    %vm220 = vweird.f32 %v213
    %vm221 = vweird.f32 %v215
    %vm222 = vmor %vm220, %vm221
    %v223 = vsel %vm222, %v215, %v219
    %v224 = vand.u32 2147483647, %v213
    %vm225 = vcmp.eq.f32.partialorder %v224, 8.507059e+37
    %v226 = vand.u32 %v213, 2147483648
    %v227 = vor.u32 1.1754944e-38, %v226
    %v228 = vsel %vm225, %v227, %v223
    %v229 = vmul.f32 1.0, %v228
    %v230 = vrcp.pop %v214
    %v231 = vmul.f32 %v214, %v230
    %v232 = vsub.f32 1.0, %v231
    %v233 = vmul.f32 %v230, %v232
    %v234 = vadd.f32 %v230, %v233
    %vm235 = vweird.f32 %v214
    %vm236 = vweird.f32 %v230
    %vm237 = vmor %vm235, %vm236
    %v238 = vsel %vm237, %v230, %v234
    %v239 = vand.u32 2147483647, %v214
    %vm240 = vcmp.eq.f32.partialorder %v239, 8.507059e+37
    %v241 = vand.u32 %v214, 2147483648
    %v242 = vor.u32 1.1754944e-38, %v241
    %v243 = vsel %vm240, %v242, %v238
    %v244 = vmul.f32 1.0, %v243
    %v247 = vrot.slane %v206, 7
    %vm248 = vcmask 1041409
    %v249 = vsel %vm248, %v247, %v205
    %v253 = vrot.slane %v244, 7
    %v254 = vsel %vm248, %v253, %v229
    %v256 = vsel %vm175, %v249, %v254
    %258 = vrot.lane.b32.xlu0 %v124, 32
    %v259 = vpop.permute.xlu0 %258
    %v261 = vmul.f32 %v256, %v259
    %263 = vrot.lane.b32.xlu0 %v256, 64
    %v264 = vpop.permute.xlu0 %263
    %v266 = vmul.f32 %v256, %v264
    %268 = vrot.lane.b32.xlu0 %v266, 32
    %v269 = vpop.permute.xlu0 %268
    %v271 = vadd.f32 %v261, %v269
    %v272 = vtanh.pop %v271
    %274 = vrot.lane.b32.xlu0 %v272, 64
    %v275 = vpop.permute.xlu0 %274
    %v277 = vmul.f32 %v256, %v275
    %279 = vrot.lane.b32.xlu0 %v277, 32
    %v280 = vpop.permute.xlu0 %279
    %vm282 = vcmask 254976
    %283 = vst.msk [vmem:[#allocation2] sm:$0x3] %vm282, %v280
    %v284 = vsel %vm141, %v280, 0
    %286 = vmatpush.msra.mxu0 0.0
    %287 = vmatpush.msra.mxu0 0.0
    %288 = vmatpush.msra.mxu0 0.0
    %289 = vmatpush.msra.mxu0 0.0
    %290 = vmatpush.msra.mxu0 0.0
    %291 = vmatpush.msra.mxu0 0.0
    %292 = vmatpush.msra.mxu0 0.0
    %293 = vmatpush.msra.mxu0 0.0
    %294 = vmatpush.msra.mxu0 0.0
    %295 = vmatpush.msra.mxu0 0.0
    %296 = vmatpush.msra.mxu0 0.0
    %297 = vmatpush.msra.mxu0 0.0
    %298 = vmatpush.msra.mxu0 %v134
    %299 = vmatpush.msra.mxu0 %v133
    %300 = vmatpush.msra.mxu0 %v132
    %301 = vmatpush.msra.mxu0 %v131
    %302 = vmatmul.f32.gmra.mxu0 %v284
    %v303 = vpop.f32.mrf.mxu0
    %v304 = vadd.f32 0.0, %v303
    %305 = vdwg.mxu0
    %v307 = vrot.slane %v304, 7
    %v310 = vadd.f32 %v166, %v307
    %v311 = vadd.f32 %v169, %v304
    %v312 = vtanh.pop %v310
    %v313 = vtanh.pop %v311
    %v314 = vsub.f32 0.0, %v310
    %v315 = vsub.f32 0.0, %v311
    %v316 = vmul.f32 %v314, 1.442695
    %v317 = vpow.pop %v316
    %v318 = vmul.f32 %v315, 1.442695
    %v319 = vpow.pop %v318
    %v320 = vadd.f32 %v317, 1.0
    %v321 = vadd.f32 %v319, 1.0
    %v322 = vrcp.pop %v320
    %v323 = vmul.f32 %v320, %v322
    %v324 = vsub.f32 1.0, %v323
    %v325 = vmul.f32 %v322, %v324
    %v326 = vadd.f32 %v322, %v325
    %vm327 = vweird.f32 %v320
    %vm328 = vweird.f32 %v322
    %vm329 = vmor %vm327, %vm328
    %v330 = vsel %vm329, %v322, %v326
    %v331 = vand.u32 2147483647, %v320
    %vm332 = vcmp.eq.f32.partialorder %v331, 8.507059e+37
    %v333 = vand.u32 %v320, 2147483648
    %v334 = vor.u32 1.1754944e-38, %v333
    %v335 = vsel %vm332, %v334, %v330
    %v336 = vmul.f32 1.0, %v335
    %v337 = vrcp.pop %v321
    %v338 = vmul.f32 %v321, %v337
    %v339 = vsub.f32 1.0, %v338
    %v340 = vmul.f32 %v337, %v339
    %v341 = vadd.f32 %v337, %v340
    %vm342 = vweird.f32 %v321
    %vm343 = vweird.f32 %v337
    %vm344 = vmor %vm342, %vm343
    %v345 = vsel %vm344, %v337, %v341
    %v346 = vand.u32 2147483647, %v321
    %vm347 = vcmp.eq.f32.partialorder %v346, 8.507059e+37
    %v348 = vand.u32 %v321, 2147483648
    %v349 = vor.u32 1.1754944e-38, %v348
    %v350 = vsel %vm347, %v349, %v345
    %v351 = vmul.f32 1.0, %v350
    %v354 = vrot.slane %v312, 1
    %v355 = vsel %vm248, %v313, %v354
    %v359 = vrot.slane %v336, 1
    %v360 = vsel %vm248, %v351, %v359
    %v362 = vsel %vm175, %v355, %v360
    %v363 = vmul.f32 %v362, %v271
    %365 = vrot.lane.b32.xlu0 %v362, 64
    %v366 = vpop.permute.xlu0 %365
    %v368 = vmul.f32 %v362, %v366
    %370 = vrot.lane.b32.xlu0 %v368, 32
    %v371 = vpop.permute.xlu0 %370
    %v373 = vadd.f32 %v363, %v371
    %v374 = vtanh.pop %v373
    %376 = vrot.lane.b32.xlu0 %v374, 64
    %v377 = vpop.permute.xlu0 %376
    %v379 = vmul.f32 %v362, %v377
    %381 = vrot.lane.b32.xlu0 %v379, 32
    %v382 = vpop.permute.xlu0 %381
    %s384 = scalar_lea.vmem [#allocation2], 2
    %385 = vst.msk [vmem:[%s384] sm:$0x3] %vm282, %v382
    %v386 = vsel %vm141, %v382, 0
    %388 = vmatpush.msra.mxu0 0.0
    %389 = vmatpush.msra.mxu0 0.0
    %390 = vmatpush.msra.mxu0 0.0
    %391 = vmatpush.msra.mxu0 0.0
    %392 = vmatpush.msra.mxu0 0.0
    %393 = vmatpush.msra.mxu0 0.0
    %394 = vmatpush.msra.mxu0 0.0
    %395 = vmatpush.msra.mxu0 0.0
    %396 = vmatpush.msra.mxu0 0.0
    %397 = vmatpush.msra.mxu0 0.0
    %398 = vmatpush.msra.mxu0 0.0
    %399 = vmatpush.msra.mxu0 0.0
    %400 = vmatpush.msra.mxu0 %v134
    %401 = vmatpush.msra.mxu0 %v133
    %402 = vmatpush.msra.mxu0 %v132
    %403 = vmatpush.msra.mxu0 %v131
    %404 = vmatmul.f32.gmra.mxu0 %v386
    %v405 = vpop.f32.mrf.mxu0
    %v406 = vadd.f32 0.0, %v405
    %407 = vdwg.mxu0
    %v409 = vrot.slane %v406, 6
    %v410 = vrot.slane %v406, 7
    %v413 = vadd.f32 %v166, %v409
    %v414 = vadd.f32 %v169, %v410
    %v415 = vtanh.pop %v413
    %v416 = vtanh.pop %v414
    %v417 = vsub.f32 0.0, %v413
    %v418 = vsub.f32 0.0, %v414
    %v419 = vmul.f32 %v417, 1.442695
    %v420 = vpow.pop %v419
    %v421 = vmul.f32 %v418, 1.442695
    %v422 = vpow.pop %v421
    %v423 = vadd.f32 %v420, 1.0
    %v424 = vadd.f32 %v422, 1.0
    %v425 = vrcp.pop %v423
    %v426 = vmul.f32 %v423, %v425
    %v427 = vsub.f32 1.0, %v426
    %v428 = vmul.f32 %v425, %v427
    %v429 = vadd.f32 %v425, %v428
    %vm430 = vweird.f32 %v423
    %vm431 = vweird.f32 %v425
    %vm432 = vmor %vm430, %vm431
    %v433 = vsel %vm432, %v425, %v429
    %v434 = vand.u32 2147483647, %v423
    %vm435 = vcmp.eq.f32.partialorder %v434, 8.507059e+37
    %v436 = vand.u32 %v423, 2147483648
    %v437 = vor.u32 1.1754944e-38, %v436
    %v438 = vsel %vm435, %v437, %v433
    %v439 = vmul.f32 1.0, %v438
    %v440 = vrcp.pop %v424
    %v441 = vmul.f32 %v424, %v440
    %v442 = vsub.f32 1.0, %v441
    %v443 = vmul.f32 %v440, %v442
    %v444 = vadd.f32 %v440, %v443
    %vm445 = vweird.f32 %v424
    %vm446 = vweird.f32 %v440
    %vm447 = vmor %vm445, %vm446
    %v448 = vsel %vm447, %v440, %v444
    %v449 = vand.u32 2147483647, %v424
    %vm450 = vcmp.eq.f32.partialorder %v449, 8.507059e+37
    %v451 = vand.u32 %v424, 2147483648
    %v452 = vor.u32 1.1754944e-38, %v451
    %v453 = vsel %vm450, %v452, %v448
    %v454 = vmul.f32 1.0, %v453
    %v457 = vrot.slane %v415, 2
    %v458 = vrot.slane %v416, 1
    %v459 = vsel %vm248, %v458, %v457
    %v463 = vrot.slane %v439, 2
    %v464 = vrot.slane %v454, 1
    %v465 = vsel %vm248, %v464, %v463
    %v467 = vsel %vm175, %v459, %v465
    %v468 = vmul.f32 %v467, %v373
    %470 = vrot.lane.b32.xlu0 %v467, 64
    %v471 = vpop.permute.xlu0 %470
    %v473 = vmul.f32 %v467, %v471
    %475 = vrot.lane.b32.xlu0 %v473, 32
    %v476 = vpop.permute.xlu0 %475
    %v478 = vadd.f32 %v468, %v476
    %v479 = vtanh.pop %v478
    %481 = vrot.lane.b32.xlu0 %v479, 64
    %v482 = vpop.permute.xlu0 %481
    %v484 = vmul.f32 %v467, %v482
    %486 = vrot.lane.b32.xlu0 %v484, 32
    %v487 = vpop.permute.xlu0 %486
    %s489 = scalar_lea.vmem [#allocation2], 4
    %490 = vst.msk [vmem:[%s489] sm:$0x3] %vm282, %v487
    %v491 = vsel %vm141, %v487, 0
    %493 = vmatpush.msra.mxu0 0.0
    %494 = vmatpush.msra.mxu0 0.0
    %495 = vmatpush.msra.mxu0 0.0
    %496 = vmatpush.msra.mxu0 0.0
    %497 = vmatpush.msra.mxu0 0.0
    %498 = vmatpush.msra.mxu0 0.0
    %499 = vmatpush.msra.mxu0 0.0
    %500 = vmatpush.msra.mxu0 0.0
    %501 = vmatpush.msra.mxu0 0.0
    %502 = vmatpush.msra.mxu0 0.0
    %503 = vmatpush.msra.mxu0 0.0
    %504 = vmatpush.msra.mxu0 0.0
    %505 = vmatpush.msra.mxu0 %v134
    %506 = vmatpush.msra.mxu0 %v133
    %507 = vmatpush.msra.mxu0 %v132
    %508 = vmatpush.msra.mxu0 %v131
    %509 = vmatmul.f32.gmra.mxu0 %v491
    %v510 = vpop.f32.mrf.mxu0
    %v511 = vadd.f32 0.0, %v510
    %512 = vdwg.mxu0
    %v514 = vrot.slane %v511, 5
    %v515 = vrot.slane %v511, 6
    %v518 = vadd.f32 %v166, %v514
    %v519 = vadd.f32 %v169, %v515
    %v520 = vtanh.pop %v518
    %v521 = vtanh.pop %v519
    %v522 = vsub.f32 0.0, %v518
    %v523 = vsub.f32 0.0, %v519
    %v524 = vmul.f32 %v522, 1.442695
    %v525 = vpow.pop %v524
    %v526 = vmul.f32 %v523, 1.442695
    %v527 = vpow.pop %v526
    %v528 = vadd.f32 %v525, 1.0
    %v529 = vadd.f32 %v527, 1.0
    %v530 = vrcp.pop %v528
    %v531 = vmul.f32 %v528, %v530
    %v532 = vsub.f32 1.0, %v531
    %v533 = vmul.f32 %v530, %v532
    %v534 = vadd.f32 %v530, %v533
    %vm535 = vweird.f32 %v528
    %vm536 = vweird.f32 %v530
    %vm537 = vmor %vm535, %vm536
    %v538 = vsel %vm537, %v530, %v534
    %v539 = vand.u32 2147483647, %v528
    %vm540 = vcmp.eq.f32.partialorder %v539, 8.507059e+37
    %v541 = vand.u32 %v528, 2147483648
    %v542 = vor.u32 1.1754944e-38, %v541
    %v543 = vsel %vm540, %v542, %v538
    %v544 = vmul.f32 1.0, %v543
    %v545 = vrcp.pop %v529
    %v546 = vmul.f32 %v529, %v545
    %v547 = vsub.f32 1.0, %v546
    %v548 = vmul.f32 %v545, %v547
    %v549 = vadd.f32 %v545, %v548
    %vm550 = vweird.f32 %v529
    %vm551 = vweird.f32 %v545
    %vm552 = vmor %vm550, %vm551
    %v553 = vsel %vm552, %v545, %v549
    %v554 = vand.u32 2147483647, %v529
    %vm555 = vcmp.eq.f32.partialorder %v554, 8.507059e+37
    %v556 = vand.u32 %v529, 2147483648
    %v557 = vor.u32 1.1754944e-38, %v556
    %v558 = vsel %vm555, %v557, %v553
    %v559 = vmul.f32 1.0, %v558
    %v562 = vrot.slane %v520, 3
    %v563 = vrot.slane %v521, 2
    %v564 = vsel %vm248, %v563, %v562
    %v568 = vrot.slane %v544, 3
    %v569 = vrot.slane %v559, 2
    %v570 = vsel %vm248, %v569, %v568
    %v572 = vsel %vm175, %v564, %v570
    %v573 = vmul.f32 %v572, %v478
    %575 = vrot.lane.b32.xlu0 %v572, 64
    %v576 = vpop.permute.xlu0 %575
    %v578 = vmul.f32 %v572, %v576
    %580 = vrot.lane.b32.xlu0 %v578, 32
    %v581 = vpop.permute.xlu0 %580
    %v583 = vadd.f32 %v573, %v581
    %v584 = vtanh.pop %v583
    %586 = vrot.lane.b32.xlu0 %v584, 64
    %v587 = vpop.permute.xlu0 %586
    %v589 = vmul.f32 %v572, %v587
    %591 = vrot.lane.b32.xlu0 %v589, 32
    %v592 = vpop.permute.xlu0 %591
    %s594 = scalar_lea.vmem [#allocation2], 6
    %595 = vst.msk [vmem:[%s594] sm:$0x3] %vm282, %v592
    %v596 = vsel %vm141, %v592, 0
    %598 = vmatpush.msra.mxu0 0.0
    %599 = vmatpush.msra.mxu0 0.0
    %600 = vmatpush.msra.mxu0 0.0
    %601 = vmatpush.msra.mxu0 0.0
    %602 = vmatpush.msra.mxu0 0.0
    %603 = vmatpush.msra.mxu0 0.0
    %604 = vmatpush.msra.mxu0 0.0
    %605 = vmatpush.msra.mxu0 0.0
    %606 = vmatpush.msra.mxu0 0.0
    %607 = vmatpush.msra.mxu0 0.0
    %608 = vmatpush.msra.mxu0 0.0
    %609 = vmatpush.msra.mxu0 0.0
    %610 = vmatpush.msra.mxu0 %v134
    %611 = vmatpush.msra.mxu0 %v133
    %612 = vmatpush.msra.mxu0 %v132
    %613 = vmatpush.msra.mxu0 %v131
    %614 = vmatmul.f32.gmra.mxu0 %v596
    %v615 = vpop.f32.mrf.mxu0
    %v616 = vadd.f32 0.0, %v615
    %617 = vdwg.mxu0
    %v619 = vrot.slane %v616, 4
    %v620 = vrot.slane %v616, 5
    %v623 = vadd.f32 %v166, %v619
    %v624 = vadd.f32 %v169, %v620
    %v625 = vtanh.pop %v623
    %v626 = vtanh.pop %v624
    %v627 = vsub.f32 0.0, %v623
    %v628 = vsub.f32 0.0, %v624
    %v629 = vmul.f32 %v627, 1.442695
    %v630 = vpow.pop %v629
    %v631 = vmul.f32 %v628, 1.442695
    %v632 = vpow.pop %v631
    %v633 = vadd.f32 %v630, 1.0
    %v634 = vadd.f32 %v632, 1.0
    %v635 = vrcp.pop %v633
    %v636 = vmul.f32 %v633, %v635
    %v637 = vsub.f32 1.0, %v636
    %v638 = vmul.f32 %v635, %v637
    %v639 = vadd.f32 %v635, %v638
    %vm640 = vweird.f32 %v633
    %vm641 = vweird.f32 %v635
    %vm642 = vmor %vm640, %vm641
    %v643 = vsel %vm642, %v635, %v639
    %v644 = vand.u32 2147483647, %v633
    %vm645 = vcmp.eq.f32.partialorder %v644, 8.507059e+37
    %v646 = vand.u32 %v633, 2147483648
    %v647 = vor.u32 1.1754944e-38, %v646
    %v648 = vsel %vm645, %v647, %v643
    %v649 = vmul.f32 1.0, %v648
    %v650 = vrcp.pop %v634
    %v651 = vmul.f32 %v634, %v650
    %v652 = vsub.f32 1.0, %v651
    %v653 = vmul.f32 %v650, %v652
    %v654 = vadd.f32 %v650, %v653
    %vm655 = vweird.f32 %v634
    %vm656 = vweird.f32 %v650
    %vm657 = vmor %vm655, %vm656
    %v658 = vsel %vm657, %v650, %v654
    %v659 = vand.u32 2147483647, %v634
    %vm660 = vcmp.eq.f32.partialorder %v659, 8.507059e+37
    %v661 = vand.u32 %v634, 2147483648
    %v662 = vor.u32 1.1754944e-38, %v661
    %v663 = vsel %vm660, %v662, %v658
    %v664 = vmul.f32 1.0, %v663
    %v667 = vrot.slane %v625, 4
    %v668 = vrot.slane %v626, 3
    %v669 = vsel %vm248, %v668, %v667
    %v673 = vrot.slane %v649, 4
    %v674 = vrot.slane %v664, 3
    %v675 = vsel %vm248, %v674, %v673
    %v677 = vsel %vm175, %v669, %v675
    %v678 = vmul.f32 %v677, %v583
    %680 = vrot.lane.b32.xlu0 %v677, 64
    %v681 = vpop.permute.xlu0 %680
    %v683 = vmul.f32 %v677, %v681
    %685 = vrot.lane.b32.xlu0 %v683, 32
    %v686 = vpop.permute.xlu0 %685
    %v688 = vadd.f32 %v678, %v686
    %v689 = vtanh.pop %v688
    %691 = vrot.lane.b32.xlu0 %v689, 64
    %v692 = vpop.permute.xlu0 %691
    %v694 = vmul.f32 %v677, %v692
    %696 = vrot.lane.b32.xlu0 %v694, 32
    %v697 = vpop.permute.xlu0 %696
    %s699 = scalar_lea.vmem [#allocation2], 8
    %700 = vst.msk [vmem:[%s699] sm:$0x3] %vm282, %v697
    %v701 = vsel %vm141, %v697, 0
    %703 = vmatpush.msra.mxu0 0.0
    %704 = vmatpush.msra.mxu0 0.0
    %705 = vmatpush.msra.mxu0 0.0
    %706 = vmatpush.msra.mxu0 0.0
    %707 = vmatpush.msra.mxu0 0.0
    %708 = vmatpush.msra.mxu0 0.0
    %709 = vmatpush.msra.mxu0 0.0
    %710 = vmatpush.msra.mxu0 0.0
    %711 = vmatpush.msra.mxu0 0.0
    %712 = vmatpush.msra.mxu0 0.0
    %713 = vmatpush.msra.mxu0 0.0
    %714 = vmatpush.msra.mxu0 0.0
    %715 = vmatpush.msra.mxu0 %v134
    %716 = vmatpush.msra.mxu0 %v133
    %717 = vmatpush.msra.mxu0 %v132
    %718 = vmatpush.msra.mxu0 %v131
    %719 = vmatmul.f32.gmra.mxu0 %v701
    %v720 = vpop.f32.mrf.mxu0
    %v721 = vadd.f32 0.0, %v720
    %722 = vdwg.mxu0
    %v724 = vrot.slane %v721, 3
    %v725 = vrot.slane %v721, 4
    %v728 = vadd.f32 %v166, %v724
    %v729 = vadd.f32 %v169, %v725
    %v730 = vtanh.pop %v728
    %v731 = vtanh.pop %v729
    %v732 = vsub.f32 0.0, %v728
    %v733 = vsub.f32 0.0, %v729
    %v734 = vmul.f32 %v732, 1.442695
    %v735 = vpow.pop %v734
    %v736 = vmul.f32 %v733, 1.442695
    %v737 = vpow.pop %v736
    %v738 = vadd.f32 %v735, 1.0
    %v739 = vadd.f32 %v737, 1.0
    %v740 = vrcp.pop %v738
    %v741 = vmul.f32 %v738, %v740
    %v742 = vsub.f32 1.0, %v741
    %v743 = vmul.f32 %v740, %v742
    %v744 = vadd.f32 %v740, %v743
    %vm745 = vweird.f32 %v738
    %vm746 = vweird.f32 %v740
    %vm747 = vmor %vm745, %vm746
    %v748 = vsel %vm747, %v740, %v744
    %v749 = vand.u32 2147483647, %v738
    %vm750 = vcmp.eq.f32.partialorder %v749, 8.507059e+37
    %v751 = vand.u32 %v738, 2147483648
    %v752 = vor.u32 1.1754944e-38, %v751
    %v753 = vsel %vm750, %v752, %v748
    %v754 = vmul.f32 1.0, %v753
    %v755 = vrcp.pop %v739
    %v756 = vmul.f32 %v739, %v755
    %v757 = vsub.f32 1.0, %v756
    %v758 = vmul.f32 %v755, %v757
    %v759 = vadd.f32 %v755, %v758
    %vm760 = vweird.f32 %v739
    %vm761 = vweird.f32 %v755
    %vm762 = vmor %vm760, %vm761
    %v763 = vsel %vm762, %v755, %v759
    %v764 = vand.u32 2147483647, %v739
    %vm765 = vcmp.eq.f32.partialorder %v764, 8.507059e+37
    %v766 = vand.u32 %v739, 2147483648
    %v767 = vor.u32 1.1754944e-38, %v766
    %v768 = vsel %vm765, %v767, %v763
    %v769 = vmul.f32 1.0, %v768
    %v772 = vrot.slane %v730, 5
    %v773 = vrot.slane %v731, 4
    %v774 = vsel %vm248, %v773, %v772
    %v778 = vrot.slane %v754, 5
    %v779 = vrot.slane %v769, 4
    %v780 = vsel %vm248, %v779, %v778
    %v782 = vsel %vm175, %v774, %v780
    %v783 = vmul.f32 %v782, %v688
    %785 = vrot.lane.b32.xlu0 %v782, 64
    %v786 = vpop.permute.xlu0 %785
    %v788 = vmul.f32 %v782, %v786
    %790 = vrot.lane.b32.xlu0 %v788, 32
    %v791 = vpop.permute.xlu0 %790
    %v793 = vadd.f32 %v783, %v791
    %v794 = vtanh.pop %v793
    %796 = vrot.lane.b32.xlu0 %v794, 64
    %v797 = vpop.permute.xlu0 %796
    %v799 = vmul.f32 %v782, %v797
    %801 = vrot.lane.b32.xlu0 %v799, 32
    %v802 = vpop.permute.xlu0 %801
    %s804 = scalar_lea.vmem [#allocation2], 10
    %805 = vst.msk [vmem:[%s804] sm:$0x3] %vm282, %v802
    %v806 = vsel %vm141, %v802, 0
    %808 = vmatpush.msra.mxu0 0.0
    %809 = vmatpush.msra.mxu0 0.0
    %810 = vmatpush.msra.mxu0 0.0
    %811 = vmatpush.msra.mxu0 0.0
    %812 = vmatpush.msra.mxu0 0.0
    %813 = vmatpush.msra.mxu0 0.0
    %814 = vmatpush.msra.mxu0 0.0
    %815 = vmatpush.msra.mxu0 0.0
    %816 = vmatpush.msra.mxu0 0.0
    %817 = vmatpush.msra.mxu0 0.0
    %818 = vmatpush.msra.mxu0 0.0
    %819 = vmatpush.msra.mxu0 0.0
    %820 = vmatpush.msra.mxu0 %v134
    %821 = vmatpush.msra.mxu0 %v133
    %822 = vmatpush.msra.mxu0 %v132
    %823 = vmatpush.msra.mxu0 %v131
    %824 = vmatmul.f32.gmra.mxu0 %v806
    %v825 = vpop.f32.mrf.mxu0
    %v826 = vadd.f32 0.0, %v825
    %827 = vdwg.mxu0
    %v829 = vrot.slane %v826, 2
    %v830 = vrot.slane %v826, 3
    %v833 = vadd.f32 %v166, %v829
    %v834 = vadd.f32 %v169, %v830
    %v835 = vtanh.pop %v833
    %v836 = vtanh.pop %v834
    %v837 = vsub.f32 0.0, %v833
    %v838 = vsub.f32 0.0, %v834
    %v839 = vmul.f32 %v837, 1.442695
    %v840 = vpow.pop %v839
    %v841 = vmul.f32 %v838, 1.442695
    %v842 = vpow.pop %v841
    %v843 = vadd.f32 %v840, 1.0
    %v844 = vadd.f32 %v842, 1.0
    %v845 = vrcp.pop %v843
    %v846 = vmul.f32 %v843, %v845
    %v847 = vsub.f32 1.0, %v846
    %v848 = vmul.f32 %v845, %v847
    %v849 = vadd.f32 %v845, %v848
    %vm850 = vweird.f32 %v843
    %vm851 = vweird.f32 %v845
    %vm852 = vmor %vm850, %vm851
    %v853 = vsel %vm852, %v845, %v849
    %v854 = vand.u32 2147483647, %v843
    %vm855 = vcmp.eq.f32.partialorder %v854, 8.507059e+37
    %v856 = vand.u32 %v843, 2147483648
    %v857 = vor.u32 1.1754944e-38, %v856
    %v858 = vsel %vm855, %v857, %v853
    %v859 = vmul.f32 1.0, %v858
    %v860 = vrcp.pop %v844
    %v861 = vmul.f32 %v844, %v860
    %v862 = vsub.f32 1.0, %v861
    %v863 = vmul.f32 %v860, %v862
    %v864 = vadd.f32 %v860, %v863
    %vm865 = vweird.f32 %v844
    %vm866 = vweird.f32 %v860
    %vm867 = vmor %vm865, %vm866
    %v868 = vsel %vm867, %v860, %v864
    %v869 = vand.u32 2147483647, %v844
    %vm870 = vcmp.eq.f32.partialorder %v869, 8.507059e+37
    %v871 = vand.u32 %v844, 2147483648
    %v872 = vor.u32 1.1754944e-38, %v871
    %v873 = vsel %vm870, %v872, %v868
    %v874 = vmul.f32 1.0, %v873
    %v877 = vrot.slane %v835, 6
    %v878 = vrot.slane %v836, 5
    %v879 = vsel %vm248, %v878, %v877
    %v883 = vrot.slane %v859, 6
    %v884 = vrot.slane %v874, 5
    %v885 = vsel %vm248, %v884, %v883
    %v887 = vsel %vm175, %v879, %v885
    %v888 = vmul.f32 %v887, %v793
    %890 = vrot.lane.b32.xlu0 %v887, 64
    %v891 = vpop.permute.xlu0 %890
    %v893 = vmul.f32 %v887, %v891
    %895 = vrot.lane.b32.xlu0 %v893, 32
    %v896 = vpop.permute.xlu0 %895
    %v898 = vadd.f32 %v888, %v896
    %v899 = vtanh.pop %v898
    %901 = vrot.lane.b32.xlu0 %v899, 64
    %v902 = vpop.permute.xlu0 %901
    %v904 = vmul.f32 %v887, %v902
    %906 = vrot.lane.b32.xlu0 %v904, 32
    %v907 = vpop.permute.xlu0 %906
    %s909 = scalar_lea.vmem [#allocation2], 12
    %910 = vst.msk [vmem:[%s909] sm:$0x3] %vm282, %v907
    %v911 = vsel %vm141, %v907, 0
    %913 = vmatpush.msra.mxu0 0.0
    %914 = vmatpush.msra.mxu0 0.0
    %915 = vmatpush.msra.mxu0 0.0
    %916 = vmatpush.msra.mxu0 0.0
    %917 = vmatpush.msra.mxu0 0.0
    %918 = vmatpush.msra.mxu0 0.0
    %919 = vmatpush.msra.mxu0 0.0
    %920 = vmatpush.msra.mxu0 0.0
    %921 = vmatpush.msra.mxu0 0.0
    %922 = vmatpush.msra.mxu0 0.0
    %923 = vmatpush.msra.mxu0 0.0
    %924 = vmatpush.msra.mxu0 0.0
    %925 = vmatpush.msra.mxu0 %v134
    %926 = vmatpush.msra.mxu0 %v133
    %927 = vmatpush.msra.mxu0 %v132
    %928 = vmatpush.msra.mxu0 %v131
    %929 = vmatmul.f32.gmra.mxu0 %v911
    %v930 = vpop.f32.mrf.mxu0
    %v931 = vadd.f32 0.0, %v930
    %932 = vdwg.mxu0
    %v934 = vrot.slane %v931, 1
    %v935 = vrot.slane %v931, 2
    %v938 = vadd.f32 %v166, %v934
    %v939 = vadd.f32 %v169, %v935
    %v940 = vtanh.pop %v938
    %v941 = vtanh.pop %v939
    %v942 = vsub.f32 0.0, %v938
    %v943 = vsub.f32 0.0, %v939
    %v944 = vmul.f32 %v942, 1.442695
    %v945 = vpow.pop %v944
    %v946 = vmul.f32 %v943, 1.442695
    %v947 = vpow.pop %v946
    %v948 = vadd.f32 %v945, 1.0
    %v949 = vadd.f32 %v947, 1.0
    %v950 = vrcp.pop %v948
    %v951 = vmul.f32 %v948, %v950
    %v952 = vsub.f32 1.0, %v951
    %v953 = vmul.f32 %v950, %v952
    %v954 = vadd.f32 %v950, %v953
    %vm955 = vweird.f32 %v948
    %vm956 = vweird.f32 %v950
    %vm957 = vmor %vm955, %vm956
    %v958 = vsel %vm957, %v950, %v954
    %v959 = vand.u32 2147483647, %v948
    %vm960 = vcmp.eq.f32.partialorder %v959, 8.507059e+37
    %v961 = vand.u32 %v948, 2147483648
    %v962 = vor.u32 1.1754944e-38, %v961
    %v963 = vsel %vm960, %v962, %v958
    %v964 = vmul.f32 1.0, %v963
    %v965 = vrcp.pop %v949
    %v966 = vmul.f32 %v949, %v965
    %v967 = vsub.f32 1.0, %v966
    %v968 = vmul.f32 %v965, %v967
    %v969 = vadd.f32 %v965, %v968
    %vm970 = vweird.f32 %v949
    %vm971 = vweird.f32 %v965
    %vm972 = vmor %vm970, %vm971
    %v973 = vsel %vm972, %v965, %v969
    %v974 = vand.u32 2147483647, %v949
    %vm975 = vcmp.eq.f32.partialorder %v974, 8.507059e+37
    %v976 = vand.u32 %v949, 2147483648
    %v977 = vor.u32 1.1754944e-38, %v976
    %v978 = vsel %vm975, %v977, %v973
    %v979 = vmul.f32 1.0, %v978
    %v982 = vrot.slane %v940, 7
    %v983 = vrot.slane %v941, 6
    %v984 = vsel %vm248, %v983, %v982
    %v988 = vrot.slane %v964, 7
    %v989 = vrot.slane %v979, 6
    %v990 = vsel %vm248, %v989, %v988
    %v992 = vsel %vm175, %v984, %v990
    %v993 = vmul.f32 %v992, %v898
    %995 = vrot.lane.b32.xlu0 %v992, 64
    %v996 = vpop.permute.xlu0 %995
    %v998 = vmul.f32 %v992, %v996
    %1000 = vrot.lane.b32.xlu0 %v998, 32
    %v1001 = vpop.permute.xlu0 %1000
    %v1003 = vadd.f32 %v993, %v1001
    %v1004 = vtanh.pop %v1003
    %1006 = vrot.lane.b32.xlu0 %v1004, 64
    %v1007 = vpop.permute.xlu0 %1006
    %v1009 = vmul.f32 %v992, %v1007
    %1011 = vrot.lane.b32.xlu0 %v1009, 32
    %v1012 = vpop.permute.xlu0 %1011
    %s1014 = scalar_lea.vmem [#allocation2], 14
    %1015 = vst.msk [vmem:[%s1014] sm:$0x3] %vm282, %v1012
    %v1016 = vld [vmem:[#allocation9] sm:$0xff]
    %v1017 = vld [vmem:[#allocation9 + $0x8] sm:$0xff]
    %v1018 = vld [vmem:[#allocation9 + $0x10] sm:$0xff]
    %v1019 = vld [vmem:[#allocation9 + $0x18] sm:$0xff]
    %v1020 = vld [vmem:[#allocation11] sm:$0xff]
    %v1021 = vld [vmem:[#allocation11 + $0x8] sm:$0xff]
    %v1022 = vld [vmem:[#allocation11 + $0x10] sm:$0xff]
    %v1023 = vld [vmem:[#allocation11 + $0x18] sm:$0xff]
    %v1024 = vld [vmem:[%s8] sm:$0x1]
    %v1025 = vld [vmem:[#allocation2] sm:$0x3]
    %v1026 = vld [vmem:[#allocation2 + $0x2] sm:$0x3]
    %v1027 = vld [vmem:[#allocation2 + $0x4] sm:$0x3]
    %v1028 = vld [vmem:[#allocation2 + $0x6] sm:$0x3]
    %v1029 = vld [vmem:[#allocation2 + $0x8] sm:$0x3]
    %v1030 = vld [vmem:[#allocation2 + $0xa] sm:$0x3]
    %v1031 = vld [vmem:[#allocation2 + $0xc] sm:$0x3]
    %v1032 = vld [vmem:[#allocation2 + $0xe] sm:$0x3]
    %v1034 = vperm.slane %v1024, 0
    %1044 = vst [vmem:[#allocation1] ss:$4 sm:$0xff] %v1025
    %s1045 = scalar_lea.vmem [#allocation1], 1
    %1046 = vst [vmem:[%s1045] ss:$4 sm:$0xff] %v1026
    %s1047 = scalar_lea.vmem [#allocation1], 2
    %1048 = vst [vmem:[%s1047] ss:$4 sm:$0xff] %v1027
    %s1049 = scalar_lea.vmem [#allocation1], 3
    %1050 = vst [vmem:[%s1049] ss:$4 sm:$0xff] %v1028
    %s1051 = scalar_lea.vmem [#allocation1], 32
    %1052 = vst [vmem:[%s1051] ss:$4 sm:$0xff] %v1029
    %s1053 = scalar_lea.vmem [#allocation1], 33
    %1054 = vst [vmem:[%s1053] ss:$4 sm:$0xff] %v1030
    %s1055 = scalar_lea.vmem [#allocation1], 34
    %1056 = vst [vmem:[%s1055] ss:$4 sm:$0xff] %v1031
    %s1057 = scalar_lea.vmem [#allocation1], 35
    %1058 = vst [vmem:[%s1057] ss:$4 sm:$0xff] %v1032
    %v1059 = vld.sshfl [vmem:[#allocation1] sm:$0xff pattern:$0x73625140]
    %v1060 = vld.sshfl [vmem:[#allocation1 + $0x20] sm:$0xff pattern:$0x73625140]
    %v1061 = vsel %vm141, %v1059, 0
    %v1063 = vsel %vm141, %v1060, 0
    %1065 = vmatpush.msra.mxu0 0.0
    %1066 = vmatpush.msra.mxu0 0.0
    %1067 = vmatpush.msra.mxu0 0.0
    %1068 = vmatpush.msra.mxu0 0.0
    %1069 = vmatpush.msra.mxu0 0.0
    %1070 = vmatpush.msra.mxu0 0.0
    %1071 = vmatpush.msra.mxu0 0.0
    %1072 = vmatpush.msra.mxu0 0.0
    %1073 = vmatpush.msra.mxu0 0.0
    %1074 = vmatpush.msra.mxu0 0.0
    %1075 = vmatpush.msra.mxu0 0.0
    %1076 = vmatpush.msra.mxu0 0.0
    %1077 = vmatpush.msra.mxu0 %v1019
    %1078 = vmatpush.msra.mxu0 %v1018
    %1079 = vmatpush.msra.mxu0 %v1017
    %1080 = vmatpush.msra.mxu0 %v1016
    %1081 = vmatmul.f32.gmra.mxu0 %v1061
    %v1082 = vpop.f32.mrf.mxu0
    %v1083 = vadd.f32 %v1034, %v1082
    %1084 = vmatmul.f32.gmra.mxu0 %v1063
    %v1085 = vpop.f32.mrf.mxu0
    %v1086 = vadd.f32 %v1034, %v1085
    %1087 = vdwg.mxu0
    %v1090 = vrot.slane %v1083, 2
    %v1091 = vrot.slane %v1083, 4
    %v1092 = vrot.slane %v1083, 6
    %v1093 = vrot.slane %v1086, 2
    %v1094 = vrot.slane %v1086, 4
    %v1095 = vrot.slane %v1086, 6
    %v1103 = vsel %vm141, %v123, 0
    %1105 = vmatpush.msra.mxu0 0.0
    %1106 = vmatpush.msra.mxu0 0.0
    %1107 = vmatpush.msra.mxu0 0.0
    %1108 = vmatpush.msra.mxu0 0.0
    %1109 = vmatpush.msra.mxu0 0.0
    %1110 = vmatpush.msra.mxu0 0.0
    %1111 = vmatpush.msra.mxu0 0.0
    %1112 = vmatpush.msra.mxu0 0.0
    %1113 = vmatpush.msra.mxu0 0.0
    %1114 = vmatpush.msra.mxu0 0.0
    %1115 = vmatpush.msra.mxu0 0.0
    %1116 = vmatpush.msra.mxu0 0.0
    %1117 = vmatpush.msra.mxu0 %v1023
    %1118 = vmatpush.msra.mxu0 %v1022
    %1119 = vmatpush.msra.mxu0 %v1021
    %1120 = vmatpush.msra.mxu0 %v1020
    %1121 = vmatmul.f32.gmra.mxu0 %v1103
    %v1122 = vpop.f32.mrf.mxu0
    %v1123 = vadd.f32 0.0, %v1122
    %1124 = vdwg.mxu0
    %v1125 = vadd.f32 %v1083, %v1123
    %v1126 = vtanh.pop %v1125
    %v1127 = vsub.f32 0.0, %v1125
    %v1128 = vmul.f32 %v1127, 1.442695
    %v1129 = vpow.pop %v1128
    %v1130 = vadd.f32 %v1129, 1.0
    %v1131 = vrcp.pop %v1130
    %v1132 = vmul.f32 %v1130, %v1131
    %v1133 = vsub.f32 1.0, %v1132
    %v1134 = vmul.f32 %v1131, %v1133
    %v1135 = vadd.f32 %v1131, %v1134
    %vm1136 = vweird.f32 %v1130
    %vm1137 = vweird.f32 %v1131
    %vm1138 = vmor %vm1136, %vm1137
    %v1139 = vsel %vm1138, %v1131, %v1135
    %v1140 = vand.u32 2147483647, %v1130
    %vm1141 = vcmp.eq.f32.partialorder %v1140, 8.507059e+37
    %v1142 = vand.u32 %v1130, 2147483648
    %v1143 = vor.u32 1.1754944e-38, %v1142
    %v1144 = vsel %vm1141, %v1143, %v1139
    %v1145 = vmul.f32 1.0, %v1144
    %v1146 = vsel %vm175, %v1126, %v1145
    %1148 = vrot.lane.b32.xlu0 %v126, 32
    %v1149 = vpop.permute.xlu0 %1148
    %v1151 = vmul.f32 %v1146, %v1149
    %1153 = vrot.lane.b32.xlu0 %v1146, 64
    %v1154 = vpop.permute.xlu0 %1153
    %v1156 = vmul.f32 %v1146, %v1154
    %1158 = vrot.lane.b32.xlu0 %v1156, 32
    %v1159 = vpop.permute.xlu0 %1158
    %v1161 = vadd.f32 %v1151, %v1159
    %v1162 = vtanh.pop %v1161
    %1164 = vrot.lane.b32.xlu0 %v1162, 64
    %v1165 = vpop.permute.xlu0 %1164
    %v1167 = vmul.f32 %v1146, %v1165
    %1169 = vrot.lane.b32.xlu0 %v1167, 32
    %v1170 = vpop.permute.xlu0 %1169
    %1172 = vst.msk [vmem:[#allocation2] sm:$0x3] %vm282, %v1170
    %v1173 = vsel %vm141, %v1170, 0
    %1175 = vmatpush.msra.mxu0 0.0
    %1176 = vmatpush.msra.mxu0 0.0
    %1177 = vmatpush.msra.mxu0 0.0
    %1178 = vmatpush.msra.mxu0 0.0
    %1179 = vmatpush.msra.mxu0 0.0
    %1180 = vmatpush.msra.mxu0 0.0
    %1181 = vmatpush.msra.mxu0 0.0
    %1182 = vmatpush.msra.mxu0 0.0
    %1183 = vmatpush.msra.mxu0 0.0
    %1184 = vmatpush.msra.mxu0 0.0
    %1185 = vmatpush.msra.mxu0 0.0
    %1186 = vmatpush.msra.mxu0 0.0
    %1187 = vmatpush.msra.mxu0 %v1023
    %1188 = vmatpush.msra.mxu0 %v1022
    %1189 = vmatpush.msra.mxu0 %v1021
    %1190 = vmatpush.msra.mxu0 %v1020
    %1191 = vmatmul.f32.gmra.mxu0 %v1173
    %v1192 = vpop.f32.mrf.mxu0
    %v1193 = vadd.f32 0.0, %v1192
    %1194 = vdwg.mxu0
    %v1195 = vadd.f32 %v1090, %v1193
    %v1196 = vtanh.pop %v1195
    %v1197 = vsub.f32 0.0, %v1195
    %v1198 = vmul.f32 %v1197, 1.442695
    %v1199 = vpow.pop %v1198
    %v1200 = vadd.f32 %v1199, 1.0
    %v1201 = vrcp.pop %v1200
    %v1202 = vmul.f32 %v1200, %v1201
    %v1203 = vsub.f32 1.0, %v1202
    %v1204 = vmul.f32 %v1201, %v1203
    %v1205 = vadd.f32 %v1201, %v1204
    %vm1206 = vweird.f32 %v1200
    %vm1207 = vweird.f32 %v1201
    %vm1208 = vmor %vm1206, %vm1207
    %v1209 = vsel %vm1208, %v1201, %v1205
    %v1210 = vand.u32 2147483647, %v1200
    %vm1211 = vcmp.eq.f32.partialorder %v1210, 8.507059e+37
    %v1212 = vand.u32 %v1200, 2147483648
    %v1213 = vor.u32 1.1754944e-38, %v1212
    %v1214 = vsel %vm1211, %v1213, %v1209
    %v1215 = vmul.f32 1.0, %v1214
    %v1216 = vsel %vm175, %v1196, %v1215
    %v1217 = vmul.f32 %v1216, %v1161
    %1219 = vrot.lane.b32.xlu0 %v1216, 64
    %v1220 = vpop.permute.xlu0 %1219
    %v1222 = vmul.f32 %v1216, %v1220
    %1224 = vrot.lane.b32.xlu0 %v1222, 32
    %v1225 = vpop.permute.xlu0 %1224
    %v1227 = vadd.f32 %v1217, %v1225
    %v1228 = vtanh.pop %v1227
    %1230 = vrot.lane.b32.xlu0 %v1228, 64
    %v1231 = vpop.permute.xlu0 %1230
    %v1233 = vmul.f32 %v1216, %v1231
    %1235 = vrot.lane.b32.xlu0 %v1233, 32
    %v1236 = vpop.permute.xlu0 %1235
    %1238 = vst.msk [vmem:[%s384] sm:$0x3] %vm282, %v1236
    %v1239 = vsel %vm141, %v1236, 0
    %1241 = vmatpush.msra.mxu0 0.0
    %1242 = vmatpush.msra.mxu0 0.0
    %1243 = vmatpush.msra.mxu0 0.0
    %1244 = vmatpush.msra.mxu0 0.0
    %1245 = vmatpush.msra.mxu0 0.0
    %1246 = vmatpush.msra.mxu0 0.0
    %1247 = vmatpush.msra.mxu0 0.0
    %1248 = vmatpush.msra.mxu0 0.0
    %1249 = vmatpush.msra.mxu0 0.0
    %1250 = vmatpush.msra.mxu0 0.0
    %1251 = vmatpush.msra.mxu0 0.0
    %1252 = vmatpush.msra.mxu0 0.0
    %1253 = vmatpush.msra.mxu0 %v1023
    %1254 = vmatpush.msra.mxu0 %v1022
    %1255 = vmatpush.msra.mxu0 %v1021
    %1256 = vmatpush.msra.mxu0 %v1020
    %1257 = vmatmul.f32.gmra.mxu0 %v1239
    %v1258 = vpop.f32.mrf.mxu0
    %v1259 = vadd.f32 0.0, %v1258
    %1260 = vdwg.mxu0
    %v1261 = vadd.f32 %v1091, %v1259
    %v1262 = vtanh.pop %v1261
    %v1263 = vsub.f32 0.0, %v1261
    %v1264 = vmul.f32 %v1263, 1.442695
    %v1265 = vpow.pop %v1264
    %v1266 = vadd.f32 %v1265, 1.0
    %v1267 = vrcp.pop %v1266
    %v1268 = vmul.f32 %v1266, %v1267
    %v1269 = vsub.f32 1.0, %v1268
    %v1270 = vmul.f32 %v1267, %v1269
    %v1271 = vadd.f32 %v1267, %v1270
    %vm1272 = vweird.f32 %v1266
    %vm1273 = vweird.f32 %v1267
    %vm1274 = vmor %vm1272, %vm1273
    %v1275 = vsel %vm1274, %v1267, %v1271
    %v1276 = vand.u32 2147483647, %v1266
    %vm1277 = vcmp.eq.f32.partialorder %v1276, 8.507059e+37
    %v1278 = vand.u32 %v1266, 2147483648
    %v1279 = vor.u32 1.1754944e-38, %v1278
    %v1280 = vsel %vm1277, %v1279, %v1275
    %v1281 = vmul.f32 1.0, %v1280
    %v1282 = vsel %vm175, %v1262, %v1281
    %v1283 = vmul.f32 %v1282, %v1227
    %1285 = vrot.lane.b32.xlu0 %v1282, 64
    %v1286 = vpop.permute.xlu0 %1285
    %v1288 = vmul.f32 %v1282, %v1286
    %1290 = vrot.lane.b32.xlu0 %v1288, 32
    %v1291 = vpop.permute.xlu0 %1290
    %v1293 = vadd.f32 %v1283, %v1291
    %v1294 = vtanh.pop %v1293
    %1296 = vrot.lane.b32.xlu0 %v1294, 64
    %v1297 = vpop.permute.xlu0 %1296
    %v1299 = vmul.f32 %v1282, %v1297
    %1301 = vrot.lane.b32.xlu0 %v1299, 32
    %v1302 = vpop.permute.xlu0 %1301
    %1304 = vst.msk [vmem:[%s489] sm:$0x3] %vm282, %v1302
    %v1305 = vsel %vm141, %v1302, 0
    %1307 = vmatpush.msra.mxu0 0.0
    %1308 = vmatpush.msra.mxu0 0.0
    %1309 = vmatpush.msra.mxu0 0.0
    %1310 = vmatpush.msra.mxu0 0.0
    %1311 = vmatpush.msra.mxu0 0.0
    %1312 = vmatpush.msra.mxu0 0.0
    %1313 = vmatpush.msra.mxu0 0.0
    %1314 = vmatpush.msra.mxu0 0.0
    %1315 = vmatpush.msra.mxu0 0.0
    %1316 = vmatpush.msra.mxu0 0.0
    %1317 = vmatpush.msra.mxu0 0.0
    %1318 = vmatpush.msra.mxu0 0.0
    %1319 = vmatpush.msra.mxu0 %v1023
    %1320 = vmatpush.msra.mxu0 %v1022
    %1321 = vmatpush.msra.mxu0 %v1021
    %1322 = vmatpush.msra.mxu0 %v1020
    %1323 = vmatmul.f32.gmra.mxu0 %v1305
    %v1324 = vpop.f32.mrf.mxu0
    %v1325 = vadd.f32 0.0, %v1324
    %1326 = vdwg.mxu0
    %v1327 = vadd.f32 %v1092, %v1325
    %v1328 = vtanh.pop %v1327
    %v1329 = vsub.f32 0.0, %v1327
    %v1330 = vmul.f32 %v1329, 1.442695
    %v1331 = vpow.pop %v1330
    %v1332 = vadd.f32 %v1331, 1.0
    %v1333 = vrcp.pop %v1332
    %v1334 = vmul.f32 %v1332, %v1333
    %v1335 = vsub.f32 1.0, %v1334
    %v1336 = vmul.f32 %v1333, %v1335
    %v1337 = vadd.f32 %v1333, %v1336
    %vm1338 = vweird.f32 %v1332
    %vm1339 = vweird.f32 %v1333
    %vm1340 = vmor %vm1338, %vm1339
    %v1341 = vsel %vm1340, %v1333, %v1337
    %v1342 = vand.u32 2147483647, %v1332
    %vm1343 = vcmp.eq.f32.partialorder %v1342, 8.507059e+37
    %v1344 = vand.u32 %v1332, 2147483648
    %v1345 = vor.u32 1.1754944e-38, %v1344
    %v1346 = vsel %vm1343, %v1345, %v1341
    %v1347 = vmul.f32 1.0, %v1346
    %v1348 = vsel %vm175, %v1328, %v1347
    %v1349 = vmul.f32 %v1348, %v1293
    %1351 = vrot.lane.b32.xlu0 %v1348, 64
    %v1352 = vpop.permute.xlu0 %1351
    %v1354 = vmul.f32 %v1348, %v1352
    %1356 = vrot.lane.b32.xlu0 %v1354, 32
    %v1357 = vpop.permute.xlu0 %1356
    %v1359 = vadd.f32 %v1349, %v1357
    %v1360 = vtanh.pop %v1359
    %1362 = vrot.lane.b32.xlu0 %v1360, 64
    %v1363 = vpop.permute.xlu0 %1362
    %v1365 = vmul.f32 %v1348, %v1363
    %1367 = vrot.lane.b32.xlu0 %v1365, 32
    %v1368 = vpop.permute.xlu0 %1367
    %1370 = vst.msk [vmem:[%s594] sm:$0x3] %vm282, %v1368
    %v1371 = vsel %vm141, %v1368, 0
    %1373 = vmatpush.msra.mxu0 0.0
    %1374 = vmatpush.msra.mxu0 0.0
    %1375 = vmatpush.msra.mxu0 0.0
    %1376 = vmatpush.msra.mxu0 0.0
    %1377 = vmatpush.msra.mxu0 0.0
    %1378 = vmatpush.msra.mxu0 0.0
    %1379 = vmatpush.msra.mxu0 0.0
    %1380 = vmatpush.msra.mxu0 0.0
    %1381 = vmatpush.msra.mxu0 0.0
    %1382 = vmatpush.msra.mxu0 0.0
    %1383 = vmatpush.msra.mxu0 0.0
    %1384 = vmatpush.msra.mxu0 0.0
    %1385 = vmatpush.msra.mxu0 %v1023
    %1386 = vmatpush.msra.mxu0 %v1022
    %1387 = vmatpush.msra.mxu0 %v1021
    %1388 = vmatpush.msra.mxu0 %v1020
    %1389 = vmatmul.f32.gmra.mxu0 %v1371
    %v1390 = vpop.f32.mrf.mxu0
    %v1391 = vadd.f32 0.0, %v1390
    %1392 = vdwg.mxu0
    %v1393 = vadd.f32 %v1086, %v1391
    %v1394 = vtanh.pop %v1393
    %v1395 = vsub.f32 0.0, %v1393
    %v1396 = vmul.f32 %v1395, 1.442695
    %v1397 = vpow.pop %v1396
    %v1398 = vadd.f32 %v1397, 1.0
    %v1399 = vrcp.pop %v1398
    %v1400 = vmul.f32 %v1398, %v1399
    %v1401 = vsub.f32 1.0, %v1400
    %v1402 = vmul.f32 %v1399, %v1401
    %v1403 = vadd.f32 %v1399, %v1402
    %vm1404 = vweird.f32 %v1398
    %vm1405 = vweird.f32 %v1399
    %vm1406 = vmor %vm1404, %vm1405
    %v1407 = vsel %vm1406, %v1399, %v1403
    %v1408 = vand.u32 2147483647, %v1398
    %vm1409 = vcmp.eq.f32.partialorder %v1408, 8.507059e+37
    %v1410 = vand.u32 %v1398, 2147483648
    %v1411 = vor.u32 1.1754944e-38, %v1410
    %v1412 = vsel %vm1409, %v1411, %v1407
    %v1413 = vmul.f32 1.0, %v1412
    %v1414 = vsel %vm175, %v1394, %v1413
    %v1415 = vmul.f32 %v1414, %v1359
    %1417 = vrot.lane.b32.xlu0 %v1414, 64
    %v1418 = vpop.permute.xlu0 %1417
    %v1420 = vmul.f32 %v1414, %v1418
    %1422 = vrot.lane.b32.xlu0 %v1420, 32
    %v1423 = vpop.permute.xlu0 %1422
    %v1425 = vadd.f32 %v1415, %v1423
    %v1426 = vtanh.pop %v1425
    %1428 = vrot.lane.b32.xlu0 %v1426, 64
    %v1429 = vpop.permute.xlu0 %1428
    %v1431 = vmul.f32 %v1414, %v1429
    %1433 = vrot.lane.b32.xlu0 %v1431, 32
    %v1434 = vpop.permute.xlu0 %1433
    %1436 = vst.msk [vmem:[%s699] sm:$0x3] %vm282, %v1434
    %v1437 = vsel %vm141, %v1434, 0
    %1439 = vmatpush.msra.mxu0 0.0
    %1440 = vmatpush.msra.mxu0 0.0
    %1441 = vmatpush.msra.mxu0 0.0
    %1442 = vmatpush.msra.mxu0 0.0
    %1443 = vmatpush.msra.mxu0 0.0
    %1444 = vmatpush.msra.mxu0 0.0
    %1445 = vmatpush.msra.mxu0 0.0
    %1446 = vmatpush.msra.mxu0 0.0
    %1447 = vmatpush.msra.mxu0 0.0
    %1448 = vmatpush.msra.mxu0 0.0
    %1449 = vmatpush.msra.mxu0 0.0
    %1450 = vmatpush.msra.mxu0 0.0
    %1451 = vmatpush.msra.mxu0 %v1023
    %1452 = vmatpush.msra.mxu0 %v1022
    %1453 = vmatpush.msra.mxu0 %v1021
    %1454 = vmatpush.msra.mxu0 %v1020
    %1455 = vmatmul.f32.gmra.mxu0 %v1437
    %v1456 = vpop.f32.mrf.mxu0
    %v1457 = vadd.f32 0.0, %v1456
    %1458 = vdwg.mxu0
    %v1459 = vadd.f32 %v1093, %v1457
    %v1460 = vtanh.pop %v1459
    %v1461 = vsub.f32 0.0, %v1459
    %v1462 = vmul.f32 %v1461, 1.442695
    %v1463 = vpow.pop %v1462
    %v1464 = vadd.f32 %v1463, 1.0
    %v1465 = vrcp.pop %v1464
    %v1466 = vmul.f32 %v1464, %v1465
    %v1467 = vsub.f32 1.0, %v1466
    %v1468 = vmul.f32 %v1465, %v1467
    %v1469 = vadd.f32 %v1465, %v1468
    %vm1470 = vweird.f32 %v1464
    %vm1471 = vweird.f32 %v1465
    %vm1472 = vmor %vm1470, %vm1471
    %v1473 = vsel %vm1472, %v1465, %v1469
    %v1474 = vand.u32 2147483647, %v1464
    %vm1475 = vcmp.eq.f32.partialorder %v1474, 8.507059e+37
    %v1476 = vand.u32 %v1464, 2147483648
    %v1477 = vor.u32 1.1754944e-38, %v1476
    %v1478 = vsel %vm1475, %v1477, %v1473
    %v1479 = vmul.f32 1.0, %v1478
    %v1480 = vsel %vm175, %v1460, %v1479
    %v1481 = vmul.f32 %v1480, %v1425
    %1483 = vrot.lane.b32.xlu0 %v1480, 64
    %v1484 = vpop.permute.xlu0 %1483
    %v1486 = vmul.f32 %v1480, %v1484
    %1488 = vrot.lane.b32.xlu0 %v1486, 32
    %v1489 = vpop.permute.xlu0 %1488
    %v1491 = vadd.f32 %v1481, %v1489
    %v1492 = vtanh.pop %v1491
    %1494 = vrot.lane.b32.xlu0 %v1492, 64
    %v1495 = vpop.permute.xlu0 %1494
    %v1497 = vmul.f32 %v1480, %v1495
    %1499 = vrot.lane.b32.xlu0 %v1497, 32
    %v1500 = vpop.permute.xlu0 %1499
    %1502 = vst.msk [vmem:[%s804] sm:$0x3] %vm282, %v1500
    %v1503 = vsel %vm141, %v1500, 0
    %1505 = vmatpush.msra.mxu0 0.0
    %1506 = vmatpush.msra.mxu0 0.0
    %1507 = vmatpush.msra.mxu0 0.0
    %1508 = vmatpush.msra.mxu0 0.0
    %1509 = vmatpush.msra.mxu0 0.0
    %1510 = vmatpush.msra.mxu0 0.0
    %1511 = vmatpush.msra.mxu0 0.0
    %1512 = vmatpush.msra.mxu0 0.0
    %1513 = vmatpush.msra.mxu0 0.0
    %1514 = vmatpush.msra.mxu0 0.0
    %1515 = vmatpush.msra.mxu0 0.0
    %1516 = vmatpush.msra.mxu0 0.0
    %1517 = vmatpush.msra.mxu0 %v1023
    %1518 = vmatpush.msra.mxu0 %v1022
    %1519 = vmatpush.msra.mxu0 %v1021
    %1520 = vmatpush.msra.mxu0 %v1020
    %1521 = vmatmul.f32.gmra.mxu0 %v1503
    %v1522 = vpop.f32.mrf.mxu0
    %v1523 = vadd.f32 0.0, %v1522
    %1524 = vdwg.mxu0
    %v1525 = vadd.f32 %v1094, %v1523
    %v1526 = vtanh.pop %v1525
    %v1527 = vsub.f32 0.0, %v1525
    %v1528 = vmul.f32 %v1527, 1.442695
    %v1529 = vpow.pop %v1528
    %v1530 = vadd.f32 %v1529, 1.0
    %v1531 = vrcp.pop %v1530
    %v1532 = vmul.f32 %v1530, %v1531
    %v1533 = vsub.f32 1.0, %v1532
    %v1534 = vmul.f32 %v1531, %v1533
    %v1535 = vadd.f32 %v1531, %v1534
    %vm1536 = vweird.f32 %v1530
    %vm1537 = vweird.f32 %v1531
    %vm1538 = vmor %vm1536, %vm1537
    %v1539 = vsel %vm1538, %v1531, %v1535
    %v1540 = vand.u32 2147483647, %v1530
    %vm1541 = vcmp.eq.f32.partialorder %v1540, 8.507059e+37
    %v1542 = vand.u32 %v1530, 2147483648
    %v1543 = vor.u32 1.1754944e-38, %v1542
    %v1544 = vsel %vm1541, %v1543, %v1539
    %v1545 = vmul.f32 1.0, %v1544
    %v1546 = vsel %vm175, %v1526, %v1545
    %v1547 = vmul.f32 %v1546, %v1491
    %1549 = vrot.lane.b32.xlu0 %v1546, 64
    %v1550 = vpop.permute.xlu0 %1549
    %v1552 = vmul.f32 %v1546, %v1550
    %1554 = vrot.lane.b32.xlu0 %v1552, 32
    %v1555 = vpop.permute.xlu0 %1554
    %v1557 = vadd.f32 %v1547, %v1555
    %v1558 = vtanh.pop %v1557
    %1560 = vrot.lane.b32.xlu0 %v1558, 64
    %v1561 = vpop.permute.xlu0 %1560
    %v1563 = vmul.f32 %v1546, %v1561
    %1565 = vrot.lane.b32.xlu0 %v1563, 32
    %v1566 = vpop.permute.xlu0 %1565
    %1568 = vst.msk [vmem:[%s909] sm:$0x3] %vm282, %v1566
    %v1569 = vsel %vm141, %v1566, 0
    %1571 = vmatpush.msra.mxu0 0.0
    %1572 = vmatpush.msra.mxu0 0.0
    %1573 = vmatpush.msra.mxu0 0.0
    %1574 = vmatpush.msra.mxu0 0.0
    %1575 = vmatpush.msra.mxu0 0.0
    %1576 = vmatpush.msra.mxu0 0.0
    %1577 = vmatpush.msra.mxu0 0.0
    %1578 = vmatpush.msra.mxu0 0.0
    %1579 = vmatpush.msra.mxu0 0.0
    %1580 = vmatpush.msra.mxu0 0.0
    %1581 = vmatpush.msra.mxu0 0.0
    %1582 = vmatpush.msra.mxu0 0.0
    %1583 = vmatpush.msra.mxu0 %v1023
    %1584 = vmatpush.msra.mxu0 %v1022
    %1585 = vmatpush.msra.mxu0 %v1021
    %1586 = vmatpush.msra.mxu0 %v1020
    %1587 = vmatmul.f32.gmra.mxu0 %v1569
    %v1588 = vpop.f32.mrf.mxu0
    %v1589 = vadd.f32 0.0, %v1588
    %1590 = vdwg.mxu0
    %v1591 = vadd.f32 %v1095, %v1589
    %v1592 = vtanh.pop %v1591
    %v1593 = vsub.f32 0.0, %v1591
    %v1594 = vmul.f32 %v1593, 1.442695
    %v1595 = vpow.pop %v1594
    %v1596 = vadd.f32 %v1595, 1.0
    %v1597 = vrcp.pop %v1596
    %v1598 = vmul.f32 %v1596, %v1597
    %v1599 = vsub.f32 1.0, %v1598
    %v1600 = vmul.f32 %v1597, %v1599
    %v1601 = vadd.f32 %v1597, %v1600
    %vm1602 = vweird.f32 %v1596
    %vm1603 = vweird.f32 %v1597
    %vm1604 = vmor %vm1602, %vm1603
    %v1605 = vsel %vm1604, %v1597, %v1601
    %v1606 = vand.u32 2147483647, %v1596
    %vm1607 = vcmp.eq.f32.partialorder %v1606, 8.507059e+37
    %v1608 = vand.u32 %v1596, 2147483648
    %v1609 = vor.u32 1.1754944e-38, %v1608
    %v1610 = vsel %vm1607, %v1609, %v1605
    %v1611 = vmul.f32 1.0, %v1610
    %v1612 = vsel %vm175, %v1592, %v1611
    %v1613 = vmul.f32 %v1612, %v1557
    %1615 = vrot.lane.b32.xlu0 %v1612, 64
    %v1616 = vpop.permute.xlu0 %1615
    %v1618 = vmul.f32 %v1612, %v1616
    %1620 = vrot.lane.b32.xlu0 %v1618, 32
    %v1621 = vpop.permute.xlu0 %1620
    %v1623 = vadd.f32 %v1613, %v1621
    %v1624 = vtanh.pop %v1623
    %1626 = vrot.lane.b32.xlu0 %v1624, 64
    %v1627 = vpop.permute.xlu0 %1626
    %v1629 = vmul.f32 %v1612, %v1627
    %1631 = vrot.lane.b32.xlu0 %v1629, 32
    %v1632 = vpop.permute.xlu0 %1631
    %1634 = vst.msk [vmem:[%s1014] sm:$0x3] %vm282, %v1632
    %v1635 = vld [vmem:[%s3] sm:$0xff]
    %v1636 = vld [vmem:[%s3 + $0x8] sm:$0xff]
    %v1637 = vld [vmem:[%s3 + $0x10] sm:$0xff]
    %v1638 = vld [vmem:[%s3 + $0x18] sm:$0xff]
    %v1639 = vld [vmem:[#allocation8] sm:$0xff]
    %v1640 = vld [vmem:[#allocation8 + $0x8] sm:$0xff]
    %v1641 = vld [vmem:[#allocation8 + $0x10] sm:$0xff]
    %v1642 = vld [vmem:[#allocation8 + $0x18] sm:$0xff]
    %v1643 = vld [vmem:[%s5] sm:$0x1]
    %v1644 = vld [vmem:[#allocation2] sm:$0x3]
    %v1645 = vld [vmem:[#allocation2 + $0x2] sm:$0x3]
    %v1646 = vld [vmem:[#allocation2 + $0x4] sm:$0x3]
    %v1647 = vld [vmem:[#allocation2 + $0x6] sm:$0x3]
    %v1648 = vld [vmem:[#allocation2 + $0x8] sm:$0x3]
    %v1649 = vld [vmem:[#allocation2 + $0xa] sm:$0x3]
    %v1650 = vld [vmem:[#allocation2 + $0xc] sm:$0x3]
    %v1651 = vld [vmem:[#allocation2 + $0xe] sm:$0x3]
    %v1653 = vperm.slane %v1643, 0
    %1663 = vst [vmem:[#allocation1] ss:$4 sm:$0xff] %v1644
    %s1664 = scalar_lea.vmem [#allocation1], 1
    %1665 = vst [vmem:[%s1664] ss:$4 sm:$0xff] %v1645
    %s1666 = scalar_lea.vmem [#allocation1], 2
    %1667 = vst [vmem:[%s1666] ss:$4 sm:$0xff] %v1646
    %s1668 = scalar_lea.vmem [#allocation1], 3
    %1669 = vst [vmem:[%s1668] ss:$4 sm:$0xff] %v1647
    %s1670 = scalar_lea.vmem [#allocation1], 32
    %1671 = vst [vmem:[%s1670] ss:$4 sm:$0xff] %v1648
    %s1672 = scalar_lea.vmem [#allocation1], 33
    %1673 = vst [vmem:[%s1672] ss:$4 sm:$0xff] %v1649
    %s1674 = scalar_lea.vmem [#allocation1], 34
    %1675 = vst [vmem:[%s1674] ss:$4 sm:$0xff] %v1650
    %s1676 = scalar_lea.vmem [#allocation1], 35
    %1677 = vst [vmem:[%s1676] ss:$4 sm:$0xff] %v1651
    %v1678 = vld.sshfl [vmem:[#allocation1] sm:$0xff pattern:$0x73625140]
    %v1679 = vld.sshfl [vmem:[#allocation1 + $0x20] sm:$0xff pattern:$0x73625140]
    %v1680 = vsel %vm141, %v1678, 0
    %v1682 = vsel %vm141, %v1679, 0
    %1684 = vmatpush.msra.mxu0 0.0
    %1685 = vmatpush.msra.mxu0 0.0
    %1686 = vmatpush.msra.mxu0 0.0
    %1687 = vmatpush.msra.mxu0 0.0
    %1688 = vmatpush.msra.mxu0 0.0
    %1689 = vmatpush.msra.mxu0 0.0
    %1690 = vmatpush.msra.mxu0 0.0
    %1691 = vmatpush.msra.mxu0 0.0
    %1692 = vmatpush.msra.mxu0 0.0
    %1693 = vmatpush.msra.mxu0 0.0
    %1694 = vmatpush.msra.mxu0 0.0
    %1695 = vmatpush.msra.mxu0 0.0
    %1696 = vmatpush.msra.mxu0 %v1638
    %1697 = vmatpush.msra.mxu0 %v1637
    %1698 = vmatpush.msra.mxu0 %v1636
    %1699 = vmatpush.msra.mxu0 %v1635
    %1700 = vmatmul.f32.gmra.mxu0 %v1680
    %v1701 = vpop.f32.mrf.mxu0
    %v1702 = vadd.f32 %v1653, %v1701
    %1703 = vmatmul.f32.gmra.mxu0 %v1682
    %v1704 = vpop.f32.mrf.mxu0
    %v1705 = vadd.f32 %v1653, %v1704
    %1706 = vdwg.mxu0
    %v1709 = vrot.slane %v1702, 2
    %v1710 = vrot.slane %v1702, 4
    %v1711 = vrot.slane %v1702, 6
    %v1712 = vrot.slane %v1705, 2
    %v1713 = vrot.slane %v1705, 4
    %v1714 = vrot.slane %v1705, 6
    %v1721 = vsel %vm141, %v1012, 0
    %1723 = vmatpush.msra.mxu0 0.0
    %1724 = vmatpush.msra.mxu0 0.0
    %1725 = vmatpush.msra.mxu0 0.0
    %1726 = vmatpush.msra.mxu0 0.0
    %1727 = vmatpush.msra.mxu0 0.0
    %1728 = vmatpush.msra.mxu0 0.0
    %1729 = vmatpush.msra.mxu0 0.0
    %1730 = vmatpush.msra.mxu0 0.0
    %1731 = vmatpush.msra.mxu0 0.0
    %1732 = vmatpush.msra.mxu0 0.0
    %1733 = vmatpush.msra.mxu0 0.0
    %1734 = vmatpush.msra.mxu0 0.0
    %1735 = vmatpush.msra.mxu0 %v1642
    %1736 = vmatpush.msra.mxu0 %v1641
    %1737 = vmatpush.msra.mxu0 %v1640
    %1738 = vmatpush.msra.mxu0 %v1639
    %1739 = vmatmul.f32.gmra.mxu0 %v1721
    %v1740 = vpop.f32.mrf.mxu0
    %v1741 = vadd.f32 0.0, %v1740
    %1742 = vdwg.mxu0
    %v1743 = vadd.f32 %v1702, %v1741
    %v1744 = vtanh.pop %v1743
    %v1745 = vsub.f32 0.0, %v1743
    %v1746 = vmul.f32 %v1745, 1.442695
    %v1747 = vpow.pop %v1746
    %v1748 = vadd.f32 %v1747, 1.0
    %v1749 = vrcp.pop %v1748
    %v1750 = vmul.f32 %v1748, %v1749
    %v1751 = vsub.f32 1.0, %v1750
    %v1752 = vmul.f32 %v1749, %v1751
    %v1753 = vadd.f32 %v1749, %v1752
    %vm1754 = vweird.f32 %v1748
    %vm1755 = vweird.f32 %v1749
    %vm1756 = vmor %vm1754, %vm1755
    %v1757 = vsel %vm1756, %v1749, %v1753
    %v1758 = vand.u32 2147483647, %v1748
    %vm1759 = vcmp.eq.f32.partialorder %v1758, 8.507059e+37
    %v1760 = vand.u32 %v1748, 2147483648
    %v1761 = vor.u32 1.1754944e-38, %v1760
    %v1762 = vsel %vm1759, %v1761, %v1757
    %v1763 = vmul.f32 1.0, %v1762
    %v1764 = vsel %vm175, %v1744, %v1763
    %v1765 = vmul.f32 %v1764, %v1003
    %1767 = vrot.lane.b32.xlu0 %v1764, 64
    %v1768 = vpop.permute.xlu0 %1767
    %v1770 = vmul.f32 %v1764, %v1768
    %1772 = vrot.lane.b32.xlu0 %v1770, 32
    %v1773 = vpop.permute.xlu0 %1772
    %v1775 = vadd.f32 %v1765, %v1773
    %v1776 = vtanh.pop %v1775
    %1778 = vrot.lane.b32.xlu0 %v1776, 64
    %v1779 = vpop.permute.xlu0 %1778
    %v1781 = vmul.f32 %v1764, %v1779
    %1783 = vrot.lane.b32.xlu0 %v1781, 32
    %v1784 = vpop.permute.xlu0 %1783
    %1786 = vst.msk [vmem:[#allocation2] sm:$0x3] %vm282, %v1784
    %v1787 = vsel %vm141, %v1784, 0
    %1789 = vmatpush.msra.mxu0 0.0
    %1790 = vmatpush.msra.mxu0 0.0
    %1791 = vmatpush.msra.mxu0 0.0
    %1792 = vmatpush.msra.mxu0 0.0
    %1793 = vmatpush.msra.mxu0 0.0
    %1794 = vmatpush.msra.mxu0 0.0
    %1795 = vmatpush.msra.mxu0 0.0
    %1796 = vmatpush.msra.mxu0 0.0
    %1797 = vmatpush.msra.mxu0 0.0
    %1798 = vmatpush.msra.mxu0 0.0
    %1799 = vmatpush.msra.mxu0 0.0
    %1800 = vmatpush.msra.mxu0 0.0
    %1801 = vmatpush.msra.mxu0 %v1642
    %1802 = vmatpush.msra.mxu0 %v1641
    %1803 = vmatpush.msra.mxu0 %v1640
    %1804 = vmatpush.msra.mxu0 %v1639
    %1805 = vmatmul.f32.gmra.mxu0 %v1787
    %v1806 = vpop.f32.mrf.mxu0
    %v1807 = vadd.f32 0.0, %v1806
    %1808 = vdwg.mxu0
    %v1809 = vadd.f32 %v1709, %v1807
    %v1810 = vtanh.pop %v1809
    %v1811 = vsub.f32 0.0, %v1809
    %v1812 = vmul.f32 %v1811, 1.442695
    %v1813 = vpow.pop %v1812
    %v1814 = vadd.f32 %v1813, 1.0
    %v1815 = vrcp.pop %v1814
    %v1816 = vmul.f32 %v1814, %v1815
    %v1817 = vsub.f32 1.0, %v1816
    %v1818 = vmul.f32 %v1815, %v1817
    %v1819 = vadd.f32 %v1815, %v1818
    %vm1820 = vweird.f32 %v1814
    %vm1821 = vweird.f32 %v1815
    %vm1822 = vmor %vm1820, %vm1821
    %v1823 = vsel %vm1822, %v1815, %v1819
    %v1824 = vand.u32 2147483647, %v1814
    %vm1825 = vcmp.eq.f32.partialorder %v1824, 8.507059e+37
    %v1826 = vand.u32 %v1814, 2147483648
    %v1827 = vor.u32 1.1754944e-38, %v1826
    %v1828 = vsel %vm1825, %v1827, %v1823
    %v1829 = vmul.f32 1.0, %v1828
    %v1830 = vsel %vm175, %v1810, %v1829
    %v1831 = vmul.f32 %v1830, %v1775
    %1833 = vrot.lane.b32.xlu0 %v1830, 64
    %v1834 = vpop.permute.xlu0 %1833
    %v1836 = vmul.f32 %v1830, %v1834
    %1838 = vrot.lane.b32.xlu0 %v1836, 32
    %v1839 = vpop.permute.xlu0 %1838
    %v1841 = vadd.f32 %v1831, %v1839
    %v1842 = vtanh.pop %v1841
    %1844 = vrot.lane.b32.xlu0 %v1842, 64
    %v1845 = vpop.permute.xlu0 %1844
    %v1847 = vmul.f32 %v1830, %v1845
    %1849 = vrot.lane.b32.xlu0 %v1847, 32
    %v1850 = vpop.permute.xlu0 %1849
    %1852 = vst.msk [vmem:[%s384] sm:$0x3] %vm282, %v1850
    %v1853 = vsel %vm141, %v1850, 0
    %1855 = vmatpush.msra.mxu0 0.0
    %1856 = vmatpush.msra.mxu0 0.0
    %1857 = vmatpush.msra.mxu0 0.0
    %1858 = vmatpush.msra.mxu0 0.0
    %1859 = vmatpush.msra.mxu0 0.0
    %1860 = vmatpush.msra.mxu0 0.0
    %1861 = vmatpush.msra.mxu0 0.0
    %1862 = vmatpush.msra.mxu0 0.0
    %1863 = vmatpush.msra.mxu0 0.0
    %1864 = vmatpush.msra.mxu0 0.0
    %1865 = vmatpush.msra.mxu0 0.0
    %1866 = vmatpush.msra.mxu0 0.0
    %1867 = vmatpush.msra.mxu0 %v1642
    %1868 = vmatpush.msra.mxu0 %v1641
    %1869 = vmatpush.msra.mxu0 %v1640
    %1870 = vmatpush.msra.mxu0 %v1639
    %1871 = vmatmul.f32.gmra.mxu0 %v1853
    %v1872 = vpop.f32.mrf.mxu0
    %v1873 = vadd.f32 0.0, %v1872
    %1874 = vdwg.mxu0
    %v1875 = vadd.f32 %v1710, %v1873
    %v1876 = vtanh.pop %v1875
    %v1877 = vsub.f32 0.0, %v1875
    %v1878 = vmul.f32 %v1877, 1.442695
    %v1879 = vpow.pop %v1878
    %v1880 = vadd.f32 %v1879, 1.0
    %v1881 = vrcp.pop %v1880
    %v1882 = vmul.f32 %v1880, %v1881
    %v1883 = vsub.f32 1.0, %v1882
    %v1884 = vmul.f32 %v1881, %v1883
    %v1885 = vadd.f32 %v1881, %v1884
    %vm1886 = vweird.f32 %v1880
    %vm1887 = vweird.f32 %v1881
    %vm1888 = vmor %vm1886, %vm1887
    %v1889 = vsel %vm1888, %v1881, %v1885
    %v1890 = vand.u32 2147483647, %v1880
    %vm1891 = vcmp.eq.f32.partialorder %v1890, 8.507059e+37
    %v1892 = vand.u32 %v1880, 2147483648
    %v1893 = vor.u32 1.1754944e-38, %v1892
    %v1894 = vsel %vm1891, %v1893, %v1889
    %v1895 = vmul.f32 1.0, %v1894
    %v1896 = vsel %vm175, %v1876, %v1895
    %v1897 = vmul.f32 %v1896, %v1841
    %1899 = vrot.lane.b32.xlu0 %v1896, 64
    %v1900 = vpop.permute.xlu0 %1899
    %v1902 = vmul.f32 %v1896, %v1900
    %1904 = vrot.lane.b32.xlu0 %v1902, 32
    %v1905 = vpop.permute.xlu0 %1904
    %v1907 = vadd.f32 %v1897, %v1905
    %v1908 = vtanh.pop %v1907
    %1910 = vrot.lane.b32.xlu0 %v1908, 64
    %v1911 = vpop.permute.xlu0 %1910
    %v1913 = vmul.f32 %v1896, %v1911
    %1915 = vrot.lane.b32.xlu0 %v1913, 32
    %v1916 = vpop.permute.xlu0 %1915
    %1918 = vst.msk [vmem:[%s489] sm:$0x3] %vm282, %v1916
    %v1919 = vsel %vm141, %v1916, 0
    %1921 = vmatpush.msra.mxu0 0.0
    %1922 = vmatpush.msra.mxu0 0.0
    %1923 = vmatpush.msra.mxu0 0.0
    %1924 = vmatpush.msra.mxu0 0.0
    %1925 = vmatpush.msra.mxu0 0.0
    %1926 = vmatpush.msra.mxu0 0.0
    %1927 = vmatpush.msra.mxu0 0.0
    %1928 = vmatpush.msra.mxu0 0.0
    %1929 = vmatpush.msra.mxu0 0.0
    %1930 = vmatpush.msra.mxu0 0.0
    %1931 = vmatpush.msra.mxu0 0.0
    %1932 = vmatpush.msra.mxu0 0.0
    %1933 = vmatpush.msra.mxu0 %v1642
    %1934 = vmatpush.msra.mxu0 %v1641
    %1935 = vmatpush.msra.mxu0 %v1640
    %1936 = vmatpush.msra.mxu0 %v1639
    %1937 = vmatmul.f32.gmra.mxu0 %v1919
    %v1938 = vpop.f32.mrf.mxu0
    %v1939 = vadd.f32 0.0, %v1938
    %1940 = vdwg.mxu0
    %v1941 = vadd.f32 %v1711, %v1939
    %v1942 = vtanh.pop %v1941
    %v1943 = vsub.f32 0.0, %v1941
    %v1944 = vmul.f32 %v1943, 1.442695
    %v1945 = vpow.pop %v1944
    %v1946 = vadd.f32 %v1945, 1.0
    %v1947 = vrcp.pop %v1946
    %v1948 = vmul.f32 %v1946, %v1947
    %v1949 = vsub.f32 1.0, %v1948
    %v1950 = vmul.f32 %v1947, %v1949
    %v1951 = vadd.f32 %v1947, %v1950
    %vm1952 = vweird.f32 %v1946
    %vm1953 = vweird.f32 %v1947
    %vm1954 = vmor %vm1952, %vm1953
    %v1955 = vsel %vm1954, %v1947, %v1951
    %v1956 = vand.u32 2147483647, %v1946
    %vm1957 = vcmp.eq.f32.partialorder %v1956, 8.507059e+37
    %v1958 = vand.u32 %v1946, 2147483648
    %v1959 = vor.u32 1.1754944e-38, %v1958
    %v1960 = vsel %vm1957, %v1959, %v1955
    %v1961 = vmul.f32 1.0, %v1960
    %v1962 = vsel %vm175, %v1942, %v1961
    %v1963 = vmul.f32 %v1962, %v1907
    %1965 = vrot.lane.b32.xlu0 %v1962, 64
    %v1966 = vpop.permute.xlu0 %1965
    %v1968 = vmul.f32 %v1962, %v1966
    %1970 = vrot.lane.b32.xlu0 %v1968, 32
    %v1971 = vpop.permute.xlu0 %1970
    %v1973 = vadd.f32 %v1963, %v1971
    %v1974 = vtanh.pop %v1973
    %1976 = vrot.lane.b32.xlu0 %v1974, 64
    %v1977 = vpop.permute.xlu0 %1976
    %v1979 = vmul.f32 %v1962, %v1977
    %1981 = vrot.lane.b32.xlu0 %v1979, 32
    %v1982 = vpop.permute.xlu0 %1981
    %1984 = vst.msk [vmem:[%s594] sm:$0x3] %vm282, %v1982
    %v1985 = vsel %vm141, %v1982, 0
    %1987 = vmatpush.msra.mxu0 0.0
    %1988 = vmatpush.msra.mxu0 0.0
    %1989 = vmatpush.msra.mxu0 0.0
    %1990 = vmatpush.msra.mxu0 0.0
    %1991 = vmatpush.msra.mxu0 0.0
    %1992 = vmatpush.msra.mxu0 0.0
    %1993 = vmatpush.msra.mxu0 0.0
    %1994 = vmatpush.msra.mxu0 0.0
    %1995 = vmatpush.msra.mxu0 0.0
    %1996 = vmatpush.msra.mxu0 0.0
    %1997 = vmatpush.msra.mxu0 0.0
    %1998 = vmatpush.msra.mxu0 0.0
    %1999 = vmatpush.msra.mxu0 %v1642
    %2000 = vmatpush.msra.mxu0 %v1641
    %2001 = vmatpush.msra.mxu0 %v1640
    %2002 = vmatpush.msra.mxu0 %v1639
    %2003 = vmatmul.f32.gmra.mxu0 %v1985
    %v2004 = vpop.f32.mrf.mxu0
    %v2005 = vadd.f32 0.0, %v2004
    %2006 = vdwg.mxu0
    %v2007 = vadd.f32 %v1705, %v2005
    %v2008 = vtanh.pop %v2007
    %v2009 = vsub.f32 0.0, %v2007
    %v2010 = vmul.f32 %v2009, 1.442695
    %v2011 = vpow.pop %v2010
    %v2012 = vadd.f32 %v2011, 1.0
    %v2013 = vrcp.pop %v2012
    %v2014 = vmul.f32 %v2012, %v2013
    %v2015 = vsub.f32 1.0, %v2014
    %v2016 = vmul.f32 %v2013, %v2015
    %v2017 = vadd.f32 %v2013, %v2016
    %vm2018 = vweird.f32 %v2012
    %vm2019 = vweird.f32 %v2013
    %vm2020 = vmor %vm2018, %vm2019
    %v2021 = vsel %vm2020, %v2013, %v2017
    %v2022 = vand.u32 2147483647, %v2012
    %vm2023 = vcmp.eq.f32.partialorder %v2022, 8.507059e+37
    %v2024 = vand.u32 %v2012, 2147483648
    %v2025 = vor.u32 1.1754944e-38, %v2024
    %v2026 = vsel %vm2023, %v2025, %v2021
    %v2027 = vmul.f32 1.0, %v2026
    %v2028 = vsel %vm175, %v2008, %v2027
    %v2029 = vmul.f32 %v2028, %v1973
    %2031 = vrot.lane.b32.xlu0 %v2028, 64
    %v2032 = vpop.permute.xlu0 %2031
    %v2034 = vmul.f32 %v2028, %v2032
    %2036 = vrot.lane.b32.xlu0 %v2034, 32
    %v2037 = vpop.permute.xlu0 %2036
    %v2039 = vadd.f32 %v2029, %v2037
    %v2040 = vtanh.pop %v2039
    %2042 = vrot.lane.b32.xlu0 %v2040, 64
    %v2043 = vpop.permute.xlu0 %2042
    %v2045 = vmul.f32 %v2028, %v2043
    %2047 = vrot.lane.b32.xlu0 %v2045, 32
    %v2048 = vpop.permute.xlu0 %2047
    %2050 = vst.msk [vmem:[%s699] sm:$0x3] %vm282, %v2048
    %v2051 = vsel %vm141, %v2048, 0
    %2053 = vmatpush.msra.mxu0 0.0
    %2054 = vmatpush.msra.mxu0 0.0
    %2055 = vmatpush.msra.mxu0 0.0
    %2056 = vmatpush.msra.mxu0 0.0
    %2057 = vmatpush.msra.mxu0 0.0
    %2058 = vmatpush.msra.mxu0 0.0
    %2059 = vmatpush.msra.mxu0 0.0
    %2060 = vmatpush.msra.mxu0 0.0
    %2061 = vmatpush.msra.mxu0 0.0
    %2062 = vmatpush.msra.mxu0 0.0
    %2063 = vmatpush.msra.mxu0 0.0
    %2064 = vmatpush.msra.mxu0 0.0
    %2065 = vmatpush.msra.mxu0 %v1642
    %2066 = vmatpush.msra.mxu0 %v1641
    %2067 = vmatpush.msra.mxu0 %v1640
    %2068 = vmatpush.msra.mxu0 %v1639
    %2069 = vmatmul.f32.gmra.mxu0 %v2051
    %v2070 = vpop.f32.mrf.mxu0
    %v2071 = vadd.f32 0.0, %v2070
    %2072 = vdwg.mxu0
    %v2073 = vadd.f32 %v1712, %v2071
    %v2074 = vtanh.pop %v2073
    %v2075 = vsub.f32 0.0, %v2073
    %v2076 = vmul.f32 %v2075, 1.442695
    %v2077 = vpow.pop %v2076
    %v2078 = vadd.f32 %v2077, 1.0
    %v2079 = vrcp.pop %v2078
    %v2080 = vmul.f32 %v2078, %v2079
    %v2081 = vsub.f32 1.0, %v2080
    %v2082 = vmul.f32 %v2079, %v2081
    %v2083 = vadd.f32 %v2079, %v2082
    %vm2084 = vweird.f32 %v2078
    %vm2085 = vweird.f32 %v2079
    %vm2086 = vmor %vm2084, %vm2085
    %v2087 = vsel %vm2086, %v2079, %v2083
    %v2088 = vand.u32 2147483647, %v2078
    %vm2089 = vcmp.eq.f32.partialorder %v2088, 8.507059e+37
    %v2090 = vand.u32 %v2078, 2147483648
    %v2091 = vor.u32 1.1754944e-38, %v2090
    %v2092 = vsel %vm2089, %v2091, %v2087
    %v2093 = vmul.f32 1.0, %v2092
    %v2094 = vsel %vm175, %v2074, %v2093
    %v2095 = vmul.f32 %v2094, %v2039
    %2097 = vrot.lane.b32.xlu0 %v2094, 64
    %v2098 = vpop.permute.xlu0 %2097
    %v2100 = vmul.f32 %v2094, %v2098
    %2102 = vrot.lane.b32.xlu0 %v2100, 32
    %v2103 = vpop.permute.xlu0 %2102
    %v2105 = vadd.f32 %v2095, %v2103
    %v2106 = vtanh.pop %v2105
    %2108 = vrot.lane.b32.xlu0 %v2106, 64
    %v2109 = vpop.permute.xlu0 %2108
    %v2111 = vmul.f32 %v2094, %v2109
    %2113 = vrot.lane.b32.xlu0 %v2111, 32
    %v2114 = vpop.permute.xlu0 %2113
    %2116 = vst.msk [vmem:[%s804] sm:$0x3] %vm282, %v2114
    %v2117 = vsel %vm141, %v2114, 0
    %2119 = vmatpush.msra.mxu0 0.0
    %2120 = vmatpush.msra.mxu0 0.0
    %2121 = vmatpush.msra.mxu0 0.0
    %2122 = vmatpush.msra.mxu0 0.0
    %2123 = vmatpush.msra.mxu0 0.0
    %2124 = vmatpush.msra.mxu0 0.0
    %2125 = vmatpush.msra.mxu0 0.0
    %2126 = vmatpush.msra.mxu0 0.0
    %2127 = vmatpush.msra.mxu0 0.0
    %2128 = vmatpush.msra.mxu0 0.0
    %2129 = vmatpush.msra.mxu0 0.0
    %2130 = vmatpush.msra.mxu0 0.0
    %2131 = vmatpush.msra.mxu0 %v1642
    %2132 = vmatpush.msra.mxu0 %v1641
    %2133 = vmatpush.msra.mxu0 %v1640
    %2134 = vmatpush.msra.mxu0 %v1639
    %2135 = vmatmul.f32.gmra.mxu0 %v2117
    %v2136 = vpop.f32.mrf.mxu0
    %v2137 = vadd.f32 0.0, %v2136
    %2138 = vdwg.mxu0
    %v2139 = vadd.f32 %v1713, %v2137
    %v2140 = vtanh.pop %v2139
    %v2141 = vsub.f32 0.0, %v2139
    %v2142 = vmul.f32 %v2141, 1.442695
    %v2143 = vpow.pop %v2142
    %v2144 = vadd.f32 %v2143, 1.0
    %v2145 = vrcp.pop %v2144
    %v2146 = vmul.f32 %v2144, %v2145
    %v2147 = vsub.f32 1.0, %v2146
    %v2148 = vmul.f32 %v2145, %v2147
    %v2149 = vadd.f32 %v2145, %v2148
    %vm2150 = vweird.f32 %v2144
    %vm2151 = vweird.f32 %v2145
    %vm2152 = vmor %vm2150, %vm2151
    %v2153 = vsel %vm2152, %v2145, %v2149
    %v2154 = vand.u32 2147483647, %v2144
    %vm2155 = vcmp.eq.f32.partialorder %v2154, 8.507059e+37
    %v2156 = vand.u32 %v2144, 2147483648
    %v2157 = vor.u32 1.1754944e-38, %v2156
    %v2158 = vsel %vm2155, %v2157, %v2153
    %v2159 = vmul.f32 1.0, %v2158
    %v2160 = vsel %vm175, %v2140, %v2159
    %v2161 = vmul.f32 %v2160, %v2105
    %2163 = vrot.lane.b32.xlu0 %v2160, 64
    %v2164 = vpop.permute.xlu0 %2163
    %v2166 = vmul.f32 %v2160, %v2164
    %2168 = vrot.lane.b32.xlu0 %v2166, 32
    %v2169 = vpop.permute.xlu0 %2168
    %v2171 = vadd.f32 %v2161, %v2169
    %v2172 = vtanh.pop %v2171
    %2174 = vrot.lane.b32.xlu0 %v2172, 64
    %v2175 = vpop.permute.xlu0 %2174
    %v2177 = vmul.f32 %v2160, %v2175
    %2179 = vrot.lane.b32.xlu0 %v2177, 32
    %v2180 = vpop.permute.xlu0 %2179
    %2182 = vst.msk [vmem:[%s909] sm:$0x3] %vm282, %v2180
    %v2183 = vsel %vm141, %v2180, 0
    %2185 = vmatpush.msra.mxu0 0.0
    %2186 = vmatpush.msra.mxu0 0.0
    %2187 = vmatpush.msra.mxu0 0.0
    %2188 = vmatpush.msra.mxu0 0.0
    %2189 = vmatpush.msra.mxu0 0.0
    %2190 = vmatpush.msra.mxu0 0.0
    %2191 = vmatpush.msra.mxu0 0.0
    %2192 = vmatpush.msra.mxu0 0.0
    %2193 = vmatpush.msra.mxu0 0.0
    %2194 = vmatpush.msra.mxu0 0.0
    %2195 = vmatpush.msra.mxu0 0.0
    %2196 = vmatpush.msra.mxu0 0.0
    %2197 = vmatpush.msra.mxu0 %v1642
    %2198 = vmatpush.msra.mxu0 %v1641
    %2199 = vmatpush.msra.mxu0 %v1640
    %2200 = vmatpush.msra.mxu0 %v1639
    %2201 = vmatmul.f32.gmra.mxu0 %v2183
    %v2202 = vpop.f32.mrf.mxu0
    %v2203 = vadd.f32 0.0, %v2202
    %2204 = vdwg.mxu0
    %v2205 = vadd.f32 %v1714, %v2203
    %v2206 = vtanh.pop %v2205
    %v2207 = vsub.f32 0.0, %v2205
    %v2208 = vmul.f32 %v2207, 1.442695
    %v2209 = vpow.pop %v2208
    %v2210 = vadd.f32 %v2209, 1.0
    %v2211 = vrcp.pop %v2210
    %v2212 = vmul.f32 %v2210, %v2211
    %v2213 = vsub.f32 1.0, %v2212
    %v2214 = vmul.f32 %v2211, %v2213
    %v2215 = vadd.f32 %v2211, %v2214
    %vm2216 = vweird.f32 %v2210
    %vm2217 = vweird.f32 %v2211
    %vm2218 = vmor %vm2216, %vm2217
    %v2219 = vsel %vm2218, %v2211, %v2215
    %v2220 = vand.u32 2147483647, %v2210
    %vm2221 = vcmp.eq.f32.partialorder %v2220, 8.507059e+37
    %v2222 = vand.u32 %v2210, 2147483648
    %v2223 = vor.u32 1.1754944e-38, %v2222
    %v2224 = vsel %vm2221, %v2223, %v2219
    %v2225 = vmul.f32 1.0, %v2224
    %v2226 = vsel %vm175, %v2206, %v2225
    %v2227 = vmul.f32 %v2226, %v2171
    %2229 = vrot.lane.b32.xlu0 %v2226, 64
    %v2230 = vpop.permute.xlu0 %2229
    %v2232 = vmul.f32 %v2226, %v2230
    %2234 = vrot.lane.b32.xlu0 %v2232, 32
    %v2235 = vpop.permute.xlu0 %2234
    %v2237 = vadd.f32 %v2227, %v2235
    %v2238 = vtanh.pop %v2237
    %2240 = vrot.lane.b32.xlu0 %v2238, 64
    %v2241 = vpop.permute.xlu0 %2240
    %v2243 = vmul.f32 %v2226, %v2241
    %2245 = vrot.lane.b32.xlu0 %v2243, 32
    %v2246 = vpop.permute.xlu0 %2245
    %2248 = vst.msk [vmem:[%s1014] sm:$0x3] %vm282, %v2246
    %v2249 = vld [vmem:[#allocation9] sm:$0xff]
    %v2250 = vld [vmem:[#allocation9 + $0x8] sm:$0xff]
    %v2251 = vld [vmem:[#allocation9 + $0x10] sm:$0xff]
    %v2252 = vld [vmem:[#allocation9 + $0x18] sm:$0xff]
    %v2253 = vld [vmem:[#allocation11] sm:$0xff]
    %v2254 = vld [vmem:[#allocation11 + $0x8] sm:$0xff]
    %v2255 = vld [vmem:[#allocation11 + $0x10] sm:$0xff]
    %v2256 = vld [vmem:[#allocation11 + $0x18] sm:$0xff]
    %v2257 = vld [vmem:[%s8] sm:$0x1]
    %v2258 = vld [vmem:[#allocation2] sm:$0x3]
    %v2259 = vld [vmem:[#allocation2 + $0x2] sm:$0x3]
    %v2260 = vld [vmem:[#allocation2 + $0x4] sm:$0x3]
    %v2261 = vld [vmem:[#allocation2 + $0x6] sm:$0x3]
    %v2262 = vld [vmem:[#allocation2 + $0x8] sm:$0x3]
    %v2263 = vld [vmem:[#allocation2 + $0xa] sm:$0x3]
    %v2264 = vld [vmem:[#allocation2 + $0xc] sm:$0x3]
    %v2265 = vld [vmem:[#allocation2 + $0xe] sm:$0x3]
    %v2267 = vperm.slane %v2257, 0
    %2277 = vst [vmem:[#allocation1] ss:$4 sm:$0xff] %v2258
    %s2278 = scalar_lea.vmem [#allocation1], 1
    %2279 = vst [vmem:[%s2278] ss:$4 sm:$0xff] %v2259
    %s2280 = scalar_lea.vmem [#allocation1], 2
    %2281 = vst [vmem:[%s2280] ss:$4 sm:$0xff] %v2260
    %s2282 = scalar_lea.vmem [#allocation1], 3
    %2283 = vst [vmem:[%s2282] ss:$4 sm:$0xff] %v2261
    %s2284 = scalar_lea.vmem [#allocation1], 32
    %2285 = vst [vmem:[%s2284] ss:$4 sm:$0xff] %v2262
    %s2286 = scalar_lea.vmem [#allocation1], 33
    %2287 = vst [vmem:[%s2286] ss:$4 sm:$0xff] %v2263
    %s2288 = scalar_lea.vmem [#allocation1], 34
    %2289 = vst [vmem:[%s2288] ss:$4 sm:$0xff] %v2264
    %s2290 = scalar_lea.vmem [#allocation1], 35
    %2291 = vst [vmem:[%s2290] ss:$4 sm:$0xff] %v2265
    %v2292 = vld.sshfl [vmem:[#allocation1] sm:$0xff pattern:$0x73625140]
    %v2293 = vld.sshfl [vmem:[#allocation1 + $0x20] sm:$0xff pattern:$0x73625140]
    %v2294 = vsel %vm141, %v2292, 0
    %v2296 = vsel %vm141, %v2293, 0
    %2298 = vmatpush.msra.mxu0 0.0
    %2299 = vmatpush.msra.mxu0 0.0
    %2300 = vmatpush.msra.mxu0 0.0
    %2301 = vmatpush.msra.mxu0 0.0
    %2302 = vmatpush.msra.mxu0 0.0
    %2303 = vmatpush.msra.mxu0 0.0
    %2304 = vmatpush.msra.mxu0 0.0
    %2305 = vmatpush.msra.mxu0 0.0
    %2306 = vmatpush.msra.mxu0 0.0
    %2307 = vmatpush.msra.mxu0 0.0
    %2308 = vmatpush.msra.mxu0 0.0
    %2309 = vmatpush.msra.mxu0 0.0
    %2310 = vmatpush.msra.mxu0 %v2252
    %2311 = vmatpush.msra.mxu0 %v2251
    %2312 = vmatpush.msra.mxu0 %v2250
    %2313 = vmatpush.msra.mxu0 %v2249
    %2314 = vmatmul.f32.gmra.mxu0 %v2294
    %v2315 = vpop.f32.mrf.mxu0
    %v2316 = vadd.f32 %v2267, %v2315
    %2317 = vmatmul.f32.gmra.mxu0 %v2296
    %v2318 = vpop.f32.mrf.mxu0
    %v2319 = vadd.f32 %v2267, %v2318
    %2320 = vdwg.mxu0
    %v2323 = vrot.slane %v2316, 2
    %v2324 = vrot.slane %v2316, 4
    %v2325 = vrot.slane %v2316, 6
    %v2326 = vrot.slane %v2319, 2
    %v2327 = vrot.slane %v2319, 4
    %v2328 = vrot.slane %v2319, 6
    %v2335 = vsel %vm141, %v1632, 0
    %2337 = vmatpush.msra.mxu0 0.0
    %2338 = vmatpush.msra.mxu0 0.0
    %2339 = vmatpush.msra.mxu0 0.0
    %2340 = vmatpush.msra.mxu0 0.0
    %2341 = vmatpush.msra.mxu0 0.0
    %2342 = vmatpush.msra.mxu0 0.0
    %2343 = vmatpush.msra.mxu0 0.0
    %2344 = vmatpush.msra.mxu0 0.0
    %2345 = vmatpush.msra.mxu0 0.0
    %2346 = vmatpush.msra.mxu0 0.0
    %2347 = vmatpush.msra.mxu0 0.0
    %2348 = vmatpush.msra.mxu0 0.0
    %2349 = vmatpush.msra.mxu0 %v2256
    %2350 = vmatpush.msra.mxu0 %v2255
    %2351 = vmatpush.msra.mxu0 %v2254
    %2352 = vmatpush.msra.mxu0 %v2253
    %2353 = vmatmul.f32.gmra.mxu0 %v2335
    %v2354 = vpop.f32.mrf.mxu0
    %v2355 = vadd.f32 0.0, %v2354
    %2356 = vdwg.mxu0
    %v2357 = vadd.f32 %v2316, %v2355
    %v2358 = vtanh.pop %v2357
    %v2359 = vsub.f32 0.0, %v2357
    %v2360 = vmul.f32 %v2359, 1.442695
    %v2361 = vpow.pop %v2360
    %v2362 = vadd.f32 %v2361, 1.0
    %v2363 = vrcp.pop %v2362
    %v2364 = vmul.f32 %v2362, %v2363
    %v2365 = vsub.f32 1.0, %v2364
    %v2366 = vmul.f32 %v2363, %v2365
    %v2367 = vadd.f32 %v2363, %v2366
    %vm2368 = vweird.f32 %v2362
    %vm2369 = vweird.f32 %v2363
    %vm2370 = vmor %vm2368, %vm2369
    %v2371 = vsel %vm2370, %v2363, %v2367
    %v2372 = vand.u32 2147483647, %v2362
    %vm2373 = vcmp.eq.f32.partialorder %v2372, 8.507059e+37
    %v2374 = vand.u32 %v2362, 2147483648
    %v2375 = vor.u32 1.1754944e-38, %v2374
    %v2376 = vsel %vm2373, %v2375, %v2371
    %v2377 = vmul.f32 1.0, %v2376
    %v2378 = vsel %vm175, %v2358, %v2377
    %v2379 = vmul.f32 %v2378, %v1623
    %2381 = vrot.lane.b32.xlu0 %v2378, 64
    %v2382 = vpop.permute.xlu0 %2381
    %v2384 = vmul.f32 %v2378, %v2382
    %2386 = vrot.lane.b32.xlu0 %v2384, 32
    %v2387 = vpop.permute.xlu0 %2386
    %v2389 = vadd.f32 %v2379, %v2387
    %v2390 = vtanh.pop %v2389
    %2392 = vrot.lane.b32.xlu0 %v2390, 64
    %v2393 = vpop.permute.xlu0 %2392
    %v2395 = vmul.f32 %v2378, %v2393
    %2397 = vrot.lane.b32.xlu0 %v2395, 32
    %v2398 = vpop.permute.xlu0 %2397
    %2400 = vst.msk [vmem:[#allocation2] sm:$0x3] %vm282, %v2398
    %v2401 = vsel %vm141, %v2398, 0
    %2403 = vmatpush.msra.mxu0 0.0
    %2404 = vmatpush.msra.mxu0 0.0
    %2405 = vmatpush.msra.mxu0 0.0
    %2406 = vmatpush.msra.mxu0 0.0
    %2407 = vmatpush.msra.mxu0 0.0
    %2408 = vmatpush.msra.mxu0 0.0
    %2409 = vmatpush.msra.mxu0 0.0
    %2410 = vmatpush.msra.mxu0 0.0
    %2411 = vmatpush.msra.mxu0 0.0
    %2412 = vmatpush.msra.mxu0 0.0
    %2413 = vmatpush.msra.mxu0 0.0
    %2414 = vmatpush.msra.mxu0 0.0
    %2415 = vmatpush.msra.mxu0 %v2256
    %2416 = vmatpush.msra.mxu0 %v2255
    %2417 = vmatpush.msra.mxu0 %v2254
    %2418 = vmatpush.msra.mxu0 %v2253
    %2419 = vmatmul.f32.gmra.mxu0 %v2401
    %v2420 = vpop.f32.mrf.mxu0
    %v2421 = vadd.f32 0.0, %v2420
    %2422 = vdwg.mxu0
    %v2423 = vadd.f32 %v2323, %v2421
    %v2424 = vtanh.pop %v2423
    %v2425 = vsub.f32 0.0, %v2423
    %v2426 = vmul.f32 %v2425, 1.442695
    %v2427 = vpow.pop %v2426
    %v2428 = vadd.f32 %v2427, 1.0
    %v2429 = vrcp.pop %v2428
    %v2430 = vmul.f32 %v2428, %v2429
    %v2431 = vsub.f32 1.0, %v2430
    %v2432 = vmul.f32 %v2429, %v2431
    %v2433 = vadd.f32 %v2429, %v2432
    %vm2434 = vweird.f32 %v2428
    %vm2435 = vweird.f32 %v2429
    %vm2436 = vmor %vm2434, %vm2435
    %v2437 = vsel %vm2436, %v2429, %v2433
    %v2438 = vand.u32 2147483647, %v2428
    %vm2439 = vcmp.eq.f32.partialorder %v2438, 8.507059e+37
    %v2440 = vand.u32 %v2428, 2147483648
    %v2441 = vor.u32 1.1754944e-38, %v2440
    %v2442 = vsel %vm2439, %v2441, %v2437
    %v2443 = vmul.f32 1.0, %v2442
    %v2444 = vsel %vm175, %v2424, %v2443
    %v2445 = vmul.f32 %v2444, %v2389
    %2447 = vrot.lane.b32.xlu0 %v2444, 64
    %v2448 = vpop.permute.xlu0 %2447
    %v2450 = vmul.f32 %v2444, %v2448
    %2452 = vrot.lane.b32.xlu0 %v2450, 32
    %v2453 = vpop.permute.xlu0 %2452
    %v2455 = vadd.f32 %v2445, %v2453
    %v2456 = vtanh.pop %v2455
    %2458 = vrot.lane.b32.xlu0 %v2456, 64
    %v2459 = vpop.permute.xlu0 %2458
    %v2461 = vmul.f32 %v2444, %v2459
    %2463 = vrot.lane.b32.xlu0 %v2461, 32
    %v2464 = vpop.permute.xlu0 %2463
    %2466 = vst.msk [vmem:[%s384] sm:$0x3] %vm282, %v2464
    %v2467 = vsel %vm141, %v2464, 0
    %2469 = vmatpush.msra.mxu0 0.0
    %2470 = vmatpush.msra.mxu0 0.0
    %2471 = vmatpush.msra.mxu0 0.0
    %2472 = vmatpush.msra.mxu0 0.0
    %2473 = vmatpush.msra.mxu0 0.0
    %2474 = vmatpush.msra.mxu0 0.0
    %2475 = vmatpush.msra.mxu0 0.0
    %2476 = vmatpush.msra.mxu0 0.0
    %2477 = vmatpush.msra.mxu0 0.0
    %2478 = vmatpush.msra.mxu0 0.0
    %2479 = vmatpush.msra.mxu0 0.0
    %2480 = vmatpush.msra.mxu0 0.0
    %2481 = vmatpush.msra.mxu0 %v2256
    %2482 = vmatpush.msra.mxu0 %v2255
    %2483 = vmatpush.msra.mxu0 %v2254
    %2484 = vmatpush.msra.mxu0 %v2253
    %2485 = vmatmul.f32.gmra.mxu0 %v2467
    %v2486 = vpop.f32.mrf.mxu0
    %v2487 = vadd.f32 0.0, %v2486
    %2488 = vdwg.mxu0
    %v2489 = vadd.f32 %v2324, %v2487
    %v2490 = vtanh.pop %v2489
    %v2491 = vsub.f32 0.0, %v2489
    %v2492 = vmul.f32 %v2491, 1.442695
    %v2493 = vpow.pop %v2492
    %v2494 = vadd.f32 %v2493, 1.0
    %v2495 = vrcp.pop %v2494
    %v2496 = vmul.f32 %v2494, %v2495
    %v2497 = vsub.f32 1.0, %v2496
    %v2498 = vmul.f32 %v2495, %v2497
    %v2499 = vadd.f32 %v2495, %v2498
    %vm2500 = vweird.f32 %v2494
    %vm2501 = vweird.f32 %v2495
    %vm2502 = vmor %vm2500, %vm2501
    %v2503 = vsel %vm2502, %v2495, %v2499
    %v2504 = vand.u32 2147483647, %v2494
    %vm2505 = vcmp.eq.f32.partialorder %v2504, 8.507059e+37
    %v2506 = vand.u32 %v2494, 2147483648
    %v2507 = vor.u32 1.1754944e-38, %v2506
    %v2508 = vsel %vm2505, %v2507, %v2503
    %v2509 = vmul.f32 1.0, %v2508
    %v2510 = vsel %vm175, %v2490, %v2509
    %v2511 = vmul.f32 %v2510, %v2455
    %2513 = vrot.lane.b32.xlu0 %v2510, 64
    %v2514 = vpop.permute.xlu0 %2513
    %v2516 = vmul.f32 %v2510, %v2514
    %2518 = vrot.lane.b32.xlu0 %v2516, 32
    %v2519 = vpop.permute.xlu0 %2518
    %v2521 = vadd.f32 %v2511, %v2519
    %v2522 = vtanh.pop %v2521
    %2524 = vrot.lane.b32.xlu0 %v2522, 64
    %v2525 = vpop.permute.xlu0 %2524
    %v2527 = vmul.f32 %v2510, %v2525
    %2529 = vrot.lane.b32.xlu0 %v2527, 32
    %v2530 = vpop.permute.xlu0 %2529
    %2532 = vst.msk [vmem:[%s489] sm:$0x3] %vm282, %v2530
    %v2533 = vsel %vm141, %v2530, 0
    %2535 = vmatpush.msra.mxu0 0.0
    %2536 = vmatpush.msra.mxu0 0.0
    %2537 = vmatpush.msra.mxu0 0.0
    %2538 = vmatpush.msra.mxu0 0.0
    %2539 = vmatpush.msra.mxu0 0.0
    %2540 = vmatpush.msra.mxu0 0.0
    %2541 = vmatpush.msra.mxu0 0.0
    %2542 = vmatpush.msra.mxu0 0.0
    %2543 = vmatpush.msra.mxu0 0.0
    %2544 = vmatpush.msra.mxu0 0.0
    %2545 = vmatpush.msra.mxu0 0.0
    %2546 = vmatpush.msra.mxu0 0.0
    %2547 = vmatpush.msra.mxu0 %v2256
    %2548 = vmatpush.msra.mxu0 %v2255
    %2549 = vmatpush.msra.mxu0 %v2254
    %2550 = vmatpush.msra.mxu0 %v2253
    %2551 = vmatmul.f32.gmra.mxu0 %v2533
    %v2552 = vpop.f32.mrf.mxu0
    %v2553 = vadd.f32 0.0, %v2552
    %2554 = vdwg.mxu0
    %v2555 = vadd.f32 %v2325, %v2553
    %v2556 = vtanh.pop %v2555
    %v2557 = vsub.f32 0.0, %v2555
    %v2558 = vmul.f32 %v2557, 1.442695
    %v2559 = vpow.pop %v2558
    %v2560 = vadd.f32 %v2559, 1.0
    %v2561 = vrcp.pop %v2560
    %v2562 = vmul.f32 %v2560, %v2561
    %v2563 = vsub.f32 1.0, %v2562
    %v2564 = vmul.f32 %v2561, %v2563
    %v2565 = vadd.f32 %v2561, %v2564
    %vm2566 = vweird.f32 %v2560
    %vm2567 = vweird.f32 %v2561
    %vm2568 = vmor %vm2566, %vm2567
    %v2569 = vsel %vm2568, %v2561, %v2565
    %v2570 = vand.u32 2147483647, %v2560
    %vm2571 = vcmp.eq.f32.partialorder %v2570, 8.507059e+37
    %v2572 = vand.u32 %v2560, 2147483648
    %v2573 = vor.u32 1.1754944e-38, %v2572
    %v2574 = vsel %vm2571, %v2573, %v2569
    %v2575 = vmul.f32 1.0, %v2574
    %v2576 = vsel %vm175, %v2556, %v2575
    %v2577 = vmul.f32 %v2576, %v2521
    %2579 = vrot.lane.b32.xlu0 %v2576, 64
    %v2580 = vpop.permute.xlu0 %2579
    %v2582 = vmul.f32 %v2576, %v2580
    %2584 = vrot.lane.b32.xlu0 %v2582, 32
    %v2585 = vpop.permute.xlu0 %2584
    %v2587 = vadd.f32 %v2577, %v2585
    %v2588 = vtanh.pop %v2587
    %2590 = vrot.lane.b32.xlu0 %v2588, 64
    %v2591 = vpop.permute.xlu0 %2590
    %v2593 = vmul.f32 %v2576, %v2591
    %2595 = vrot.lane.b32.xlu0 %v2593, 32
    %v2596 = vpop.permute.xlu0 %2595
    %2598 = vst.msk [vmem:[%s594] sm:$0x3] %vm282, %v2596
    %v2599 = vsel %vm141, %v2596, 0
    %2601 = vmatpush.msra.mxu0 0.0
    %2602 = vmatpush.msra.mxu0 0.0
    %2603 = vmatpush.msra.mxu0 0.0
    %2604 = vmatpush.msra.mxu0 0.0
    %2605 = vmatpush.msra.mxu0 0.0
    %2606 = vmatpush.msra.mxu0 0.0
    %2607 = vmatpush.msra.mxu0 0.0
    %2608 = vmatpush.msra.mxu0 0.0
    %2609 = vmatpush.msra.mxu0 0.0
    %2610 = vmatpush.msra.mxu0 0.0
    %2611 = vmatpush.msra.mxu0 0.0
    %2612 = vmatpush.msra.mxu0 0.0
    %2613 = vmatpush.msra.mxu0 %v2256
    %2614 = vmatpush.msra.mxu0 %v2255
    %2615 = vmatpush.msra.mxu0 %v2254
    %2616 = vmatpush.msra.mxu0 %v2253
    %2617 = vmatmul.f32.gmra.mxu0 %v2599
    %v2618 = vpop.f32.mrf.mxu0
    %v2619 = vadd.f32 0.0, %v2618
    %2620 = vdwg.mxu0
    %v2621 = vadd.f32 %v2319, %v2619
    %v2622 = vtanh.pop %v2621
    %v2623 = vsub.f32 0.0, %v2621
    %v2624 = vmul.f32 %v2623, 1.442695
    %v2625 = vpow.pop %v2624
    %v2626 = vadd.f32 %v2625, 1.0
    %v2627 = vrcp.pop %v2626
    %v2628 = vmul.f32 %v2626, %v2627
    %v2629 = vsub.f32 1.0, %v2628
    %v2630 = vmul.f32 %v2627, %v2629
    %v2631 = vadd.f32 %v2627, %v2630
    %vm2632 = vweird.f32 %v2626
    %vm2633 = vweird.f32 %v2627
    %vm2634 = vmor %vm2632, %vm2633
    %v2635 = vsel %vm2634, %v2627, %v2631
    %v2636 = vand.u32 2147483647, %v2626
    %vm2637 = vcmp.eq.f32.partialorder %v2636, 8.507059e+37
    %v2638 = vand.u32 %v2626, 2147483648
    %v2639 = vor.u32 1.1754944e-38, %v2638
    %v2640 = vsel %vm2637, %v2639, %v2635
    %v2641 = vmul.f32 1.0, %v2640
    %v2642 = vsel %vm175, %v2622, %v2641
    %v2643 = vmul.f32 %v2642, %v2587
    %2645 = vrot.lane.b32.xlu0 %v2642, 64
    %v2646 = vpop.permute.xlu0 %2645
    %v2648 = vmul.f32 %v2642, %v2646
    %2650 = vrot.lane.b32.xlu0 %v2648, 32
    %v2651 = vpop.permute.xlu0 %2650
    %v2653 = vadd.f32 %v2643, %v2651
    %v2654 = vtanh.pop %v2653
    %2656 = vrot.lane.b32.xlu0 %v2654, 64
    %v2657 = vpop.permute.xlu0 %2656
    %v2659 = vmul.f32 %v2642, %v2657
    %2661 = vrot.lane.b32.xlu0 %v2659, 32
    %v2662 = vpop.permute.xlu0 %2661
    %2664 = vst.msk [vmem:[%s699] sm:$0x3] %vm282, %v2662
    %v2665 = vsel %vm141, %v2662, 0
    %2667 = vmatpush.msra.mxu0 0.0
    %2668 = vmatpush.msra.mxu0 0.0
    %2669 = vmatpush.msra.mxu0 0.0
    %2670 = vmatpush.msra.mxu0 0.0
    %2671 = vmatpush.msra.mxu0 0.0
    %2672 = vmatpush.msra.mxu0 0.0
    %2673 = vmatpush.msra.mxu0 0.0
    %2674 = vmatpush.msra.mxu0 0.0
    %2675 = vmatpush.msra.mxu0 0.0
    %2676 = vmatpush.msra.mxu0 0.0
    %2677 = vmatpush.msra.mxu0 0.0
    %2678 = vmatpush.msra.mxu0 0.0
    %2679 = vmatpush.msra.mxu0 %v2256
    %2680 = vmatpush.msra.mxu0 %v2255
    %2681 = vmatpush.msra.mxu0 %v2254
    %2682 = vmatpush.msra.mxu0 %v2253
    %2683 = vmatmul.f32.gmra.mxu0 %v2665
    %v2684 = vpop.f32.mrf.mxu0
    %v2685 = vadd.f32 0.0, %v2684
    %2686 = vdwg.mxu0
    %v2687 = vadd.f32 %v2326, %v2685
    %v2688 = vtanh.pop %v2687
    %v2689 = vsub.f32 0.0, %v2687
    %v2690 = vmul.f32 %v2689, 1.442695
    %v2691 = vpow.pop %v2690
    %v2692 = vadd.f32 %v2691, 1.0
    %v2693 = vrcp.pop %v2692
    %v2694 = vmul.f32 %v2692, %v2693
    %v2695 = vsub.f32 1.0, %v2694
    %v2696 = vmul.f32 %v2693, %v2695
    %v2697 = vadd.f32 %v2693, %v2696
    %vm2698 = vweird.f32 %v2692
    %vm2699 = vweird.f32 %v2693
    %vm2700 = vmor %vm2698, %vm2699
    %v2701 = vsel %vm2700, %v2693, %v2697
    %v2702 = vand.u32 2147483647, %v2692
    %vm2703 = vcmp.eq.f32.partialorder %v2702, 8.507059e+37
    %v2704 = vand.u32 %v2692, 2147483648
    %v2705 = vor.u32 1.1754944e-38, %v2704
    %v2706 = vsel %vm2703, %v2705, %v2701
    %v2707 = vmul.f32 1.0, %v2706
    %v2708 = vsel %vm175, %v2688, %v2707
    %v2709 = vmul.f32 %v2708, %v2653
    %2711 = vrot.lane.b32.xlu0 %v2708, 64
    %v2712 = vpop.permute.xlu0 %2711
    %v2714 = vmul.f32 %v2708, %v2712
    %2716 = vrot.lane.b32.xlu0 %v2714, 32
    %v2717 = vpop.permute.xlu0 %2716
    %v2719 = vadd.f32 %v2709, %v2717
    %v2720 = vtanh.pop %v2719
    %2722 = vrot.lane.b32.xlu0 %v2720, 64
    %v2723 = vpop.permute.xlu0 %2722
    %v2725 = vmul.f32 %v2708, %v2723
    %2727 = vrot.lane.b32.xlu0 %v2725, 32
    %v2728 = vpop.permute.xlu0 %2727
    %2730 = vst.msk [vmem:[%s804] sm:$0x3] %vm282, %v2728
    %v2731 = vsel %vm141, %v2728, 0
    %2733 = vmatpush.msra.mxu0 0.0
    %2734 = vmatpush.msra.mxu0 0.0
    %2735 = vmatpush.msra.mxu0 0.0
    %2736 = vmatpush.msra.mxu0 0.0
    %2737 = vmatpush.msra.mxu0 0.0
    %2738 = vmatpush.msra.mxu0 0.0
    %2739 = vmatpush.msra.mxu0 0.0
    %2740 = vmatpush.msra.mxu0 0.0
    %2741 = vmatpush.msra.mxu0 0.0
    %2742 = vmatpush.msra.mxu0 0.0
    %2743 = vmatpush.msra.mxu0 0.0
    %2744 = vmatpush.msra.mxu0 0.0
    %2745 = vmatpush.msra.mxu0 %v2256
    %2746 = vmatpush.msra.mxu0 %v2255
    %2747 = vmatpush.msra.mxu0 %v2254
    %2748 = vmatpush.msra.mxu0 %v2253
    %2749 = vmatmul.f32.gmra.mxu0 %v2731
    %v2750 = vpop.f32.mrf.mxu0
    %v2751 = vadd.f32 0.0, %v2750
    %2752 = vdwg.mxu0
    %v2753 = vadd.f32 %v2327, %v2751
    %v2754 = vtanh.pop %v2753
    %v2755 = vsub.f32 0.0, %v2753
    %v2756 = vmul.f32 %v2755, 1.442695
    %v2757 = vpow.pop %v2756
    %v2758 = vadd.f32 %v2757, 1.0
    %v2759 = vrcp.pop %v2758
    %v2760 = vmul.f32 %v2758, %v2759
    %v2761 = vsub.f32 1.0, %v2760
    %v2762 = vmul.f32 %v2759, %v2761
    %v2763 = vadd.f32 %v2759, %v2762
    %vm2764 = vweird.f32 %v2758
    %vm2765 = vweird.f32 %v2759
    %vm2766 = vmor %vm2764, %vm2765
    %v2767 = vsel %vm2766, %v2759, %v2763
    %v2768 = vand.u32 2147483647, %v2758
    %vm2769 = vcmp.eq.f32.partialorder %v2768, 8.507059e+37
    %v2770 = vand.u32 %v2758, 2147483648
    %v2771 = vor.u32 1.1754944e-38, %v2770
    %v2772 = vsel %vm2769, %v2771, %v2767
    %v2773 = vmul.f32 1.0, %v2772
    %v2774 = vsel %vm175, %v2754, %v2773
    %v2775 = vmul.f32 %v2774, %v2719
    %2777 = vrot.lane.b32.xlu0 %v2774, 64
    %v2778 = vpop.permute.xlu0 %2777
    %v2780 = vmul.f32 %v2774, %v2778
    %2782 = vrot.lane.b32.xlu0 %v2780, 32
    %v2783 = vpop.permute.xlu0 %2782
    %v2785 = vadd.f32 %v2775, %v2783
    %v2786 = vtanh.pop %v2785
    %2788 = vrot.lane.b32.xlu0 %v2786, 64
    %v2789 = vpop.permute.xlu0 %2788
    %v2791 = vmul.f32 %v2774, %v2789
    %2793 = vrot.lane.b32.xlu0 %v2791, 32
    %v2794 = vpop.permute.xlu0 %2793
    %2796 = vst.msk [vmem:[%s909] sm:$0x3] %vm282, %v2794
    %v2797 = vsel %vm141, %v2794, 0
    %2799 = vmatpush.msra.mxu0 0.0
    %2800 = vmatpush.msra.mxu0 0.0
    %2801 = vmatpush.msra.mxu0 0.0
    %2802 = vmatpush.msra.mxu0 0.0
    %2803 = vmatpush.msra.mxu0 0.0
    %2804 = vmatpush.msra.mxu0 0.0
    %2805 = vmatpush.msra.mxu0 0.0
    %2806 = vmatpush.msra.mxu0 0.0
    %2807 = vmatpush.msra.mxu0 0.0
    %2808 = vmatpush.msra.mxu0 0.0
    %2809 = vmatpush.msra.mxu0 0.0
    %2810 = vmatpush.msra.mxu0 0.0
    %2811 = vmatpush.msra.mxu0 %v2256
    %2812 = vmatpush.msra.mxu0 %v2255
    %2813 = vmatpush.msra.mxu0 %v2254
    %2814 = vmatpush.msra.mxu0 %v2253
    %2815 = vmatmul.f32.gmra.mxu0 %v2797
    %v2816 = vpop.f32.mrf.mxu0
    %v2817 = vadd.f32 0.0, %v2816
    %2818 = vdwg.mxu0
    %v2819 = vadd.f32 %v2328, %v2817
    %v2820 = vtanh.pop %v2819
    %v2821 = vsub.f32 0.0, %v2819
    %v2822 = vmul.f32 %v2821, 1.442695
    %v2823 = vpow.pop %v2822
    %v2824 = vadd.f32 %v2823, 1.0
    %v2825 = vrcp.pop %v2824
    %v2826 = vmul.f32 %v2824, %v2825
    %v2827 = vsub.f32 1.0, %v2826
    %v2828 = vmul.f32 %v2825, %v2827
    %v2829 = vadd.f32 %v2825, %v2828
    %vm2830 = vweird.f32 %v2824
    %vm2831 = vweird.f32 %v2825
    %vm2832 = vmor %vm2830, %vm2831
    %v2833 = vsel %vm2832, %v2825, %v2829
    %v2834 = vand.u32 2147483647, %v2824
    %vm2835 = vcmp.eq.f32.partialorder %v2834, 8.507059e+37
    %v2836 = vand.u32 %v2824, 2147483648
    %v2837 = vor.u32 1.1754944e-38, %v2836
    %v2838 = vsel %vm2835, %v2837, %v2833
    %v2839 = vmul.f32 1.0, %v2838
    %v2840 = vsel %vm175, %v2820, %v2839
    %v2841 = vmul.f32 %v2840, %v2785
    %2843 = vrot.lane.b32.xlu0 %v2840, 64
    %v2844 = vpop.permute.xlu0 %2843
    %v2846 = vmul.f32 %v2840, %v2844
    %2848 = vrot.lane.b32.xlu0 %v2846, 32
    %v2849 = vpop.permute.xlu0 %2848
    %v2851 = vadd.f32 %v2841, %v2849
    %v2852 = vtanh.pop %v2851
    %2854 = vrot.lane.b32.xlu0 %v2852, 64
    %v2855 = vpop.permute.xlu0 %2854
    %v2857 = vmul.f32 %v2840, %v2855
    %2859 = vrot.lane.b32.xlu0 %v2857, 32
    %v2860 = vpop.permute.xlu0 %2859
    %2862 = vst.msk [vmem:[%s1014] sm:$0x3] %vm282, %v2860
    %v2863 = vld [vmem:[#allocation2] sm:$0x3]
    %v2864 = vld [vmem:[#allocation2 + $0x2] sm:$0x3]
    %v2865 = vld [vmem:[#allocation2 + $0x4] sm:$0x3]
    %v2866 = vld [vmem:[#allocation2 + $0x6] sm:$0x3]
    %v2867 = vld [vmem:[#allocation2 + $0x8] sm:$0x3]
    %v2868 = vld [vmem:[#allocation2 + $0xa] sm:$0x3]
    %v2869 = vld [vmem:[#allocation2 + $0xc] sm:$0x3]
    %v2870 = vld [vmem:[#allocation2 + $0xe] sm:$0x3]
    %v2871 = vmax.f32 %v2863, 0.0
    %v2872 = vmax.f32 %v2864, 0.0
    %v2873 = vmax.f32 %v2865, 0.0
    %v2874 = vmax.f32 %v2866, 0.0
    %v2875 = vmax.f32 %v2867, 0.0
    %v2876 = vmax.f32 %v2868, 0.0
    %v2877 = vmax.f32 %v2869, 0.0
    %v2878 = vmax.f32 %v2870, 0.0
    %v2879 = vld [vmem:[%s9] sm:$0xff]
    %v2880 = vld [vmem:[%s9 + $0x8] sm:$0xff]
    %v2881 = vld [vmem:[%s9 + $0x10] sm:$0xff]
    %v2882 = vld [vmem:[%s9 + $0x18] sm:$0xff]
    %v2883 = vld [vmem:[%s10] sm:$0x1]
    %v2885 = vperm.slane %v2883, 0
    %2895 = vst [vmem:[#allocation1] ss:$4 sm:$0xff] %v2871
    %s2896 = scalar_lea.vmem [#allocation1], 1
    %2897 = vst [vmem:[%s2896] ss:$4 sm:$0xff] %v2872
    %s2898 = scalar_lea.vmem [#allocation1], 2
    %2899 = vst [vmem:[%s2898] ss:$4 sm:$0xff] %v2873
    %s2900 = scalar_lea.vmem [#allocation1], 3
    %2901 = vst [vmem:[%s2900] ss:$4 sm:$0xff] %v2874
    %s2902 = scalar_lea.vmem [#allocation1], 32
    %2903 = vst [vmem:[%s2902] ss:$4 sm:$0xff] %v2875
    %s2904 = scalar_lea.vmem [#allocation1], 33
    %2905 = vst [vmem:[%s2904] ss:$4 sm:$0xff] %v2876
    %s2906 = scalar_lea.vmem [#allocation1], 34
    %2907 = vst [vmem:[%s2906] ss:$4 sm:$0xff] %v2877
    %s2908 = scalar_lea.vmem [#allocation1], 35
    %2909 = vst [vmem:[%s2908] ss:$4 sm:$0xff] %v2878
    %v2910 = vld.sshfl [vmem:[#allocation1] sm:$0xff pattern:$0x73625140]
    %v2911 = vld.sshfl [vmem:[#allocation1 + $0x20] sm:$0xff pattern:$0x73625140]
    %v2912 = vsel %vm141, %v2910, 0
    %v2914 = vsel %vm141, %v2911, 0
    %2916 = vmatpush.msra.mxu0 0.0
    %2917 = vmatpush.msra.mxu0 0.0
    %2918 = vmatpush.msra.mxu0 0.0
    %2919 = vmatpush.msra.mxu0 0.0
    %2920 = vmatpush.msra.mxu0 0.0
    %2921 = vmatpush.msra.mxu0 0.0
    %2922 = vmatpush.msra.mxu0 0.0
    %2923 = vmatpush.msra.mxu0 0.0
    %2924 = vmatpush.msra.mxu0 0.0
    %2925 = vmatpush.msra.mxu0 0.0
    %2926 = vmatpush.msra.mxu0 0.0
    %2927 = vmatpush.msra.mxu0 0.0
    %2928 = vmatpush.msra.mxu0 %v2882
    %2929 = vmatpush.msra.mxu0 %v2881
    %2930 = vmatpush.msra.mxu0 %v2880
    %2931 = vmatpush.msra.mxu0 %v2879
    %2932 = vmatmul.f32.gmra.mxu0 %v2912
    %v2933 = vpop.f32.mrf.mxu0
    %v2934 = vadd.f32 %v2885, %v2933
    %2935 = vmatmul.f32.gmra.mxu0 %v2914
    %v2936 = vpop.f32.mrf.mxu0
    %v2937 = vadd.f32 %v2885, %v2936
    %2938 = vdwg.mxu0
    %v2941 = vrot.slane %v2934, 2
    %v2942 = vrot.slane %v2934, 4
    %v2943 = vrot.slane %v2934, 6
    %v2944 = vrot.slane %v2937, 2
    %v2945 = vrot.slane %v2937, 4
    %v2946 = vrot.slane %v2937, 6
    %v2947 = vperm.slane %v2934, 0
    %v2948 = vperm.slane %v2941, 0
    %v2949 = vperm.slane %v2942, 0
    %v2950 = vperm.slane %v2943, 0
    %v2951 = vperm.slane %v2937, 0
    %v2952 = vperm.slane %v2944, 0
    %v2953 = vperm.slane %v2945, 0
    %v2954 = vperm.slane %v2946, 0
    %v2955 = vsel %vm248, %v2948, %v2947
    %vm2956 = vcmask 1042434
    %v2957 = vsel %vm2956, %v2949, %v2955
    %vm2958 = vcmask 1043459
    %v2959 = vsel %vm2958, %v2950, %v2957
    %vm2960 = vcmask 1044484
    %v2961 = vsel %vm2960, %v2951, %v2959
    %vm2962 = vcmask 1045509
    %v2963 = vsel %vm2962, %v2952, %v2961
    %vm2964 = vcmask 1046534
    %v2965 = vsel %vm2964, %v2953, %v2963
    %vm2966 = vcmask 1047559
    %v2967 = vsel %vm2966, %v2954, %v2965
    %vm2969 = vcmask 31744
    %2970 = vst.msk [vmem:[%s11] sm:$0xff] %vm2969, %v2967
    %v2971 = vperm.slane %v2934, 1
    %v2972 = vperm.slane %v2941, 1
    %v2973 = vperm.slane %v2942, 1
    %v2974 = vperm.slane %v2943, 1
    %v2975 = vperm.slane %v2937, 1
    %v2976 = vperm.slane %v2944, 1
    %v2977 = vperm.slane %v2945, 1
    %v2978 = vperm.slane %v2946, 1
    %v2979 = vsel %vm2956, %v2972, %v2971
    %v2980 = vsel %vm2958, %v2973, %v2979
    %v2981 = vsel %vm2960, %v2974, %v2980
    %v2982 = vsel %vm2962, %v2975, %v2981
    %v2983 = vsel %vm2964, %v2976, %v2982
    %v2984 = vsel %vm2966, %v2977, %v2983
    %s2987 = scalar_lea.vmem %s11, 8
    %vm2988 = vcmask 31745
    %2989 = vst.msk [vmem:[%s2987 - $0x1] sm:$0xfe] %vm2988, %v2984
    %vm2990 = vcmask 24576
    %2991 = vst.msk [vmem:[%s2987 + $0x7] sm:$0x1] %vm2990, %v2978
    %2992 = vst.msk [vmem:[#allocation12] sm:$0x3] %vm282, %v2246
    %2994 = vrot.lane.b32.xlu0 %v2237, 96
    %v2995 = vpop.permute.xlu0 %2994
    %2997 = vst.msk [vmem:[#allocation13] sm:$0x3] %vm282, %v2995
    %s2998 = scalar_lea.vmem [#allocation12], 2
    %2999 = vst.msk [vmem:[%s2998] sm:$0x3] %vm282, %v2860
    %3001 = vrot.lane.b32.xlu0 %v2851, 96
    %v3002 = vpop.permute.xlu0 %3001
    %s3004 = scalar_lea.vmem [#allocation13], 2
    %3005 = vst.msk [vmem:[%s3004] sm:$0x3] %vm282, %v3002
    // Predicated region
    $region66: #{tpu_custom_call.1} parent=1 // pred_check
      _
    $region67: #{tpu_custom_call.1} parent=1 // pred_check_branch
      %3007 = sbr.rel (0) target = $region69
    $region68: #{tpu_custom_call.1} parent=1 // pred_region
      _
    $region69: #{tpu_custom_call.1} parent=1 // pred_fallthru
      _
    // Predicated region
    $region70: #{tpu_custom_call.1} parent=1 // pred_check
      _
    $region71: #{tpu_custom_call.1} parent=1 // pred_check_branch
      %3009 = sbr.rel (0) target = $region73
    $region72: #{tpu_custom_call.1} parent=1 // pred_region
      %3011 = vsyncadd [#allocation5], 0
      %s3012 = sshll.u32 [#allocation12], 4
      %s3013 = int_to_ptr.vmem [resolvable:$true] %s3012
      %s3014 = sshll.u32 %s12, 4
      %s3015 = int_to_ptr.hbm [resolvable:$true] %s3014
      %3020 = dma.vmem_to_hbm [thread:$0]  %s3013, 64, %s3015, [#allocation5], 32, 32, 2
    $region73: #{tpu_custom_call.1} parent=1 // pred_fallthru
      _
    // Predicated region
    $region74: #{tpu_custom_call.1} parent=1 // pred_check
      _
    $region75: #{tpu_custom_call.1} parent=1 // pred_check_branch
      %3022 = sbr.rel (0) target = $region77
    $region76: #{tpu_custom_call.1} parent=1 // pred_region
      %3024 = vsyncadd [#allocation14], 0
      %s3025 = sshll.u32 [#allocation13], 4
      %s3026 = int_to_ptr.vmem [resolvable:$true] %s3025
      %s3027 = sshll.u32 %s13, 4
      %s3028 = int_to_ptr.hbm [resolvable:$true] %s3027
      %3033 = dma.vmem_to_hbm [thread:$0]  %s3026, 64, %s3028, [#allocation14], 32, 32, 2
    $region77: #{tpu_custom_call.1} parent=1 // pred_fallthru
      _
    // Predicated region
    $region78: #{tpu_custom_call.1} parent=1 // pred_check
      _
    $region79: #{tpu_custom_call.1} parent=1 // pred_check_branch
      %3035 = sbr.rel (0) target = $region81
    $region80: #{tpu_custom_call.1} parent=1 // pred_region
      _
    $region81: #{tpu_custom_call.1} parent=1 // pred_fallthru
      _
    // Predicated region
    $region82: #{tpu_custom_call.1} parent=1 // pred_check
      _
    $region83: #{tpu_custom_call.1} parent=1 // pred_check_branch
      %3037 = sbr.rel (0) target = $region85
    $region84: #{tpu_custom_call.1} parent=1 // pred_region
      %3039 = dma.done [#allocation5], 64
    $region85: #{tpu_custom_call.1} parent=1 // pred_fallthru
      _
    // Predicated region
    $region86: #{tpu_custom_call.1} parent=1 // pred_check
      _
    $region87: #{tpu_custom_call.1} parent=1 // pred_check_branch
      %3041 = sbr.rel (0) target = $region89
    $region88: #{tpu_custom_call.1} parent=1 // pred_region
      %3043 = dma.done [#allocation14], 64
    $region89: #{tpu_custom_call.1} parent=1 // pred_fallthru
      _
    %3044 = vsyncpa [#allocation4], 1
    %3045 = vsyncpa [#allocation7], 1
    %3046 = vsyncpa [#allocation10], 1
    %3047 = vsyncpa [#allocation5], 1
    %3048 = vsyncpa [#allocation14], 1

</llo_original>
